<compile_context>
chip_gen: v5e
topology: v5e:2x2
jax: 0.10.0
libtpu: 0.0.40
codegen_flags: <defaults>
</compile_context>

<pallas_src>
import functools
import math

import jax
import jax.numpy as jnp
from jax import lax
from jax.experimental import pallas as pl
from jax.experimental.pallas import tpu as pltpu


# Large-negative mask value: exp() underflows to exactly 0, matching the reference's
# -1e12 diagonal subtraction (scaled x20). Do NOT replace with -inf: the online-
# softmax alpha / partner-gather paths would then produce inf - inf = NaN.
_NEG_INF = -1.0e30


def _clloss_kernel(q_ref, k_ref, o_ref, m_sc, l_sc, p_sc, *,
                   batch, tq, tkv, has_pad):
    """One (query-tile, class-tile) step of the online-softmax CE loss.

    q_ref: [tq, D]  bf16, pre-normalized and pre-scaled by 20
    k_ref: [tkv, D] bf16, pre-normalized
    o_ref: [tq, 1]  per-row loss (written on the last kv step)
    m_sc / l_sc / p_sc: [tq, 1] running max / running sum-exp / partner logit
    """
    qi = pl.program_id(0)
    ki = pl.program_id(1)

    @pl.when(ki == 0)
    def _():
        m_sc[...] = jnp.full_like(m_sc, -jnp.inf)
        l_sc[...] = jnp.zeros_like(l_sc)
        p_sc[...] = jnp.zeros_like(p_sc)

    # bf16 operands -> native MXU pass with f32 accumulation. The x20 scale is
    # already folded into q, so `sim` is directly the (unmasked) logits tile.
    sim = lax.dot_general(
        q_ref[...], k_ref[...],
        dimension_numbers=(((1,), (1,)), ((), ())),
        preferred_element_type=jnp.float32,
    )  # [tq, tkv]

    def online_update(logits):
        m_prev = m_sc[...]
        m_new = jnp.maximum(m_prev, jnp.max(logits, axis=1, keepdims=True))
        alpha = jnp.exp(m_prev - m_new)
        l_sc[...] = alpha * l_sc[...] + jnp.sum(
            jnp.exp(logits - m_new), axis=1, keepdims=True)
        m_sc[...] = m_new

    q_start = qi * tq
    k_start = ki * tkv
    k_end = k_start + tkv

    # Masking is only needed when (a) this class tile's column range overlaps the
    # query tile's row range (diagonal mask + partner gather), or (b) this class
    # tile contains padded columns. Everything else runs the cheap path.
    overlap = (k_start < q_start + tq) & (q_start < k_end)
    if has_pad:
        needs_mask = overlap | (k_end > batch)
    else:
        needs_mask = overlap

    @pl.when(needs_mask)
    def _():
        row = q_start + lax.broadcasted_iota(jnp.int32, (tq, tkv), 0)  # global row
        col = k_start + lax.broadcasted_iota(jnp.int32, (tq, tkv), 1)  # global col
        masked = (row == col) | (col >= batch)
        logits = jnp.where(masked, _NEG_INF, sim)
        online_update(logits)
        # Soft target is one-hot at partner = row ^ 1; gather its logit via a
        # masked sum (exactly one hit across the whole class axis). The partner
        # column always lies inside an overlapping tile, so this branch suffices.
        p_sc[...] += jnp.sum(jnp.where(col == (row ^ 1), logits, 0.0),
                             axis=1, keepdims=True)

    @pl.when(jnp.logical_not(needs_mask))
    def _():
        online_update(sim)

    @pl.when(ki == pl.num_programs(1) - 1)
    def _():
        row1 = q_start + lax.broadcasted_iota(jnp.int32, (tq, 1), 0)
        partner1 = row1 ^ 1
        # -log_softmax(logits)[partner] = logsumexp - partner_logit
        row_loss = m_sc[...] + jnp.log(l_sc[...]) - p_sc[...]
        # Padded rows contribute 0; rows without an in-range partner (odd batch)
        # contribute 0, matching CrossEntropyLoss with an all-zero target row.
        # (This mask also neutralizes the -1e30 p_sc accumulates in those cases.)
        valid = (row1 < batch) & (partner1 < batch)
        o_ref[...] = jnp.where(valid, row_loss, 0.0)


def clloss(y_pred, *, tq=256, tkv=128):
    """y_pred: [B, D] float array. Returns scalar loss (float32)."""
    B, D = y_pred.shape

    # Shrink tq if the double-buffered bf16 input tiles would bust the VMEM
    # budget (matters for very large D, especially v7x's 64 MiB VMEM).
    input_budget = 24 * 1024 * 1024
    while tq > 128 and 2 * (tq + tkv) * D * 2 > input_budget:
        tq //= 2

    # F.normalize(p=2, dim=1): x / max(||x||, 1e-12) == x * rsqrt(max(||x||^2, 1e-24)).
    # Done once here (f32), cast to bf16 for the MXU; the x20 logit scale is folded
    # into the query operand so the kernel never multiplies the BxB logits by 20.
    x = y_pred.astype(jnp.float32)
    inv_norm = lax.rsqrt(jnp.maximum(jnp.sum(x * x, axis=1, keepdims=True), 1e-24))
    q = (x * (inv_norm * 20.0)).astype(jnp.bfloat16)
    k = (x * inv_norm).astype(jnp.bfloat16)

    step = math.lcm(tq, tkv)
    b_pad = ((B + step - 1) // step) * step
    if b_pad != B:
        pad = ((0, b_pad - B), (0, 0))
        q = jnp.pad(q, pad)
        k = jnp.pad(k, pad)

    nq = b_pad // tq
    nkv = b_pad // tkv

    kernel = functools.partial(_clloss_kernel, batch=B, tq=tq, tkv=tkv,
                               has_pad=(b_pad != B))

    cost = pl.CostEstimate(
        flops=2 * b_pad * b_pad * D,
        transcendentals=b_pad * b_pad,
        bytes_accessed=(nq * b_pad * D + b_pad * D) * 2 + b_pad * 4,
    )

    row_losses = pl.pallas_call(
        kernel,
        out_shape=jax.ShapeDtypeStruct((b_pad, 1), jnp.float32),
        grid_spec=pltpu.PrefetchScalarGridSpec(
            num_scalar_prefetch=0,
            grid=(nq, nkv),  # reduction (class) axis last
            in_specs=[
                pl.BlockSpec((tq, D), lambda qi, ki: (qi, 0)),   # query rows
                pl.BlockSpec((tkv, D), lambda qi, ki: (ki, 0)),  # class rows
            ],
            out_specs=pl.BlockSpec((tq, 1), lambda qi, ki: (qi, 0)),
            scratch_shapes=[
                pltpu.VMEM((tq, 1), jnp.float32),  # running row max
                pltpu.VMEM((tq, 1), jnp.float32),  # running sum(exp)
                pltpu.VMEM((tq, 1), jnp.float32),  # partner logit
            ],
        ),
        compiler_params=pltpu.CompilerParams(
            # q-row tiles are independent -> sharded across v7x's two TensorCores
            # (when nq >= 2); kv axis carries the online-softmax accumulators.
            dimension_semantics=("parallel", "arbitrary"),
            vmem_limit_bytes=48 * 1024 * 1024,
        ),
        cost_estimate=cost,
    )(q, k)

    # CrossEntropyLoss(reduction='mean'): mean over the original batch rows.
    return jnp.sum(row_losses) / jnp.float32(B)


def _reference(y_pred):
    # Pure-JAX (f32) reference for a sanity check.
    B = y_pred.shape[0]
    idxs = jnp.arange(B)
    y_true = (idxs[None, :] == (idxs + 1 - idxs % 2 * 2)[:, None]).astype(jnp.float32)
    yn = y_pred / jnp.maximum(
        jnp.sqrt(jnp.sum(y_pred * y_pred, axis=1, keepdims=True)), 1e-12)
    sim = (yn @ yn.T - jnp.eye(B) * 1.0e12) * 20.0
    logp = jax.nn.log_softmax(sim, axis=1)
    return -jnp.mean(jnp.sum(y_true * logp, axis=1))


if __name__ == "__main__":
    key = jax.random.PRNGKey(0)
    k1, k2, k3 = jax.random.split(key, 3)

    # Small case (single q tile after padding): batch of 4 pairs, 32 features.
    B, D = 8, 32
    y_pred = jax.random.normal(k1, (B, D), dtype=jnp.float32)
    loss = clloss(y_pred)
    jax.block_until_ready(loss)
    ref = _reference(y_pred)
    # bf16 MXU operands perturb logits at ~1e-3 relative -> loss-level tolerance.
    assert jnp.allclose(loss, ref, rtol=5e-2, atol=5e-2), (loss, ref)

    # Multi-tile case: exercises off-diagonal (unmasked) steps, the diagonal-mask
    # path, partially/fully padded class tiles, and the parallel q axis (nq=3).
    B2, D2 = 600, 64
    y2 = jax.random.normal(k2, (B2, D2), dtype=jnp.float32)
    loss2 = clloss(y2)
    jax.block_until_ready(loss2)
    ref2 = _reference(y2)
    assert jnp.allclose(loss2, ref2, rtol=5e-2, atol=5e-2), (loss2, ref2)

    # Odd batch: last row's partner is out of range -> contributes 0, like torch.
    B3, D3 = 9, 32
    y3 = jax.random.normal(k3, (B3, D3), dtype=jnp.float32)
    loss3 = clloss(y3)
    jax.block_until_ready(loss3)
    ref3 = _reference(y3)
    assert jnp.allclose(loss3, ref3, rtol=5e-2, atol=5e-2), (loss3, ref3)

    print("KERNEL_OK")
</pallas_src>

<mosaic_0001>
module attributes {stable_mosaic.version = 11 : i64} {
  func.func @_clloss_kernel(%arg0: i32, %arg1: i32, %arg2: memref<256x32xbf16, #tpu.memory_space<vmem>>, %arg3: memref<128x32xbf16, #tpu.memory_space<vmem>>, %arg4: memref<256x1xf32, #tpu.memory_space<vmem>>, %arg5: memref<256x1xf32, #tpu.memory_space<vmem>>, %arg6: memref<256x1xf32, #tpu.memory_space<vmem>>, %arg7: memref<256x1xf32, #tpu.memory_space<vmem>>) attributes {dimension_semantics = [#tpu.dimension_semantics<parallel>, #tpu.dimension_semantics<arbitrary>], iteration_bounds = array<i64: 1, 2>, scalar_prefetch = 0 : i64, scratch_operands = 3 : i64, tpu.core_type = #tpu.core_type<tc>, window_params = [{transform_indices = @transform_0, window_bounds = array<i64: 256, 32>}, {transform_indices = @transform_1, window_bounds = array<i64: 128, 32>}, {transform_indices = @transform_2, window_bounds = array<i64: 256, 1>}]} {
    %c0_i32 = arith.constant 0 : i32
    %0 = arith.cmpi eq, %arg1, %c0_i32 : i32
    %1 = arith.extui %0 : i1 to i32
    %c0_i32_0 = arith.constant 0 : i32
    %2 = arith.cmpi ne, %1, %c0_i32_0 : i32
    scf.if %2 {
      %cst_9 = arith.constant 0xFF800000 : f32
      %23 = vector.broadcast %cst_9 : f32 to vector<256x1xf32>
      %c0_10 = arith.constant 0 : index
      %c0_11 = arith.constant 0 : index
      %24 = vector.load %arg5[%c0_10, %c0_11] : memref<256x1xf32, #tpu.memory_space<vmem>>, vector<256x1xf32>
      tpu.vector_store %arg5[%c0_10, %c0_11], %23 {strides = array<i32>} : memref<256x1xf32, #tpu.memory_space<vmem>>, vector<256x1xf32>,
      %cst_12 = arith.constant 0.000000e+00 : f32
      %25 = vector.broadcast %cst_12 : f32 to vector<256x1xf32>
      %c0_13 = arith.constant 0 : index
      %c0_14 = arith.constant 0 : index
      %26 = vector.load %arg6[%c0_13, %c0_14] : memref<256x1xf32, #tpu.memory_space<vmem>>, vector<256x1xf32>
      tpu.vector_store %arg6[%c0_13, %c0_14], %25 {strides = array<i32>} : memref<256x1xf32, #tpu.memory_space<vmem>>, vector<256x1xf32>,
      %cst_15 = arith.constant 0.000000e+00 : f32
      %27 = vector.broadcast %cst_15 : f32 to vector<256x1xf32>
      %c0_16 = arith.constant 0 : index
      %c0_17 = arith.constant 0 : index
      %28 = vector.load %arg7[%c0_16, %c0_17] : memref<256x1xf32, #tpu.memory_space<vmem>>, vector<256x1xf32>
      tpu.vector_store %arg7[%c0_16, %c0_17], %27 {strides = array<i32>} : memref<256x1xf32, #tpu.memory_space<vmem>>, vector<256x1xf32>,
    } else {
    }
    %c0 = arith.constant 0 : index
    %c0_1 = arith.constant 0 : index
    %3 = vector.load %arg2[%c0, %c0_1] : memref<256x32xbf16, #tpu.memory_space<vmem>>, vector<256x32xbf16>
    %c0_2 = arith.constant 0 : index
    %c0_3 = arith.constant 0 : index
    %4 = vector.load %arg3[%c0_2, %c0_3] : memref<128x32xbf16, #tpu.memory_space<vmem>>, vector<128x32xbf16>
    %cst = arith.constant dense<0.000000e+00> : vector<256x128xf32>
    %5 = tpu.matmul %3, %4, %cst {dimension_numbers = #tpu.dot_dimension_numbers<[1], [1], [0], [0], [0, 0, 1, 0], [], []>} : vector<256x32xbf16>, vector<128x32xbf16>, vector<256x128xf32> -> vector<256x128xf32>
    %c256_i32 = arith.constant 256 : i32
    %6 = arith.muli %arg0, %c256_i32 : i32
    %c128_i32 = arith.constant 128 : i32
    %7 = arith.muli %arg1, %c128_i32 : i32
    %c128_i32_4 = arith.constant 128 : i32
    %8 = arith.addi %7, %c128_i32_4 : i32
    %c256_i32_5 = arith.constant 256 : i32
    %9 = arith.addi %6, %c256_i32_5 : i32
    %10 = arith.cmpi slt, %7, %9 : i32
    %11 = arith.cmpi slt, %6, %8 : i32
    %12 = arith.andi %10, %11 : i1
    %c8_i32 = arith.constant 8 : i32
    %13 = arith.cmpi sgt, %8, %c8_i32 : i32
    %14 = arith.ori %12, %13 : i1
    %15 = arith.extui %14 : i1 to i32
    %c0_i32_6 = arith.constant 0 : i32
    %16 = arith.cmpi ne, %15, %c0_i32_6 : i32
    scf.if %16 {
      %23 = tpu.iota {dimensions = array<i32: 0>} : vector<256x128xi32>
      %24 = vector.broadcast %6 : i32 to vector<256x128xi32>
      %25 = arith.addi %24, %23 : vector<256x128xi32>
      %26 = tpu.iota {dimensions = array<i32: 1>} : vector<256x128xi32>
      %27 = vector.broadcast %7 : i32 to vector<256x128xi32>
      %28 = arith.addi %27, %26 : vector<256x128xi32>
      %29 = arith.cmpi eq, %25, %28 : vector<256x128xi32>
      %c8_i32_9 = arith.constant 8 : i32
      %30 = vector.broadcast %c8_i32_9 : i32 to vector<256x128xi32>
      %31 = arith.cmpi sge, %28, %30 : vector<256x128xi32>
      %32 = arith.ori %29, %31 : vector<256x128xi1>
      %cst_10 = arith.constant -1.000000e+30 : f32
      %33 = vector.broadcast %cst_10 : f32 to vector<256x128xf32>
      %34 = arith.select %32, %33, %5 : vector<256x128xi1>, vector<256x128xf32>
      %c0_11 = arith.constant 0 : index
      %c0_12 = arith.constant 0 : index
      %35 = vector.load %arg5[%c0_11, %c0_12] : memref<256x1xf32, #tpu.memory_space<vmem>>, vector<256x1xf32>
      %cst_13 = arith.constant dense<0xFF800000> : vector<256xf32>
      %36 = vector.multi_reduction <maximumf>, %34, %cst_13 [1] : vector<256x128xf32> to vector<256xf32>
      %37 = vector.shape_cast %36 : vector<256xf32> to vector<256x1xf32>
      %38 = arith.maximumf %35, %37 : vector<256x1xf32>
      %39 = arith.subf %35, %38 : vector<256x1xf32>
      %40 = math.exp %39 : vector<256x1xf32>
      %c0_14 = arith.constant 0 : index
      %c0_15 = arith.constant 0 : index
      %41 = vector.load %arg6[%c0_14, %c0_15] : memref<256x1xf32, #tpu.memory_space<vmem>>, vector<256x1xf32>
      %42 = arith.mulf %40, %41 : vector<256x1xf32>
      %43 = vector.broadcast %38 : vector<256x1xf32> to vector<256x128xf32>
      %44 = arith.subf %34, %43 : vector<256x128xf32>
      %45 = math.exp %44 : vector<256x128xf32>
      %cst_16 = arith.constant dense<0.000000e+00> : vector<256xf32>
      %46 = vector.multi_reduction <add>, %45, %cst_16 [1] : vector<256x128xf32> to vector<256xf32>
      %47 = vector.shape_cast %46 : vector<256xf32> to vector<256x1xf32>
      %48 = arith.addf %42, %47 : vector<256x1xf32>
      %c0_17 = arith.constant 0 : index
      %c0_18 = arith.constant 0 : index
      %49 = vector.load %arg6[%c0_17, %c0_18] : memref<256x1xf32, #tpu.memory_space<vmem>>, vector<256x1xf32>
      tpu.vector_store %arg6[%c0_17, %c0_18], %48 {strides = array<i32>} : memref<256x1xf32, #tpu.memory_space<vmem>>, vector<256x1xf32>,
      %c0_19 = arith.constant 0 : index
      %c0_20 = arith.constant 0 : index
      %50 = vector.load %arg5[%c0_19, %c0_20] : memref<256x1xf32, #tpu.memory_space<vmem>>, vector<256x1xf32>
      tpu.vector_store %arg5[%c0_19, %c0_20], %38 {strides = array<i32>} : memref<256x1xf32, #tpu.memory_space<vmem>>, vector<256x1xf32>,
      %c0_21 = arith.constant 0 : index
      %c0_22 = arith.constant 0 : index
      %51 = vector.load %arg7[%c0_21, %c0_22] : memref<256x1xf32, #tpu.memory_space<vmem>>, vector<256x1xf32>
      %c1_i32_23 = arith.constant 1 : i32
      %52 = vector.broadcast %c1_i32_23 : i32 to vector<256x128xi32>
      %53 = arith.xori %25, %52 : vector<256x128xi32>
      %54 = arith.cmpi eq, %28, %53 : vector<256x128xi32>
      %cst_24 = arith.constant 0.000000e+00 : f32
      %55 = vector.broadcast %cst_24 : f32 to vector<256x128xf32>
      %56 = arith.select %54, %34, %55 : vector<256x128xi1>, vector<256x128xf32>
      %cst_25 = arith.constant dense<0.000000e+00> : vector<256xf32>
      %57 = vector.multi_reduction <add>, %56, %cst_25 [1] : vector<256x128xf32> to vector<256xf32>
      %58 = vector.shape_cast %57 : vector<256xf32> to vector<256x1xf32>
      %59 = arith.addf %51, %58 : vector<256x1xf32>
      %c0_26 = arith.constant 0 : index
      %c0_27 = arith.constant 0 : index
      %60 = vector.load %arg7[%c0_26, %c0_27] : memref<256x1xf32, #tpu.memory_space<vmem>>, vector<256x1xf32>
      tpu.vector_store %arg7[%c0_26, %c0_27], %59 {strides = array<i32>} : memref<256x1xf32, #tpu.memory_space<vmem>>, vector<256x1xf32>,
    } else {
    }
    %true = arith.constant true
    %17 = arith.xori %14, %true : i1
    %18 = arith.extui %17 : i1 to i32
    %c0_i32_7 = arith.constant 0 : i32
    %19 = arith.cmpi ne, %18, %c0_i32_7 : i32
    scf.if %19 {
      %c0_9 = arith.constant 0 : index
      %c0_10 = arith.constant 0 : index
      %23 = vector.load %arg5[%c0_9, %c0_10] : memref<256x1xf32, #tpu.memory_space<vmem>>, vector<256x1xf32>
      %cst_11 = arith.constant dense<0xFF800000> : vector<256xf32>
      %24 = vector.multi_reduction <maximumf>, %5, %cst_11 [1] : vector<256x128xf32> to vector<256xf32>
      %25 = vector.shape_cast %24 : vector<256xf32> to vector<256x1xf32>
      %26 = arith.maximumf %23, %25 : vector<256x1xf32>
      %27 = arith.subf %23, %26 : vector<256x1xf32>
      %28 = math.exp %27 : vector<256x1xf32>
      %c0_12 = arith.constant 0 : index
      %c0_13 = arith.constant 0 : index
      %29 = vector.load %arg6[%c0_12, %c0_13] : memref<256x1xf32, #tpu.memory_space<vmem>>, vector<256x1xf32>
      %30 = arith.mulf %28, %29 : vector<256x1xf32>
      %31 = vector.broadcast %26 : vector<256x1xf32> to vector<256x128xf32>
      %32 = arith.subf %5, %31 : vector<256x128xf32>
      %33 = math.exp %32 : vector<256x128xf32>
      %cst_14 = arith.constant dense<0.000000e+00> : vector<256xf32>
      %34 = vector.multi_reduction <add>, %33, %cst_14 [1] : vector<256x128xf32> to vector<256xf32>
      %35 = vector.shape_cast %34 : vector<256xf32> to vector<256x1xf32>
      %36 = arith.addf %30, %35 : vector<256x1xf32>
      %c0_15 = arith.constant 0 : index
      %c0_16 = arith.constant 0 : index
      %37 = vector.load %arg6[%c0_15, %c0_16] : memref<256x1xf32, #tpu.memory_space<vmem>>, vector<256x1xf32>
      tpu.vector_store %arg6[%c0_15, %c0_16], %36 {strides = array<i32>} : memref<256x1xf32, #tpu.memory_space<vmem>>, vector<256x1xf32>,
      %c0_17 = arith.constant 0 : index
      %c0_18 = arith.constant 0 : index
      %38 = vector.load %arg5[%c0_17, %c0_18] : memref<256x1xf32, #tpu.memory_space<vmem>>, vector<256x1xf32>
      tpu.vector_store %arg5[%c0_17, %c0_18], %26 {strides = array<i32>} : memref<256x1xf32, #tpu.memory_space<vmem>>, vector<256x1xf32>,
    } else {
    }
    %c1_i32 = arith.constant 1 : i32
    %20 = arith.cmpi eq, %arg1, %c1_i32 : i32
    %21 = arith.extui %20 : i1 to i32
    %c0_i32_8 = arith.constant 0 : i32
    %22 = arith.cmpi ne, %21, %c0_i32_8 : i32
    scf.if %22 {
      %23 = tpu.iota {dimensions = array<i32: 0>} : vector<256x1xi32>
      %24 = vector.broadcast %6 : i32 to vector<256x1xi32>
      %25 = arith.addi %24, %23 : vector<256x1xi32>
      %c1_i32_9 = arith.constant 1 : i32
      %26 = vector.broadcast %c1_i32_9 : i32 to vector<256x1xi32>
      %27 = arith.xori %25, %26 : vector<256x1xi32>
      %c0_10 = arith.constant 0 : index
      %c0_11 = arith.constant 0 : index
      %28 = vector.load %arg5[%c0_10, %c0_11] : memref<256x1xf32, #tpu.memory_space<vmem>>, vector<256x1xf32>
      %c0_12 = arith.constant 0 : index
      %c0_13 = arith.constant 0 : index
      %29 = vector.load %arg6[%c0_12, %c0_13] : memref<256x1xf32, #tpu.memory_space<vmem>>, vector<256x1xf32>
      %30 = math.log %29 : vector<256x1xf32>
      %31 = arith.addf %28, %30 : vector<256x1xf32>
      %c0_14 = arith.constant 0 : index
      %c0_15 = arith.constant 0 : index
      %32 = vector.load %arg7[%c0_14, %c0_15] : memref<256x1xf32, #tpu.memory_space<vmem>>, vector<256x1xf32>
      %33 = arith.subf %31, %32 : vector<256x1xf32>
      %c8_i32_16 = arith.constant 8 : i32
      %34 = vector.broadcast %c8_i32_16 : i32 to vector<256x1xi32>
      %35 = arith.cmpi slt, %25, %34 : vector<256x1xi32>
      %c8_i32_17 = arith.constant 8 : i32
      %36 = vector.broadcast %c8_i32_17 : i32 to vector<256x1xi32>
      %37 = arith.cmpi slt, %27, %36 : vector<256x1xi32>
      %38 = arith.andi %35, %37 : vector<256x1xi1>
      %cst_18 = arith.constant 0.000000e+00 : f32
      %39 = vector.broadcast %cst_18 : f32 to vector<256x1xf32>
      %40 = arith.select %38, %33, %39 : vector<256x1xi1>, vector<256x1xf32>
      %c0_19 = arith.constant 0 : index
      %c0_20 = arith.constant 0 : index
      %41 = vector.load %arg4[%c0_19, %c0_20] : memref<256x1xf32, #tpu.memory_space<vmem>>, vector<256x1xf32>
      tpu.vector_store %arg4[%c0_19, %c0_20], %40 {strides = array<i32>} : memref<256x1xf32, #tpu.memory_space<vmem>>, vector<256x1xf32>,
    } else {
    }
    return
  }
  func.func @transform_0(%arg0: i32, %arg1: i32) -> (i32, i32) {
    %c0_i32 = arith.constant 0 : i32
    %c0_i32_0 = arith.constant 0 : i32
    return %arg0, %c0_i32 : i32, i32
  }
  func.func @transform_1(%arg0: i32, %arg1: i32) -> (i32, i32) {
    %c0_i32 = arith.constant 0 : i32
    %c0_i32_0 = arith.constant 0 : i32
    return %arg1, %c0_i32 : i32, i32
  }
  func.func @transform_2(%arg0: i32, %arg1: i32) -> (i32, i32) {
    %c0_i32 = arith.constant 0 : i32
    %c0_i32_0 = arith.constant 0 : i32
    return %arg0, %c0_i32 : i32, i32
  }
}

</mosaic_0001>

<llo_original>
// kernel: tpu_custom_call.1
$region0: #{tpu_custom_call.1}
  #allocation0 [shape = 'u32[]', space=smem, size = 0x4, offset = 0x4, fixed_abs, tag = 'smem constant byte address 0x4 - core index']
  #allocation1 [shape = 'u32[72,128]{1,0:T(1,128)}', space=vmem, size = 0x9000, scoped, tag = 'internal scratch']
  #allocation2 [shape = 'f32[256,1]{1,0:T(8,128)}', space=vmem, size = 0x20000, scoped, tag = 'scratch operand']
  #allocation3 [shape = 'f32[256,1]{1,0:T(8,128)}', space=vmem, size = 0x20000, scoped, tag = 'scratch operand']
  #allocation4 [shape = 'f32[256,1]{1,0:T(8,128)}', space=vmem, size = 0x20000, scoped, tag = 'scratch operand']
  %s0 = inlined_call_operand.vmem [shape: bf16[256,32], index: 0, kind: input, shape index: {}]
  %s1 = inlined_call_operand.vmem [shape: bf16[256,32], index: 1, kind: input, shape index: {}]
  %s2 = inlined_call_operand.vmem [shape: f32[256,1], index: 2, kind: output, shape index: {}]
  %s3 = sld [smem:[#allocation0]]
  $region57: #{tpu_custom_call.1} parent=0
    _
  %s5 = ssub.s32 1, %s3
  %s6 = scalar_select 0, %s5, %s3
  loop: start=0, step=1, limit=4
  $region2: #{tpu_custom_call.1} parent=0 // loop_pre_header
    _
  $region3: #{tpu_custom_call.1} parent=0 // loop_header
    %s8 = sphi 0, %s12
    %p9 = scmp.ge.s32.totalorder %s8, 4
    %s15 = sphi 0, %s27
    %s16 = sphi 0, %s23
    %s17 = sphi 0, %s15
    %s18 = sphi 0, %s16
    %s19 = sphi 0, %s17
    %s20 = sphi 0, %s18
    %s30 = sphi 0, %s32
    %s33 = sphi 0, %s30
    %s34 = sphi 0, %s33
    %s50 = sphi 0, %s34
    %s56 = sphi 0, %s58
    %s59 = sphi 0, %s56
    %s60 = sphi 0, %s59
    %s76 = sphi 0, %s60
    %s82 = sphi 0, %s84
    %s85 = sphi 0, %s82
    %s86 = sphi 0, %s85
    %s102 = sphi 0, %s86
  $region4: #{tpu_custom_call.1} parent=0 // loop_header_branch
    %11 = sbr.rel (%p9) target = $region8
  $region5: #{tpu_custom_call.1} parent=0 // loop_body
    %s13 = ssub.s32 %s8, 1
    %s14 = ssub.s32 %s8, 2
    %s21 = sadd.s32 1, %s16
    %p22 = scmp.ge.s32.totalorder %s21, 2
    %s23 = scalar_select %p22, 0, %s21
    %s24 = sadd.s32 1, %s15
    %s25 = scalar_select %p22, %s24, %s15
    %p26 = scmp.ge.s32.totalorder %s25, 1
    %s27 = scalar_select %p26, 0, %s25
    %s28 = ssub.s32 %s15, %s27
    %p29 = scmp.eq.s32.totalorder %s28, 0
    %s31 = sadd.s32 %s30, 1
    %s32 = scalar_select %p29, %s30, %s31
    %p35 = pneg %p29
    %p36 = scmp.eq.s32.totalorder %s8, 1
    %p37 = por %p35, %p36
    %p38 = scmp.ne.s32.totalorder %s30, %s33
    %p39 = scmp.eq.s32.totalorder %s8, 0
    %p40 = por %p38, %p39
    %p41 = scmp.ne.s32.totalorder %s30, %s33
    %p42 = scmp.eq.s32.totalorder %s13, 1
    %p43 = por %p41, %p42
    %p44 = scmp.ne.s32.totalorder %s33, %s34
    %p45 = scmp.eq.s32.totalorder %s13, 0
    %p46 = por %p44, %p45
    %p47 = scmp.ne.s32.totalorder %s33, %s34
    %p48 = scmp.eq.s32.totalorder %s14, 1
    %p49 = por %p47, %p48
    %p51 = scmp.ne.s32.totalorder %s34, %s50
    %p52 = scmp.eq.s32.totalorder %s14, 0
    %p53 = por %p51, %p52
    %s54 = ssub.s32 %s16, %s23
    %p55 = scmp.eq.s32.totalorder %s54, 0
    %s57 = sadd.s32 %s56, 1
    %s58 = scalar_select %p55, %s56, %s57
    %p61 = pneg %p55
    %p62 = scmp.eq.s32.totalorder %s8, 1
    %p63 = por %p61, %p62
    %p64 = scmp.ne.s32.totalorder %s56, %s59
    %p65 = scmp.eq.s32.totalorder %s8, 0
    %p66 = por %p64, %p65
    %p67 = scmp.ne.s32.totalorder %s56, %s59
    %p68 = scmp.eq.s32.totalorder %s13, 1
    %p69 = por %p67, %p68
    %p70 = scmp.ne.s32.totalorder %s59, %s60
    %p71 = scmp.eq.s32.totalorder %s13, 0
    %p72 = por %p70, %p71
    %p73 = scmp.ne.s32.totalorder %s59, %s60
    %p74 = scmp.eq.s32.totalorder %s14, 1
    %p75 = por %p73, %p74
    %p77 = scmp.ne.s32.totalorder %s60, %s76
    %p78 = scmp.eq.s32.totalorder %s14, 0
    %p79 = por %p77, %p78
    %s80 = ssub.s32 %s15, %s27
    %p81 = scmp.eq.s32.totalorder %s80, 0
    %s83 = sadd.s32 %s82, 1
    %s84 = scalar_select %p81, %s82, %s83
    %p87 = pneg %p81
    %p88 = scmp.eq.s32.totalorder %s8, 1
    %p89 = por %p87, %p88
    %p90 = scmp.ne.s32.totalorder %s82, %s85
    %p91 = scmp.eq.s32.totalorder %s8, 0
    %p92 = por %p90, %p91
    %p93 = scmp.ne.s32.totalorder %s82, %s85
    %p94 = scmp.eq.s32.totalorder %s13, 1
    %p95 = por %p93, %p94
    %p96 = scmp.ne.s32.totalorder %s85, %s86
    %p97 = scmp.eq.s32.totalorder %s13, 0
    %p98 = por %p96, %p97
    %p99 = scmp.ne.s32.totalorder %s85, %s86
    %p100 = scmp.eq.s32.totalorder %s14, 1
    %p101 = por %p99, %p100
    %p103 = scmp.ne.s32.totalorder %s86, %s102
    %p104 = scmp.eq.s32.totalorder %s14, 0
    %p105 = por %p103, %p104
    %p106 = scmp.le.s32.totalorder 1, %s8
    %p107 = scmp.lt.s32.totalorder %s8, 3
    %p108 = pnand %p106, %p107
    %p109 = pneg %p108
    // Predicated region
    $region9: #{tpu_custom_call.1} parent=5 // pred_check
      _
    $region10: #{tpu_custom_call.1} parent=5 // pred_check_branch
      %111 = sbr.rel (%p108) target = $region12
    $region11: #{tpu_custom_call.1} parent=5 // pred_region
      %s112 = ssub.s32 %s8, 1
      // Predicated region
      $region13: #{tpu_custom_call.1} parent=11 // pred_check
        %p113 = pneg %p46
      $region14: #{tpu_custom_call.1} parent=11 // pred_check_branch
        %115 = sbr.rel (%p113) target = $region16
      $region15: #{tpu_custom_call.1} parent=11 // pred_region
        %s116 = smul.u32 32, %s17
        %p117 = scmp.lt.s32.totalorder %s116, 31
        %s118 = scalar_select %p117, %s116, 31
        %s119 = smul.addr %s118, 4
        %s120 = scalar_lea.vmem %s0, %s119
        %s121 = smul.u32 32, %s17
      $region16: #{tpu_custom_call.1} parent=11 // pred_fallthru
        _
    $region12: #{tpu_custom_call.1} parent=5 // pred_fallthru
      _
    %p122 = scmp.lt.s32.totalorder %s8, 2
    // Predicated region
    $region17: #{tpu_custom_call.1} parent=5 // pred_check
      %p123 = pneg %p122
    $region18: #{tpu_custom_call.1} parent=5 // pred_check_branch
      %125 = sbr.rel (%p123) target = $region20
    $region19: #{tpu_custom_call.1} parent=5 // pred_region
      // Predicated region
      $region21: #{tpu_custom_call.1} parent=19 // pred_check
        %p126 = pneg %p66
      $region22: #{tpu_custom_call.1} parent=19 // pred_check_branch
        %128 = sbr.rel (%p126) target = $region24
      $region23: #{tpu_custom_call.1} parent=19 // pred_region
        %s129 = smul.u32 16, %s16
        %p130 = scmp.lt.s32.totalorder %s129, 31
        %s131 = scalar_select %p130, %s129, 31
        %s132 = smul.addr %s131, 4
        %s133 = scalar_lea.vmem %s1, %s132
        %s134 = smul.u32 16, %s16
      $region24: #{tpu_custom_call.1} parent=19 // pred_fallthru
        _
    $region20: #{tpu_custom_call.1} parent=5 // pred_fallthru
      _
    %p135 = scmp.le.s32.totalorder 1, %s8
    %p136 = scmp.lt.s32.totalorder %s8, 3
    %p137 = pnand %p135, %p136
    %p138 = pneg %p137
    // Predicated region
    $region25: #{tpu_custom_call.1} parent=5 // pred_check
      _
    $region26: #{tpu_custom_call.1} parent=5 // pred_check_branch
      %140 = sbr.rel (%p137) target = $region28
    $region27: #{tpu_custom_call.1} parent=5 // pred_region
      %s141 = ssub.s32 %s8, 1
      %s142 = smul.u32 32, %s17
      %p143 = scmp.lt.s32.totalorder %s142, 31
      %s144 = scalar_select %p143, %s142, 31
      %s145 = smul.addr %s144, 4
      %s146 = scalar_lea.vmem %s0, %s145
      %p147 = pneg %p46
      %p148 = pneg %p43
      %s149 = smul.u32 16, %s18
      %p150 = scmp.lt.s32.totalorder %s149, 31
      %s151 = scalar_select %p150, %s149, 31
      %s152 = smul.addr %s151, 4
      %s153 = scalar_lea.vmem %s1, %s152
      %p154 = pneg %p72
      %p155 = pneg %p69
      %p156 = pneg %p98
      %p157 = pneg %p95
      %s158 = smul.u32 32, %s17
      %p159 = scmp.lt.s32.totalorder %s158, 31
      %s160 = scalar_select %p159, %s158, 31
      %s161 = smul.addr %s160, 8
      %s162 = scalar_lea.vmem %s2, %s161
      %s163 = smul.u32 32, %s17
      %p164 = scmp.lt.s32.totalorder %s163, 31
      %s165 = scalar_select %p164, %s163, 31
      %s166 = smul.addr %s165, 4
      %s167 = scalar_lea.vmem %s0, %s166
      %s168 = smul.u32 32, %s17
      %s169 = smul.u32 16, %s18
      %p170 = scmp.lt.s32.totalorder %s169, 31
      %s171 = scalar_select %p170, %s169, 31
      %s172 = smul.addr %s171, 4
      %s173 = scalar_lea.vmem %s1, %s172
      %s174 = smul.u32 16, %s18
      %s175 = smul.u32 32, %s17
      %p176 = scmp.lt.s32.totalorder %s175, 31
      %s177 = scalar_select %p176, %s175, 31
      %s178 = smul.addr %s177, 8
      %s179 = scalar_lea.vmem %s2, %s178
      %s180 = smul.u32 32, %s17
      %p181 = scmp.eq.s32.totalorder %s18, 0
      // Predicated region
      $region29: #{tpu_custom_call.1} parent=27 // pred_check
        %p182 = pneg %p181
      $region30: #{tpu_custom_call.1} parent=27 // pred_check_branch
        %184 = sbr.rel (%p182) target = $region32
      $region31: #{tpu_custom_call.1} parent=27 // pred_region
        %vm185 = vcmask 7168
        %186 = vst.msk [vmem:[#allocation2] sm:$0xff] %vm185, -inf
        %187 = vst.msk [vmem:[#allocation2 + $0x8] sm:$0xff] %vm185, -inf
        %188 = vst.msk [vmem:[#allocation2 + $0x10] sm:$0xff] %vm185, -inf
        %189 = vst.msk [vmem:[#allocation2 + $0x18] sm:$0xff] %vm185, -inf
        %190 = vst.msk [vmem:[#allocation2 + $0x20] sm:$0xff] %vm185, -inf
        %191 = vst.msk [vmem:[#allocation2 + $0x28] sm:$0xff] %vm185, -inf
        %192 = vst.msk [vmem:[#allocation2 + $0x30] sm:$0xff] %vm185, -inf
        %193 = vst.msk [vmem:[#allocation2 + $0x38] sm:$0xff] %vm185, -inf
        %194 = vst.msk [vmem:[#allocation2 + $0x40] sm:$0xff] %vm185, -inf
        %195 = vst.msk [vmem:[#allocation2 + $0x48] sm:$0xff] %vm185, -inf
        %196 = vst.msk [vmem:[#allocation2 + $0x50] sm:$0xff] %vm185, -inf
        %197 = vst.msk [vmem:[#allocation2 + $0x58] sm:$0xff] %vm185, -inf
        %198 = vst.msk [vmem:[#allocation2 + $0x60] sm:$0xff] %vm185, -inf
        %199 = vst.msk [vmem:[#allocation2 + $0x68] sm:$0xff] %vm185, -inf
        %200 = vst.msk [vmem:[#allocation2 + $0x70] sm:$0xff] %vm185, -inf
        %201 = vst.msk [vmem:[#allocation2 + $0x78] sm:$0xff] %vm185, -inf
        %202 = vst.msk [vmem:[#allocation2 + $0x80] sm:$0xff] %vm185, -inf
        %203 = vst.msk [vmem:[#allocation2 + $0x88] sm:$0xff] %vm185, -inf
        %204 = vst.msk [vmem:[#allocation2 + $0x90] sm:$0xff] %vm185, -inf
        %205 = vst.msk [vmem:[#allocation2 + $0x98] sm:$0xff] %vm185, -inf
        %206 = vst.msk [vmem:[#allocation2 + $0xa0] sm:$0xff] %vm185, -inf
        %207 = vst.msk [vmem:[#allocation2 + $0xa8] sm:$0xff] %vm185, -inf
        %208 = vst.msk [vmem:[#allocation2 + $0xb0] sm:$0xff] %vm185, -inf
        %209 = vst.msk [vmem:[#allocation2 + $0xb8] sm:$0xff] %vm185, -inf
        %210 = vst.msk [vmem:[#allocation2 + $0xc0] sm:$0xff] %vm185, -inf
        %211 = vst.msk [vmem:[#allocation2 + $0xc8] sm:$0xff] %vm185, -inf
        %212 = vst.msk [vmem:[#allocation2 + $0xd0] sm:$0xff] %vm185, -inf
        %213 = vst.msk [vmem:[#allocation2 + $0xd8] sm:$0xff] %vm185, -inf
        %214 = vst.msk [vmem:[#allocation2 + $0xe0] sm:$0xff] %vm185, -inf
        %215 = vst.msk [vmem:[#allocation2 + $0xe8] sm:$0xff] %vm185, -inf
        %216 = vst.msk [vmem:[#allocation2 + $0xf0] sm:$0xff] %vm185, -inf
        %217 = vst.msk [vmem:[#allocation2 + $0xf8] sm:$0xff] %vm185, -inf
        %218 = vst.msk [vmem:[#allocation3] sm:$0xff] %vm185, 0.0
        %219 = vst.msk [vmem:[#allocation3 + $0x8] sm:$0xff] %vm185, 0.0
        %220 = vst.msk [vmem:[#allocation3 + $0x10] sm:$0xff] %vm185, 0.0
        %221 = vst.msk [vmem:[#allocation3 + $0x18] sm:$0xff] %vm185, 0.0
        %222 = vst.msk [vmem:[#allocation3 + $0x20] sm:$0xff] %vm185, 0.0
        %223 = vst.msk [vmem:[#allocation3 + $0x28] sm:$0xff] %vm185, 0.0
        %224 = vst.msk [vmem:[#allocation3 + $0x30] sm:$0xff] %vm185, 0.0
        %225 = vst.msk [vmem:[#allocation3 + $0x38] sm:$0xff] %vm185, 0.0
        %226 = vst.msk [vmem:[#allocation3 + $0x40] sm:$0xff] %vm185, 0.0
        %227 = vst.msk [vmem:[#allocation3 + $0x48] sm:$0xff] %vm185, 0.0
        %228 = vst.msk [vmem:[#allocation3 + $0x50] sm:$0xff] %vm185, 0.0
        %229 = vst.msk [vmem:[#allocation3 + $0x58] sm:$0xff] %vm185, 0.0
        %230 = vst.msk [vmem:[#allocation3 + $0x60] sm:$0xff] %vm185, 0.0
        %231 = vst.msk [vmem:[#allocation3 + $0x68] sm:$0xff] %vm185, 0.0
        %232 = vst.msk [vmem:[#allocation3 + $0x70] sm:$0xff] %vm185, 0.0
        %233 = vst.msk [vmem:[#allocation3 + $0x78] sm:$0xff] %vm185, 0.0
        %234 = vst.msk [vmem:[#allocation3 + $0x80] sm:$0xff] %vm185, 0.0
        %235 = vst.msk [vmem:[#allocation3 + $0x88] sm:$0xff] %vm185, 0.0
        %236 = vst.msk [vmem:[#allocation3 + $0x90] sm:$0xff] %vm185, 0.0
        %237 = vst.msk [vmem:[#allocation3 + $0x98] sm:$0xff] %vm185, 0.0
        %238 = vst.msk [vmem:[#allocation3 + $0xa0] sm:$0xff] %vm185, 0.0
        %239 = vst.msk [vmem:[#allocation3 + $0xa8] sm:$0xff] %vm185, 0.0
        %240 = vst.msk [vmem:[#allocation3 + $0xb0] sm:$0xff] %vm185, 0.0
        %241 = vst.msk [vmem:[#allocation3 + $0xb8] sm:$0xff] %vm185, 0.0
        %242 = vst.msk [vmem:[#allocation3 + $0xc0] sm:$0xff] %vm185, 0.0
        %243 = vst.msk [vmem:[#allocation3 + $0xc8] sm:$0xff] %vm185, 0.0
        %244 = vst.msk [vmem:[#allocation3 + $0xd0] sm:$0xff] %vm185, 0.0
        %245 = vst.msk [vmem:[#allocation3 + $0xd8] sm:$0xff] %vm185, 0.0
        %246 = vst.msk [vmem:[#allocation3 + $0xe0] sm:$0xff] %vm185, 0.0
        %247 = vst.msk [vmem:[#allocation3 + $0xe8] sm:$0xff] %vm185, 0.0
        %248 = vst.msk [vmem:[#allocation3 + $0xf0] sm:$0xff] %vm185, 0.0
        %249 = vst.msk [vmem:[#allocation3 + $0xf8] sm:$0xff] %vm185, 0.0
        %250 = vst.msk [vmem:[#allocation4] sm:$0xff] %vm185, 0.0
        %251 = vst.msk [vmem:[#allocation4 + $0x8] sm:$0xff] %vm185, 0.0
        %252 = vst.msk [vmem:[#allocation4 + $0x10] sm:$0xff] %vm185, 0.0
        %253 = vst.msk [vmem:[#allocation4 + $0x18] sm:$0xff] %vm185, 0.0
        %254 = vst.msk [vmem:[#allocation4 + $0x20] sm:$0xff] %vm185, 0.0
        %255 = vst.msk [vmem:[#allocation4 + $0x28] sm:$0xff] %vm185, 0.0
        %256 = vst.msk [vmem:[#allocation4 + $0x30] sm:$0xff] %vm185, 0.0
        %257 = vst.msk [vmem:[#allocation4 + $0x38] sm:$0xff] %vm185, 0.0
        %258 = vst.msk [vmem:[#allocation4 + $0x40] sm:$0xff] %vm185, 0.0
        %259 = vst.msk [vmem:[#allocation4 + $0x48] sm:$0xff] %vm185, 0.0
        %260 = vst.msk [vmem:[#allocation4 + $0x50] sm:$0xff] %vm185, 0.0
        %261 = vst.msk [vmem:[#allocation4 + $0x58] sm:$0xff] %vm185, 0.0
        %262 = vst.msk [vmem:[#allocation4 + $0x60] sm:$0xff] %vm185, 0.0
        %263 = vst.msk [vmem:[#allocation4 + $0x68] sm:$0xff] %vm185, 0.0
        %264 = vst.msk [vmem:[#allocation4 + $0x70] sm:$0xff] %vm185, 0.0
        %265 = vst.msk [vmem:[#allocation4 + $0x78] sm:$0xff] %vm185, 0.0
        %266 = vst.msk [vmem:[#allocation4 + $0x80] sm:$0xff] %vm185, 0.0
        %267 = vst.msk [vmem:[#allocation4 + $0x88] sm:$0xff] %vm185, 0.0
        %268 = vst.msk [vmem:[#allocation4 + $0x90] sm:$0xff] %vm185, 0.0
        %269 = vst.msk [vmem:[#allocation4 + $0x98] sm:$0xff] %vm185, 0.0
        %270 = vst.msk [vmem:[#allocation4 + $0xa0] sm:$0xff] %vm185, 0.0
        %271 = vst.msk [vmem:[#allocation4 + $0xa8] sm:$0xff] %vm185, 0.0
        %272 = vst.msk [vmem:[#allocation4 + $0xb0] sm:$0xff] %vm185, 0.0
        %273 = vst.msk [vmem:[#allocation4 + $0xb8] sm:$0xff] %vm185, 0.0
        %274 = vst.msk [vmem:[#allocation4 + $0xc0] sm:$0xff] %vm185, 0.0
        %275 = vst.msk [vmem:[#allocation4 + $0xc8] sm:$0xff] %vm185, 0.0
        %276 = vst.msk [vmem:[#allocation4 + $0xd0] sm:$0xff] %vm185, 0.0
        %277 = vst.msk [vmem:[#allocation4 + $0xd8] sm:$0xff] %vm185, 0.0
        %278 = vst.msk [vmem:[#allocation4 + $0xe0] sm:$0xff] %vm185, 0.0
        %279 = vst.msk [vmem:[#allocation4 + $0xe8] sm:$0xff] %vm185, 0.0
        %280 = vst.msk [vmem:[#allocation4 + $0xf0] sm:$0xff] %vm185, 0.0
        %281 = vst.msk [vmem:[#allocation4 + $0xf8] sm:$0xff] %vm185, 0.0
      $region32: #{tpu_custom_call.1} parent=27 // pred_fallthru
        _
      %v282 = vld [vmem:[%s167] sm:$0xf]
      %v283 = vld [vmem:[%s167 + $0x4] sm:$0xf]
      %v284 = vld [vmem:[%s167 + $0x8] sm:$0xf]
      %v285 = vld [vmem:[%s167 + $0xc] sm:$0xf]
      %v286 = vld [vmem:[%s167 + $0x10] sm:$0xf]
      %v287 = vld [vmem:[%s167 + $0x14] sm:$0xf]
      %v288 = vld [vmem:[%s167 + $0x18] sm:$0xf]
      %v289 = vld [vmem:[%s167 + $0x1c] sm:$0xf]
      %v290 = vld [vmem:[%s167 + $0x20] sm:$0xf]
      %v291 = vld [vmem:[%s167 + $0x24] sm:$0xf]
      %v292 = vld [vmem:[%s167 + $0x28] sm:$0xf]
      %v293 = vld [vmem:[%s167 + $0x2c] sm:$0xf]
      %v294 = vld [vmem:[%s167 + $0x30] sm:$0xf]
      %v295 = vld [vmem:[%s167 + $0x34] sm:$0xf]
      %v296 = vld [vmem:[%s167 + $0x38] sm:$0xf]
      %v297 = vld [vmem:[%s167 + $0x3c] sm:$0xf]
      %v298 = vld [vmem:[%s167 + $0x40] sm:$0xf]
      %v299 = vld [vmem:[%s167 + $0x44] sm:$0xf]
      %v300 = vld [vmem:[%s167 + $0x48] sm:$0xf]
      %v301 = vld [vmem:[%s167 + $0x4c] sm:$0xf]
      %v302 = vld [vmem:[%s167 + $0x50] sm:$0xf]
      %v303 = vld [vmem:[%s167 + $0x54] sm:$0xf]
      %v304 = vld [vmem:[%s167 + $0x58] sm:$0xf]
      %v305 = vld [vmem:[%s167 + $0x5c] sm:$0xf]
      %v306 = vld [vmem:[%s167 + $0x60] sm:$0xf]
      %v307 = vld [vmem:[%s167 + $0x64] sm:$0xf]
      %v308 = vld [vmem:[%s167 + $0x68] sm:$0xf]
      %v309 = vld [vmem:[%s167 + $0x6c] sm:$0xf]
      %v310 = vld [vmem:[%s167 + $0x70] sm:$0xf]
      %v311 = vld [vmem:[%s167 + $0x74] sm:$0xf]
      %v312 = vld [vmem:[%s167 + $0x78] sm:$0xf]
      %v313 = vld [vmem:[%s167 + $0x7c] sm:$0xf]
      %v314 = vld [vmem:[%s173] sm:$0xf]
      %v315 = vld [vmem:[%s173 + $0x4] sm:$0xf]
      %v316 = vld [vmem:[%s173 + $0x8] sm:$0xf]
      %v317 = vld [vmem:[%s173 + $0xc] sm:$0xf]
      %v318 = vld [vmem:[%s173 + $0x10] sm:$0xf]
      %v319 = vld [vmem:[%s173 + $0x14] sm:$0xf]
      %v320 = vld [vmem:[%s173 + $0x18] sm:$0xf]
      %v321 = vld [vmem:[%s173 + $0x1c] sm:$0xf]
      %v322 = vld [vmem:[%s173 + $0x20] sm:$0xf]
      %v323 = vld [vmem:[%s173 + $0x24] sm:$0xf]
      %v324 = vld [vmem:[%s173 + $0x28] sm:$0xf]
      %v325 = vld [vmem:[%s173 + $0x2c] sm:$0xf]
      %v326 = vld [vmem:[%s173 + $0x30] sm:$0xf]
      %v327 = vld [vmem:[%s173 + $0x34] sm:$0xf]
      %v328 = vld [vmem:[%s173 + $0x38] sm:$0xf]
      %v329 = vld [vmem:[%s173 + $0x3c] sm:$0xf]
      %v362 = vunpack.c.l.b16 %v282
      %v363 = vunpack.c.l.b16 %v283
      %v364 = vunpack.c.l.b16 %v284
      %v365 = vunpack.c.l.b16 %v285
      %v366 = vunpack.c.l.b16 %v286
      %v367 = vunpack.c.l.b16 %v287
      %v368 = vunpack.c.l.b16 %v288
      %v369 = vunpack.c.l.b16 %v289
      %v370 = vunpack.c.l.b16 %v290
      %v371 = vunpack.c.l.b16 %v291
      %v372 = vunpack.c.l.b16 %v292
      %v373 = vunpack.c.l.b16 %v293
      %v374 = vunpack.c.l.b16 %v294
      %v375 = vunpack.c.l.b16 %v295
      %v376 = vunpack.c.l.b16 %v296
      %v377 = vunpack.c.l.b16 %v297
      %v378 = vunpack.c.l.b16 %v298
      %v379 = vunpack.c.l.b16 %v299
      %v380 = vunpack.c.l.b16 %v300
      %v381 = vunpack.c.l.b16 %v301
      %v382 = vunpack.c.l.b16 %v302
      %v383 = vunpack.c.l.b16 %v303
      %v384 = vunpack.c.l.b16 %v304
      %v385 = vunpack.c.l.b16 %v305
      %v386 = vunpack.c.l.b16 %v306
      %v387 = vunpack.c.l.b16 %v307
      %v388 = vunpack.c.l.b16 %v308
      %v389 = vunpack.c.l.b16 %v309
      %v390 = vunpack.c.l.b16 %v310
      %v391 = vunpack.c.l.b16 %v311
      %v392 = vunpack.c.l.b16 %v312
      %v393 = vunpack.c.l.b16 %v313
      %v394 = vpack.c.b16 %v363, %v362
      %v395 = vpack.c.b16 %v365, %v364
      %v396 = vpack.c.b16 %v367, %v366
      %v397 = vpack.c.b16 %v369, %v368
      %v398 = vpack.c.b16 %v371, %v370
      %v399 = vpack.c.b16 %v373, %v372
      %v400 = vpack.c.b16 %v375, %v374
      %v401 = vpack.c.b16 %v377, %v376
      %v402 = vpack.c.b16 %v379, %v378
      %v403 = vpack.c.b16 %v381, %v380
      %v404 = vpack.c.b16 %v383, %v382
      %v405 = vpack.c.b16 %v385, %v384
      %v406 = vpack.c.b16 %v387, %v386
      %v407 = vpack.c.b16 %v389, %v388
      %v408 = vpack.c.b16 %v391, %v390
      %v409 = vpack.c.b16 %v393, %v392
      %v426 = vunpack.c.l.b16 %v314
      %v427 = vunpack.c.l.b16 %v315
      %v428 = vunpack.c.l.b16 %v316
      %v429 = vunpack.c.l.b16 %v317
      %v430 = vunpack.c.l.b16 %v318
      %v431 = vunpack.c.l.b16 %v319
      %v432 = vunpack.c.l.b16 %v320
      %v433 = vunpack.c.l.b16 %v321
      %v434 = vunpack.c.l.b16 %v322
      %v435 = vunpack.c.l.b16 %v323
      %v436 = vunpack.c.l.b16 %v324
      %v437 = vunpack.c.l.b16 %v325
      %v438 = vunpack.c.l.b16 %v326
      %v439 = vunpack.c.l.b16 %v327
      %v440 = vunpack.c.l.b16 %v328
      %v441 = vunpack.c.l.b16 %v329
      %v442 = vpack.c.b16 %v427, %v426
      %v443 = vpack.c.b16 %v429, %v428
      %v444 = vpack.c.b16 %v431, %v430
      %v445 = vpack.c.b16 %v433, %v432
      %v446 = vpack.c.b16 %v435, %v434
      %v447 = vpack.c.b16 %v437, %v436
      %v448 = vpack.c.b16 %v439, %v438
      %v449 = vpack.c.b16 %v441, %v440
      %vm450 = vcmask 261120
      %v452 = vsel %vm450, %v394, 0
      %v455 = vsel %vm450, %v395, 0
      %v458 = vsel %vm450, %v396, 0
      %v461 = vsel %vm450, %v397, 0
      %v464 = vsel %vm450, %v398, 0
      %v467 = vsel %vm450, %v399, 0
      %v470 = vsel %vm450, %v400, 0
      %v473 = vsel %vm450, %v401, 0
      %v476 = vsel %vm450, %v402, 0
      %v479 = vsel %vm450, %v403, 0
      %v482 = vsel %vm450, %v404, 0
      %v485 = vsel %vm450, %v405, 0
      %v488 = vsel %vm450, %v406, 0
      %v491 = vsel %vm450, %v407, 0
      %v494 = vsel %vm450, %v408, 0
      %v497 = vsel %vm450, %v409, 0
      %v500 = vsel %vm450, %v442, 0
      %v503 = vsel %vm450, %v443, 0
      %v506 = vsel %vm450, %v444, 0
      %v509 = vsel %vm450, %v445, 0
      %v512 = vsel %vm450, %v446, 0
      %v515 = vsel %vm450, %v447, 0
      %v518 = vsel %vm450, %v448, 0
      %v521 = vsel %vm450, %v449, 0
      %523 = vmatpush.bf16.xpose.msra.mxu0 %v521
      %524 = vmatpush.bf16.xpose.msra.mxu0 %v518
      %525 = vmatpush.bf16.xpose.msra.mxu0 %v515
      %526 = vmatpush.bf16.xpose.msra.mxu0 %v512
      %527 = vmatpush.bf16.xpose.msra.mxu0 %v509
      %528 = vmatpush.bf16.xpose.msra.mxu0 %v506
      %529 = vmatpush.bf16.xpose.msra.mxu0 %v503
      %530 = vmatpush.bf16.xpose.msra.mxu0 %v500
      %531 = vmatmul.bf16.gmra.mxu0 %v452
      %v532 = vpop.f32.mrf.mxu0
      %v533 = vadd.f32 0.0, %v532
      %v534 = vpop.f32.mrf.mxu0
      %v535 = vadd.f32 0.0, %v534
      %536 = vmatmul.bf16.gmra.mxu0 %v455
      %v537 = vpop.f32.mrf.mxu0
      %v538 = vadd.f32 0.0, %v537
      %v539 = vpop.f32.mrf.mxu0
      %v540 = vadd.f32 0.0, %v539
      %541 = vmatmul.bf16.gmra.mxu0 %v458
      %v542 = vpop.f32.mrf.mxu0
      %v543 = vadd.f32 0.0, %v542
      %v544 = vpop.f32.mrf.mxu0
      %v545 = vadd.f32 0.0, %v544
      %546 = vmatmul.bf16.gmra.mxu0 %v461
      %v547 = vpop.f32.mrf.mxu0
      %v548 = vadd.f32 0.0, %v547
      %v549 = vpop.f32.mrf.mxu0
      %v550 = vadd.f32 0.0, %v549
      %551 = vmatmul.bf16.gmra.mxu0 %v464
      %v552 = vpop.f32.mrf.mxu0
      %v553 = vadd.f32 0.0, %v552
      %v554 = vpop.f32.mrf.mxu0
      %v555 = vadd.f32 0.0, %v554
      %556 = vmatmul.bf16.gmra.mxu0 %v467
      %v557 = vpop.f32.mrf.mxu0
      %v558 = vadd.f32 0.0, %v557
      %v559 = vpop.f32.mrf.mxu0
      %v560 = vadd.f32 0.0, %v559
      %561 = vmatmul.bf16.gmra.mxu0 %v470
      %v562 = vpop.f32.mrf.mxu0
      %v563 = vadd.f32 0.0, %v562
      %v564 = vpop.f32.mrf.mxu0
      %v565 = vadd.f32 0.0, %v564
      %566 = vmatmul.bf16.gmra.mxu0 %v473
      %v567 = vpop.f32.mrf.mxu0
      %v568 = vadd.f32 0.0, %v567
      %v569 = vpop.f32.mrf.mxu0
      %v570 = vadd.f32 0.0, %v569
      %571 = vmatmul.bf16.gmra.mxu0 %v476
      %v572 = vpop.f32.mrf.mxu0
      %v573 = vadd.f32 0.0, %v572
      %v574 = vpop.f32.mrf.mxu0
      %v575 = vadd.f32 0.0, %v574
      %576 = vmatmul.bf16.gmra.mxu0 %v479
      %v577 = vpop.f32.mrf.mxu0
      %v578 = vadd.f32 0.0, %v577
      %v579 = vpop.f32.mrf.mxu0
      %v580 = vadd.f32 0.0, %v579
      %581 = vmatmul.bf16.gmra.mxu0 %v482
      %v582 = vpop.f32.mrf.mxu0
      %v583 = vadd.f32 0.0, %v582
      %v584 = vpop.f32.mrf.mxu0
      %v585 = vadd.f32 0.0, %v584
      %586 = vmatmul.bf16.gmra.mxu0 %v485
      %v587 = vpop.f32.mrf.mxu0
      %v588 = vadd.f32 0.0, %v587
      %v589 = vpop.f32.mrf.mxu0
      %v590 = vadd.f32 0.0, %v589
      %591 = vmatmul.bf16.gmra.mxu0 %v488
      %v592 = vpop.f32.mrf.mxu0
      %v593 = vadd.f32 0.0, %v592
      %v594 = vpop.f32.mrf.mxu0
      %v595 = vadd.f32 0.0, %v594
      %596 = vmatmul.bf16.gmra.mxu0 %v491
      %v597 = vpop.f32.mrf.mxu0
      %v598 = vadd.f32 0.0, %v597
      %v599 = vpop.f32.mrf.mxu0
      %v600 = vadd.f32 0.0, %v599
      %601 = vmatmul.bf16.gmra.mxu0 %v494
      %v602 = vpop.f32.mrf.mxu0
      %v603 = vadd.f32 0.0, %v602
      %v604 = vpop.f32.mrf.mxu0
      %v605 = vadd.f32 0.0, %v604
      %606 = vmatmul.bf16.gmra.mxu0 %v497
      %v607 = vpop.f32.mrf.mxu0
      %v608 = vadd.f32 0.0, %v607
      %v609 = vpop.f32.mrf.mxu0
      %v610 = vadd.f32 0.0, %v609
      %611 = vdwg.mxu0
      %s612 = smul.u32 %s17, 256
      %s613 = smul.u32 %s18, 128
      %s614 = sadd.s32 %s613, 128
      %s615 = sadd.s32 %s612, 256
      %p616 = scmp.lt.s32.totalorder %s613, %s615
      %p617 = scmp.lt.s32.totalorder %s612, %s614
      %p618 = pnand %p616, %p617
      %p619 = pneg %p618
      %p620 = scmp.gt.s32.totalorder %s614, 8
      %p621 = por %p619, %p620
      // Predicated region
      $region33: #{tpu_custom_call.1} parent=27 // pred_check
        %p622 = pneg %p621
      $region34: #{tpu_custom_call.1} parent=27 // pred_check_branch
        %624 = sbr.rel (%p622) target = $region36
      $region35: #{tpu_custom_call.1} parent=27 // pred_region
        %v625 = vlaneseq
        %v626 = vshrl.u32 %v625, 7
        %v627 = vadd.s32 %v626, 8
        %v628 = vadd.s32 %v626, 16
        %v629 = vadd.s32 %v626, 24
        %v630 = vadd.s32 %v626, 32
        %v631 = vadd.s32 %v626, 40
        %v632 = vadd.s32 %v626, 48
        %v633 = vadd.s32 %v626, 56
        %v634 = vadd.s32 %v626, 64
        %v635 = vadd.s32 %v626, 72
        %v636 = vadd.s32 %v626, 80
        %v637 = vadd.s32 %v626, 88
        %v638 = vadd.s32 %v626, 96
        %v639 = vadd.s32 %v626, 104
        %v640 = vadd.s32 %v626, 112
        %v641 = vadd.s32 %v626, 120
        %v642 = vadd.s32 %v626, 128
        %v643 = vadd.s32 %v626, 136
        %v644 = vadd.s32 %v626, 144
        %v645 = vadd.s32 %v626, 152
        %v646 = vadd.s32 %v626, 160
        %v647 = vadd.s32 %v626, 168
        %v648 = vadd.s32 %v626, 176
        %v649 = vadd.s32 %v626, 184
        %v650 = vadd.s32 %v626, 192
        %v651 = vadd.s32 %v626, 200
        %v652 = vadd.s32 %v626, 208
        %v653 = vadd.s32 %v626, 216
        %v654 = vadd.s32 %v626, 224
        %v655 = vadd.s32 %v626, 232
        %v656 = vadd.s32 %v626, 240
        %v657 = vadd.s32 %v626, 248
        %v658 = vstv %s612
        %v659 = vadd.s32 %v658, %v626
        %v660 = vadd.s32 %v658, %v627
        %v661 = vadd.s32 %v658, %v628
        %v662 = vadd.s32 %v658, %v629
        %v663 = vadd.s32 %v658, %v630
        %v664 = vadd.s32 %v658, %v631
        %v665 = vadd.s32 %v658, %v632
        %v666 = vadd.s32 %v658, %v633
        %v667 = vadd.s32 %v658, %v634
        %v668 = vadd.s32 %v658, %v635
        %v669 = vadd.s32 %v658, %v636
        %v670 = vadd.s32 %v658, %v637
        %v671 = vadd.s32 %v658, %v638
        %v672 = vadd.s32 %v658, %v639
        %v673 = vadd.s32 %v658, %v640
        %v674 = vadd.s32 %v658, %v641
        %v675 = vadd.s32 %v658, %v642
        %v676 = vadd.s32 %v658, %v643
        %v677 = vadd.s32 %v658, %v644
        %v678 = vadd.s32 %v658, %v645
        %v679 = vadd.s32 %v658, %v646
        %v680 = vadd.s32 %v658, %v647
        %v681 = vadd.s32 %v658, %v648
        %v682 = vadd.s32 %v658, %v649
        %v683 = vadd.s32 %v658, %v650
        %v684 = vadd.s32 %v658, %v651
        %v685 = vadd.s32 %v658, %v652
        %v686 = vadd.s32 %v658, %v653
        %v687 = vadd.s32 %v658, %v654
        %v688 = vadd.s32 %v658, %v655
        %v689 = vadd.s32 %v658, %v656
        %v690 = vadd.s32 %v658, %v657
        %v691 = vlaneseq
        %v692 = vand.u32 %v691, 127
        %v693 = vstv %s613
        %v694 = vadd.s32 %v693, %v692
        %vm695 = vcmp.eq.s32.totalorder %v659, %v694
        %vm696 = vcmp.eq.s32.totalorder %v660, %v694
        %vm697 = vcmp.eq.s32.totalorder %v661, %v694
        %vm698 = vcmp.eq.s32.totalorder %v662, %v694
        %vm699 = vcmp.eq.s32.totalorder %v663, %v694
        %vm700 = vcmp.eq.s32.totalorder %v664, %v694
        %vm701 = vcmp.eq.s32.totalorder %v665, %v694
        %vm702 = vcmp.eq.s32.totalorder %v666, %v694
        %vm703 = vcmp.eq.s32.totalorder %v667, %v694
        %vm704 = vcmp.eq.s32.totalorder %v668, %v694
        %vm705 = vcmp.eq.s32.totalorder %v669, %v694
        %vm706 = vcmp.eq.s32.totalorder %v670, %v694
        %vm707 = vcmp.eq.s32.totalorder %v671, %v694
        %vm708 = vcmp.eq.s32.totalorder %v672, %v694
        %vm709 = vcmp.eq.s32.totalorder %v673, %v694
        %vm710 = vcmp.eq.s32.totalorder %v674, %v694
        %vm711 = vcmp.eq.s32.totalorder %v675, %v694
        %vm712 = vcmp.eq.s32.totalorder %v676, %v694
        %vm713 = vcmp.eq.s32.totalorder %v677, %v694
        %vm714 = vcmp.eq.s32.totalorder %v678, %v694
        %vm715 = vcmp.eq.s32.totalorder %v679, %v694
        %vm716 = vcmp.eq.s32.totalorder %v680, %v694
        %vm717 = vcmp.eq.s32.totalorder %v681, %v694
        %vm718 = vcmp.eq.s32.totalorder %v682, %v694
        %vm719 = vcmp.eq.s32.totalorder %v683, %v694
        %vm720 = vcmp.eq.s32.totalorder %v684, %v694
        %vm721 = vcmp.eq.s32.totalorder %v685, %v694
        %vm722 = vcmp.eq.s32.totalorder %v686, %v694
        %vm723 = vcmp.eq.s32.totalorder %v687, %v694
        %vm724 = vcmp.eq.s32.totalorder %v688, %v694
        %vm725 = vcmp.eq.s32.totalorder %v689, %v694
        %vm726 = vcmp.eq.s32.totalorder %v690, %v694
        %vm727 = vcmp.ge.s32.totalorder %v694, 8
        %vm728 = vmor %vm695, %vm727
        %vm729 = vmor %vm696, %vm727
        %vm730 = vmor %vm697, %vm727
        %vm731 = vmor %vm698, %vm727
        %vm732 = vmor %vm699, %vm727
        %vm733 = vmor %vm700, %vm727
        %vm734 = vmor %vm701, %vm727
        %vm735 = vmor %vm702, %vm727
        %vm736 = vmor %vm703, %vm727
        %vm737 = vmor %vm704, %vm727
        %vm738 = vmor %vm705, %vm727
        %vm739 = vmor %vm706, %vm727
        %vm740 = vmor %vm707, %vm727
        %vm741 = vmor %vm708, %vm727
        %vm742 = vmor %vm709, %vm727
        %vm743 = vmor %vm710, %vm727
        %vm744 = vmor %vm711, %vm727
        %vm745 = vmor %vm712, %vm727
        %vm746 = vmor %vm713, %vm727
        %vm747 = vmor %vm714, %vm727
        %vm748 = vmor %vm715, %vm727
        %vm749 = vmor %vm716, %vm727
        %vm750 = vmor %vm717, %vm727
        %vm751 = vmor %vm718, %vm727
        %vm752 = vmor %vm719, %vm727
        %vm753 = vmor %vm720, %vm727
        %vm754 = vmor %vm721, %vm727
        %vm755 = vmor %vm722, %vm727
        %vm756 = vmor %vm723, %vm727
        %vm757 = vmor %vm724, %vm727
        %vm758 = vmor %vm725, %vm727
        %vm759 = vmor %vm726, %vm727
        %v760 = vsel %vm728, -1e+30, %v533
        %v761 = vsel %vm729, -1e+30, %v535
        %v762 = vsel %vm730, -1e+30, %v538
        %v763 = vsel %vm731, -1e+30, %v540
        %v764 = vsel %vm732, -1e+30, %v543
        %v765 = vsel %vm733, -1e+30, %v545
        %v766 = vsel %vm734, -1e+30, %v548
        %v767 = vsel %vm735, -1e+30, %v550
        %v768 = vsel %vm736, -1e+30, %v553
        %v769 = vsel %vm737, -1e+30, %v555
        %v770 = vsel %vm738, -1e+30, %v558
        %v771 = vsel %vm739, -1e+30, %v560
        %v772 = vsel %vm740, -1e+30, %v563
        %v773 = vsel %vm741, -1e+30, %v565
        %v774 = vsel %vm742, -1e+30, %v568
        %v775 = vsel %vm743, -1e+30, %v570
        %v776 = vsel %vm744, -1e+30, %v573
        %v777 = vsel %vm745, -1e+30, %v575
        %v778 = vsel %vm746, -1e+30, %v578
        %v779 = vsel %vm747, -1e+30, %v580
        %v780 = vsel %vm748, -1e+30, %v583
        %v781 = vsel %vm749, -1e+30, %v585
        %v782 = vsel %vm750, -1e+30, %v588
        %v783 = vsel %vm751, -1e+30, %v590
        %v784 = vsel %vm752, -1e+30, %v593
        %v785 = vsel %vm753, -1e+30, %v595
        %v786 = vsel %vm754, -1e+30, %v598
        %v787 = vsel %vm755, -1e+30, %v600
        %v788 = vsel %vm756, -1e+30, %v603
        %v789 = vsel %vm757, -1e+30, %v605
        %v790 = vsel %vm758, -1e+30, %v608
        %v791 = vsel %vm759, -1e+30, %v610
        %v792 = vld [vmem:[#allocation2] sm:$0xff]
        %v793 = vld [vmem:[#allocation2 + $0x8] sm:$0xff]
        %v794 = vld [vmem:[#allocation2 + $0x10] sm:$0xff]
        %v795 = vld [vmem:[#allocation2 + $0x18] sm:$0xff]
        %v796 = vld [vmem:[#allocation2 + $0x20] sm:$0xff]
        %v797 = vld [vmem:[#allocation2 + $0x28] sm:$0xff]
        %v798 = vld [vmem:[#allocation2 + $0x30] sm:$0xff]
        %v799 = vld [vmem:[#allocation2 + $0x38] sm:$0xff]
        %v800 = vld [vmem:[#allocation2 + $0x40] sm:$0xff]
        %v801 = vld [vmem:[#allocation2 + $0x48] sm:$0xff]
        %v802 = vld [vmem:[#allocation2 + $0x50] sm:$0xff]
        %v803 = vld [vmem:[#allocation2 + $0x58] sm:$0xff]
        %v804 = vld [vmem:[#allocation2 + $0x60] sm:$0xff]
        %v805 = vld [vmem:[#allocation2 + $0x68] sm:$0xff]
        %v806 = vld [vmem:[#allocation2 + $0x70] sm:$0xff]
        %v807 = vld [vmem:[#allocation2 + $0x78] sm:$0xff]
        %v808 = vld [vmem:[#allocation2 + $0x80] sm:$0xff]
        %v809 = vld [vmem:[#allocation2 + $0x88] sm:$0xff]
        %v810 = vld [vmem:[#allocation2 + $0x90] sm:$0xff]
        %v811 = vld [vmem:[#allocation2 + $0x98] sm:$0xff]
        %v812 = vld [vmem:[#allocation2 + $0xa0] sm:$0xff]
        %v813 = vld [vmem:[#allocation2 + $0xa8] sm:$0xff]
        %v814 = vld [vmem:[#allocation2 + $0xb0] sm:$0xff]
        %v815 = vld [vmem:[#allocation2 + $0xb8] sm:$0xff]
        %v816 = vld [vmem:[#allocation2 + $0xc0] sm:$0xff]
        %v817 = vld [vmem:[#allocation2 + $0xc8] sm:$0xff]
        %v818 = vld [vmem:[#allocation2 + $0xd0] sm:$0xff]
        %v819 = vld [vmem:[#allocation2 + $0xd8] sm:$0xff]
        %v820 = vld [vmem:[#allocation2 + $0xe0] sm:$0xff]
        %v821 = vld [vmem:[#allocation2 + $0xe8] sm:$0xff]
        %v822 = vld [vmem:[#allocation2 + $0xf0] sm:$0xff]
        %v823 = vld [vmem:[#allocation2 + $0xf8] sm:$0xff]
        %824 = vmax.xlane.f32.xlu0 %v760
        %v825 = vpop.xlane.xlu0 %824
        %826 = vmax.xlane.f32.xlu0 %v761
        %v827 = vpop.xlane.xlu0 %826
        %828 = vmax.xlane.f32.xlu0 %v762
        %v829 = vpop.xlane.xlu0 %828
        %830 = vmax.xlane.f32.xlu0 %v763
        %v831 = vpop.xlane.xlu0 %830
        %832 = vmax.xlane.f32.xlu0 %v764
        %v833 = vpop.xlane.xlu0 %832
        %834 = vmax.xlane.f32.xlu0 %v765
        %v835 = vpop.xlane.xlu0 %834
        %836 = vmax.xlane.f32.xlu0 %v766
        %v837 = vpop.xlane.xlu0 %836
        %838 = vmax.xlane.f32.xlu0 %v767
        %v839 = vpop.xlane.xlu0 %838
        %840 = vmax.xlane.f32.xlu0 %v768
        %v841 = vpop.xlane.xlu0 %840
        %842 = vmax.xlane.f32.xlu0 %v769
        %v843 = vpop.xlane.xlu0 %842
        %844 = vmax.xlane.f32.xlu0 %v770
        %v845 = vpop.xlane.xlu0 %844
        %846 = vmax.xlane.f32.xlu0 %v771
        %v847 = vpop.xlane.xlu0 %846
        %848 = vmax.xlane.f32.xlu0 %v772
        %v849 = vpop.xlane.xlu0 %848
        %850 = vmax.xlane.f32.xlu0 %v773
        %v851 = vpop.xlane.xlu0 %850
        %852 = vmax.xlane.f32.xlu0 %v774
        %v853 = vpop.xlane.xlu0 %852
        %854 = vmax.xlane.f32.xlu0 %v775
        %v855 = vpop.xlane.xlu0 %854
        %856 = vmax.xlane.f32.xlu0 %v776
        %v857 = vpop.xlane.xlu0 %856
        %858 = vmax.xlane.f32.xlu0 %v777
        %v859 = vpop.xlane.xlu0 %858
        %860 = vmax.xlane.f32.xlu0 %v778
        %v861 = vpop.xlane.xlu0 %860
        %862 = vmax.xlane.f32.xlu0 %v779
        %v863 = vpop.xlane.xlu0 %862
        %864 = vmax.xlane.f32.xlu0 %v780
        %v865 = vpop.xlane.xlu0 %864
        %866 = vmax.xlane.f32.xlu0 %v781
        %v867 = vpop.xlane.xlu0 %866
        %868 = vmax.xlane.f32.xlu0 %v782
        %v869 = vpop.xlane.xlu0 %868
        %870 = vmax.xlane.f32.xlu0 %v783
        %v871 = vpop.xlane.xlu0 %870
        %872 = vmax.xlane.f32.xlu0 %v784
        %v873 = vpop.xlane.xlu0 %872
        %874 = vmax.xlane.f32.xlu0 %v785
        %v875 = vpop.xlane.xlu0 %874
        %876 = vmax.xlane.f32.xlu0 %v786
        %v877 = vpop.xlane.xlu0 %876
        %878 = vmax.xlane.f32.xlu0 %v787
        %v879 = vpop.xlane.xlu0 %878
        %880 = vmax.xlane.f32.xlu0 %v788
        %v881 = vpop.xlane.xlu0 %880
        %882 = vmax.xlane.f32.xlu0 %v789
        %v883 = vpop.xlane.xlu0 %882
        %884 = vmax.xlane.f32.xlu0 %v790
        %v885 = vpop.xlane.xlu0 %884
        %886 = vmax.xlane.f32.xlu0 %v791
        %v887 = vpop.xlane.xlu0 %886
        %v888 = vmax.f32 %v792, %v825
        %v889 = vmax.f32 %v793, %v827
        %v890 = vmax.f32 %v794, %v829
        %v891 = vmax.f32 %v795, %v831
        %v892 = vmax.f32 %v796, %v833
        %v893 = vmax.f32 %v797, %v835
        %v894 = vmax.f32 %v798, %v837
        %v895 = vmax.f32 %v799, %v839
        %v896 = vmax.f32 %v800, %v841
        %v897 = vmax.f32 %v801, %v843
        %v898 = vmax.f32 %v802, %v845
        %v899 = vmax.f32 %v803, %v847
        %v900 = vmax.f32 %v804, %v849
        %v901 = vmax.f32 %v805, %v851
        %v902 = vmax.f32 %v806, %v853
        %v903 = vmax.f32 %v807, %v855
        %v904 = vmax.f32 %v808, %v857
        %v905 = vmax.f32 %v809, %v859
        %v906 = vmax.f32 %v810, %v861
        %v907 = vmax.f32 %v811, %v863
        %v908 = vmax.f32 %v812, %v865
        %v909 = vmax.f32 %v813, %v867
        %v910 = vmax.f32 %v814, %v869
        %v911 = vmax.f32 %v815, %v871
        %v912 = vmax.f32 %v816, %v873
        %v913 = vmax.f32 %v817, %v875
        %v914 = vmax.f32 %v818, %v877
        %v915 = vmax.f32 %v819, %v879
        %v916 = vmax.f32 %v820, %v881
        %v917 = vmax.f32 %v821, %v883
        %v918 = vmax.f32 %v822, %v885
        %v919 = vmax.f32 %v823, %v887
        %v920 = vsub.f32 %v792, %v888
        %v921 = vsub.f32 %v793, %v889
        %v922 = vsub.f32 %v794, %v890
        %v923 = vsub.f32 %v795, %v891
        %v924 = vsub.f32 %v796, %v892
        %v925 = vsub.f32 %v797, %v893
        %v926 = vsub.f32 %v798, %v894
        %v927 = vsub.f32 %v799, %v895
        %v928 = vsub.f32 %v800, %v896
        %v929 = vsub.f32 %v801, %v897
        %v930 = vsub.f32 %v802, %v898
        %v931 = vsub.f32 %v803, %v899
        %v932 = vsub.f32 %v804, %v900
        %v933 = vsub.f32 %v805, %v901
        %v934 = vsub.f32 %v806, %v902
        %v935 = vsub.f32 %v807, %v903
        %v936 = vsub.f32 %v808, %v904
        %v937 = vsub.f32 %v809, %v905
        %v938 = vsub.f32 %v810, %v906
        %v939 = vsub.f32 %v811, %v907
        %v940 = vsub.f32 %v812, %v908
        %v941 = vsub.f32 %v813, %v909
        %v942 = vsub.f32 %v814, %v910
        %v943 = vsub.f32 %v815, %v911
        %v944 = vsub.f32 %v816, %v912
        %v945 = vsub.f32 %v817, %v913
        %v946 = vsub.f32 %v818, %v914
        %v947 = vsub.f32 %v819, %v915
        %v948 = vsub.f32 %v820, %v916
        %v949 = vsub.f32 %v821, %v917
        %v950 = vsub.f32 %v822, %v918
        %v951 = vsub.f32 %v823, %v919
        %v952 = vmul.f32 %v920, 1.442695
        %v953 = vpow.pop %v952
        %v954 = vmul.f32 %v921, 1.442695
        %v955 = vpow.pop %v954
        %v956 = vmul.f32 %v922, 1.442695
        %v957 = vpow.pop %v956
        %v958 = vmul.f32 %v923, 1.442695
        %v959 = vpow.pop %v958
        %v960 = vmul.f32 %v924, 1.442695
        %v961 = vpow.pop %v960
        %v962 = vmul.f32 %v925, 1.442695
        %v963 = vpow.pop %v962
        %v964 = vmul.f32 %v926, 1.442695
        %v965 = vpow.pop %v964
        %v966 = vmul.f32 %v927, 1.442695
        %v967 = vpow.pop %v966
        %v968 = vmul.f32 %v928, 1.442695
        %v969 = vpow.pop %v968
        %v970 = vmul.f32 %v929, 1.442695
        %v971 = vpow.pop %v970
        %v972 = vmul.f32 %v930, 1.442695
        %v973 = vpow.pop %v972
        %v974 = vmul.f32 %v931, 1.442695
        %v975 = vpow.pop %v974
        %v976 = vmul.f32 %v932, 1.442695
        %v977 = vpow.pop %v976
        %v978 = vmul.f32 %v933, 1.442695
        %v979 = vpow.pop %v978
        %v980 = vmul.f32 %v934, 1.442695
        %v981 = vpow.pop %v980
        %v982 = vmul.f32 %v935, 1.442695
        %v983 = vpow.pop %v982
        %v984 = vmul.f32 %v936, 1.442695
        %v985 = vpow.pop %v984
        %v986 = vmul.f32 %v937, 1.442695
        %v987 = vpow.pop %v986
        %v988 = vmul.f32 %v938, 1.442695
        %v989 = vpow.pop %v988
        %v990 = vmul.f32 %v939, 1.442695
        %v991 = vpow.pop %v990
        %v992 = vmul.f32 %v940, 1.442695
        %v993 = vpow.pop %v992
        %v994 = vmul.f32 %v941, 1.442695
        %v995 = vpow.pop %v994
        %v996 = vmul.f32 %v942, 1.442695
        %v997 = vpow.pop %v996
        %v998 = vmul.f32 %v943, 1.442695
        %v999 = vpow.pop %v998
        %v1000 = vmul.f32 %v944, 1.442695
        %v1001 = vpow.pop %v1000
        %v1002 = vmul.f32 %v945, 1.442695
        %v1003 = vpow.pop %v1002
        %v1004 = vmul.f32 %v946, 1.442695
        %v1005 = vpow.pop %v1004
        %v1006 = vmul.f32 %v947, 1.442695
        %v1007 = vpow.pop %v1006
        %v1008 = vmul.f32 %v948, 1.442695
        %v1009 = vpow.pop %v1008
        %v1010 = vmul.f32 %v949, 1.442695
        %v1011 = vpow.pop %v1010
        %v1012 = vmul.f32 %v950, 1.442695
        %v1013 = vpow.pop %v1012
        %v1014 = vmul.f32 %v951, 1.442695
        %v1015 = vpow.pop %v1014
        %v1016 = vld [vmem:[#allocation3] sm:$0xff]
        %v1017 = vld [vmem:[#allocation3 + $0x8] sm:$0xff]
        %v1018 = vld [vmem:[#allocation3 + $0x10] sm:$0xff]
        %v1019 = vld [vmem:[#allocation3 + $0x18] sm:$0xff]
        %v1020 = vld [vmem:[#allocation3 + $0x20] sm:$0xff]
        %v1021 = vld [vmem:[#allocation3 + $0x28] sm:$0xff]
        %v1022 = vld [vmem:[#allocation3 + $0x30] sm:$0xff]
        %v1023 = vld [vmem:[#allocation3 + $0x38] sm:$0xff]
        %v1024 = vld [vmem:[#allocation3 + $0x40] sm:$0xff]
        %v1025 = vld [vmem:[#allocation3 + $0x48] sm:$0xff]
        %v1026 = vld [vmem:[#allocation3 + $0x50] sm:$0xff]
        %v1027 = vld [vmem:[#allocation3 + $0x58] sm:$0xff]
        %v1028 = vld [vmem:[#allocation3 + $0x60] sm:$0xff]
        %v1029 = vld [vmem:[#allocation3 + $0x68] sm:$0xff]
        %v1030 = vld [vmem:[#allocation3 + $0x70] sm:$0xff]
        %v1031 = vld [vmem:[#allocation3 + $0x78] sm:$0xff]
        %v1032 = vld [vmem:[#allocation3 + $0x80] sm:$0xff]
        %v1033 = vld [vmem:[#allocation3 + $0x88] sm:$0xff]
        %v1034 = vld [vmem:[#allocation3 + $0x90] sm:$0xff]
        %v1035 = vld [vmem:[#allocation3 + $0x98] sm:$0xff]
        %v1036 = vld [vmem:[#allocation3 + $0xa0] sm:$0xff]
        %v1037 = vld [vmem:[#allocation3 + $0xa8] sm:$0xff]
        %v1038 = vld [vmem:[#allocation3 + $0xb0] sm:$0xff]
        %v1039 = vld [vmem:[#allocation3 + $0xb8] sm:$0xff]
        %v1040 = vld [vmem:[#allocation3 + $0xc0] sm:$0xff]
        %v1041 = vld [vmem:[#allocation3 + $0xc8] sm:$0xff]
        %v1042 = vld [vmem:[#allocation3 + $0xd0] sm:$0xff]
        %v1043 = vld [vmem:[#allocation3 + $0xd8] sm:$0xff]
        %v1044 = vld [vmem:[#allocation3 + $0xe0] sm:$0xff]
        %v1045 = vld [vmem:[#allocation3 + $0xe8] sm:$0xff]
        %v1046 = vld [vmem:[#allocation3 + $0xf0] sm:$0xff]
        %v1047 = vld [vmem:[#allocation3 + $0xf8] sm:$0xff]
        %v1048 = vmul.f32 %v953, %v1016
        %v1049 = vmul.f32 %v955, %v1017
        %v1050 = vmul.f32 %v957, %v1018
        %v1051 = vmul.f32 %v959, %v1019
        %v1052 = vmul.f32 %v961, %v1020
        %v1053 = vmul.f32 %v963, %v1021
        %v1054 = vmul.f32 %v965, %v1022
        %v1055 = vmul.f32 %v967, %v1023
        %v1056 = vmul.f32 %v969, %v1024
        %v1057 = vmul.f32 %v971, %v1025
        %v1058 = vmul.f32 %v973, %v1026
        %v1059 = vmul.f32 %v975, %v1027
        %v1060 = vmul.f32 %v977, %v1028
        %v1061 = vmul.f32 %v979, %v1029
        %v1062 = vmul.f32 %v981, %v1030
        %v1063 = vmul.f32 %v983, %v1031
        %v1064 = vmul.f32 %v985, %v1032
        %v1065 = vmul.f32 %v987, %v1033
        %v1066 = vmul.f32 %v989, %v1034
        %v1067 = vmul.f32 %v991, %v1035
        %v1068 = vmul.f32 %v993, %v1036
        %v1069 = vmul.f32 %v995, %v1037
        %v1070 = vmul.f32 %v997, %v1038
        %v1071 = vmul.f32 %v999, %v1039
        %v1072 = vmul.f32 %v1001, %v1040
        %v1073 = vmul.f32 %v1003, %v1041
        %v1074 = vmul.f32 %v1005, %v1042
        %v1075 = vmul.f32 %v1007, %v1043
        %v1076 = vmul.f32 %v1009, %v1044
        %v1077 = vmul.f32 %v1011, %v1045
        %v1078 = vmul.f32 %v1013, %v1046
        %v1079 = vmul.f32 %v1015, %v1047
        %1081 = vset.pattern.permute.xlu0 0
        %1082 = vperm.xlu0 %1081, %v888
        %v1083 = vpop.permute.xlu0 %1082
        %1086 = vset.pattern.permute.xlu0 0
        %1087 = vperm.xlu0 %1086, %v889
        %v1088 = vpop.permute.xlu0 %1087
        %1091 = vset.pattern.permute.xlu0 0
        %1092 = vperm.xlu0 %1091, %v890
        %v1093 = vpop.permute.xlu0 %1092
        %1096 = vset.pattern.permute.xlu0 0
        %1097 = vperm.xlu0 %1096, %v891
        %v1098 = vpop.permute.xlu0 %1097
        %1101 = vset.pattern.permute.xlu0 0
        %1102 = vperm.xlu0 %1101, %v892
        %v1103 = vpop.permute.xlu0 %1102
        %1106 = vset.pattern.permute.xlu0 0
        %1107 = vperm.xlu0 %1106, %v893
        %v1108 = vpop.permute.xlu0 %1107
        %1111 = vset.pattern.permute.xlu0 0
        %1112 = vperm.xlu0 %1111, %v894
        %v1113 = vpop.permute.xlu0 %1112
        %1116 = vset.pattern.permute.xlu0 0
        %1117 = vperm.xlu0 %1116, %v895
        %v1118 = vpop.permute.xlu0 %1117
        %1121 = vset.pattern.permute.xlu0 0
        %1122 = vperm.xlu0 %1121, %v896
        %v1123 = vpop.permute.xlu0 %1122
        %1126 = vset.pattern.permute.xlu0 0
        %1127 = vperm.xlu0 %1126, %v897
        %v1128 = vpop.permute.xlu0 %1127
        %1131 = vset.pattern.permute.xlu0 0
        %1132 = vperm.xlu0 %1131, %v898
        %v1133 = vpop.permute.xlu0 %1132
        %1136 = vset.pattern.permute.xlu0 0
        %1137 = vperm.xlu0 %1136, %v899
        %v1138 = vpop.permute.xlu0 %1137
        %1141 = vset.pattern.permute.xlu0 0
        %1142 = vperm.xlu0 %1141, %v900
        %v1143 = vpop.permute.xlu0 %1142
        %1146 = vset.pattern.permute.xlu0 0
        %1147 = vperm.xlu0 %1146, %v901
        %v1148 = vpop.permute.xlu0 %1147
        %1151 = vset.pattern.permute.xlu0 0
        %1152 = vperm.xlu0 %1151, %v902
        %v1153 = vpop.permute.xlu0 %1152
        %1156 = vset.pattern.permute.xlu0 0
        %1157 = vperm.xlu0 %1156, %v903
        %v1158 = vpop.permute.xlu0 %1157
        %1161 = vset.pattern.permute.xlu0 0
        %1162 = vperm.xlu0 %1161, %v904
        %v1163 = vpop.permute.xlu0 %1162
        %1166 = vset.pattern.permute.xlu0 0
        %1167 = vperm.xlu0 %1166, %v905
        %v1168 = vpop.permute.xlu0 %1167
        %1171 = vset.pattern.permute.xlu0 0
        %1172 = vperm.xlu0 %1171, %v906
        %v1173 = vpop.permute.xlu0 %1172
        %1176 = vset.pattern.permute.xlu0 0
        %1177 = vperm.xlu0 %1176, %v907
        %v1178 = vpop.permute.xlu0 %1177
        %1181 = vset.pattern.permute.xlu0 0
        %1182 = vperm.xlu0 %1181, %v908
        %v1183 = vpop.permute.xlu0 %1182
        %1186 = vset.pattern.permute.xlu0 0
        %1187 = vperm.xlu0 %1186, %v909
        %v1188 = vpop.permute.xlu0 %1187
        %1191 = vset.pattern.permute.xlu0 0
        %1192 = vperm.xlu0 %1191, %v910
        %v1193 = vpop.permute.xlu0 %1192
        %1196 = vset.pattern.permute.xlu0 0
        %1197 = vperm.xlu0 %1196, %v911
        %v1198 = vpop.permute.xlu0 %1197
        %1201 = vset.pattern.permute.xlu0 0
        %1202 = vperm.xlu0 %1201, %v912
        %v1203 = vpop.permute.xlu0 %1202
        %1206 = vset.pattern.permute.xlu0 0
        %1207 = vperm.xlu0 %1206, %v913
        %v1208 = vpop.permute.xlu0 %1207
        %1211 = vset.pattern.permute.xlu0 0
        %1212 = vperm.xlu0 %1211, %v914
        %v1213 = vpop.permute.xlu0 %1212
        %1216 = vset.pattern.permute.xlu0 0
        %1217 = vperm.xlu0 %1216, %v915
        %v1218 = vpop.permute.xlu0 %1217
        %1221 = vset.pattern.permute.xlu0 0
        %1222 = vperm.xlu0 %1221, %v916
        %v1223 = vpop.permute.xlu0 %1222
        %1226 = vset.pattern.permute.xlu0 0
        %1227 = vperm.xlu0 %1226, %v917
        %v1228 = vpop.permute.xlu0 %1227
        %1231 = vset.pattern.permute.xlu0 0
        %1232 = vperm.xlu0 %1231, %v918
        %v1233 = vpop.permute.xlu0 %1232
        %1236 = vset.pattern.permute.xlu0 0
        %1237 = vperm.xlu0 %1236, %v919
        %v1238 = vpop.permute.xlu0 %1237
        %v1240 = vsub.f32 %v760, %v1083
        %v1241 = vsub.f32 %v761, %v1088
        %v1242 = vsub.f32 %v762, %v1093
        %v1243 = vsub.f32 %v763, %v1098
        %v1244 = vsub.f32 %v764, %v1103
        %v1245 = vsub.f32 %v765, %v1108
        %v1246 = vsub.f32 %v766, %v1113
        %v1247 = vsub.f32 %v767, %v1118
        %v1248 = vsub.f32 %v768, %v1123
        %v1249 = vsub.f32 %v769, %v1128
        %v1250 = vsub.f32 %v770, %v1133
        %v1251 = vsub.f32 %v771, %v1138
        %v1252 = vsub.f32 %v772, %v1143
        %v1253 = vsub.f32 %v773, %v1148
        %v1254 = vsub.f32 %v774, %v1153
        %v1255 = vsub.f32 %v775, %v1158
        %v1256 = vsub.f32 %v776, %v1163
        %v1257 = vsub.f32 %v777, %v1168
        %v1258 = vsub.f32 %v778, %v1173
        %v1259 = vsub.f32 %v779, %v1178
        %v1260 = vsub.f32 %v780, %v1183
        %v1261 = vsub.f32 %v781, %v1188
        %v1262 = vsub.f32 %v782, %v1193
        %v1263 = vsub.f32 %v783, %v1198
        %v1264 = vsub.f32 %v784, %v1203
        %v1265 = vsub.f32 %v785, %v1208
        %v1266 = vsub.f32 %v786, %v1213
        %v1267 = vsub.f32 %v787, %v1218
        %v1268 = vsub.f32 %v788, %v1223
        %v1269 = vsub.f32 %v789, %v1228
        %v1270 = vsub.f32 %v790, %v1233
        %v1271 = vsub.f32 %v791, %v1238
        %v1272 = vmul.f32 %v1240, 1.442695
        %v1273 = vpow.pop %v1272
        %v1274 = vmul.f32 %v1241, 1.442695
        %v1275 = vpow.pop %v1274
        %v1276 = vmul.f32 %v1242, 1.442695
        %v1277 = vpow.pop %v1276
        %v1278 = vmul.f32 %v1243, 1.442695
        %v1279 = vpow.pop %v1278
        %v1280 = vmul.f32 %v1244, 1.442695
        %v1281 = vpow.pop %v1280
        %v1282 = vmul.f32 %v1245, 1.442695
        %v1283 = vpow.pop %v1282
        %v1284 = vmul.f32 %v1246, 1.442695
        %v1285 = vpow.pop %v1284
        %v1286 = vmul.f32 %v1247, 1.442695
        %v1287 = vpow.pop %v1286
        %v1288 = vmul.f32 %v1248, 1.442695
        %v1289 = vpow.pop %v1288
        %v1290 = vmul.f32 %v1249, 1.442695
        %v1291 = vpow.pop %v1290
        %v1292 = vmul.f32 %v1250, 1.442695
        %v1293 = vpow.pop %v1292
        %v1294 = vmul.f32 %v1251, 1.442695
        %v1295 = vpow.pop %v1294
        %v1296 = vmul.f32 %v1252, 1.442695
        %v1297 = vpow.pop %v1296
        %v1298 = vmul.f32 %v1253, 1.442695
        %v1299 = vpow.pop %v1298
        %v1300 = vmul.f32 %v1254, 1.442695
        %v1301 = vpow.pop %v1300
        %v1302 = vmul.f32 %v1255, 1.442695
        %v1303 = vpow.pop %v1302
        %v1304 = vmul.f32 %v1256, 1.442695
        %v1305 = vpow.pop %v1304
        %v1306 = vmul.f32 %v1257, 1.442695
        %v1307 = vpow.pop %v1306
        %v1308 = vmul.f32 %v1258, 1.442695
        %v1309 = vpow.pop %v1308
        %v1310 = vmul.f32 %v1259, 1.442695
        %v1311 = vpow.pop %v1310
        %v1312 = vmul.f32 %v1260, 1.442695
        %v1313 = vpow.pop %v1312
        %v1314 = vmul.f32 %v1261, 1.442695
        %v1315 = vpow.pop %v1314
        %v1316 = vmul.f32 %v1262, 1.442695
        %v1317 = vpow.pop %v1316
        %v1318 = vmul.f32 %v1263, 1.442695
        %v1319 = vpow.pop %v1318
        %v1320 = vmul.f32 %v1264, 1.442695
        %v1321 = vpow.pop %v1320
        %v1322 = vmul.f32 %v1265, 1.442695
        %v1323 = vpow.pop %v1322
        %v1324 = vmul.f32 %v1266, 1.442695
        %v1325 = vpow.pop %v1324
        %v1326 = vmul.f32 %v1267, 1.442695
        %v1327 = vpow.pop %v1326
        %v1328 = vmul.f32 %v1268, 1.442695
        %v1329 = vpow.pop %v1328
        %v1330 = vmul.f32 %v1269, 1.442695
        %v1331 = vpow.pop %v1330
        %v1332 = vmul.f32 %v1270, 1.442695
        %v1333 = vpow.pop %v1332
        %v1334 = vmul.f32 %v1271, 1.442695
        %v1335 = vpow.pop %v1334
        %1336 = vadd.xlane.f32.xlu0 %v1273
        %v1337 = vpop.xlane.xlu0 %1336
        %1338 = vadd.xlane.f32.xlu0 %v1275
        %v1339 = vpop.xlane.xlu0 %1338
        %1340 = vadd.xlane.f32.xlu0 %v1277
        %v1341 = vpop.xlane.xlu0 %1340
        %1342 = vadd.xlane.f32.xlu0 %v1279
        %v1343 = vpop.xlane.xlu0 %1342
        %1344 = vadd.xlane.f32.xlu0 %v1281
        %v1345 = vpop.xlane.xlu0 %1344
        %1346 = vadd.xlane.f32.xlu0 %v1283
        %v1347 = vpop.xlane.xlu0 %1346
        %1348 = vadd.xlane.f32.xlu0 %v1285
        %v1349 = vpop.xlane.xlu0 %1348
        %1350 = vadd.xlane.f32.xlu0 %v1287
        %v1351 = vpop.xlane.xlu0 %1350
        %1352 = vadd.xlane.f32.xlu0 %v1289
        %v1353 = vpop.xlane.xlu0 %1352
        %1354 = vadd.xlane.f32.xlu0 %v1291
        %v1355 = vpop.xlane.xlu0 %1354
        %1356 = vadd.xlane.f32.xlu0 %v1293
        %v1357 = vpop.xlane.xlu0 %1356
        %1358 = vadd.xlane.f32.xlu0 %v1295
        %v1359 = vpop.xlane.xlu0 %1358
        %1360 = vadd.xlane.f32.xlu0 %v1297
        %v1361 = vpop.xlane.xlu0 %1360
        %1362 = vadd.xlane.f32.xlu0 %v1299
        %v1363 = vpop.xlane.xlu0 %1362
        %1364 = vadd.xlane.f32.xlu0 %v1301
        %v1365 = vpop.xlane.xlu0 %1364
        %1366 = vadd.xlane.f32.xlu0 %v1303
        %v1367 = vpop.xlane.xlu0 %1366
        %1368 = vadd.xlane.f32.xlu0 %v1305
        %v1369 = vpop.xlane.xlu0 %1368
        %1370 = vadd.xlane.f32.xlu0 %v1307
        %v1371 = vpop.xlane.xlu0 %1370
        %1372 = vadd.xlane.f32.xlu0 %v1309
        %v1373 = vpop.xlane.xlu0 %1372
        %1374 = vadd.xlane.f32.xlu0 %v1311
        %v1375 = vpop.xlane.xlu0 %1374
        %1376 = vadd.xlane.f32.xlu0 %v1313
        %v1377 = vpop.xlane.xlu0 %1376
        %1378 = vadd.xlane.f32.xlu0 %v1315
        %v1379 = vpop.xlane.xlu0 %1378
        %1380 = vadd.xlane.f32.xlu0 %v1317
        %v1381 = vpop.xlane.xlu0 %1380
        %1382 = vadd.xlane.f32.xlu0 %v1319
        %v1383 = vpop.xlane.xlu0 %1382
        %1384 = vadd.xlane.f32.xlu0 %v1321
        %v1385 = vpop.xlane.xlu0 %1384
        %1386 = vadd.xlane.f32.xlu0 %v1323
        %v1387 = vpop.xlane.xlu0 %1386
        %1388 = vadd.xlane.f32.xlu0 %v1325
        %v1389 = vpop.xlane.xlu0 %1388
        %1390 = vadd.xlane.f32.xlu0 %v1327
        %v1391 = vpop.xlane.xlu0 %1390
        %1392 = vadd.xlane.f32.xlu0 %v1329
        %v1393 = vpop.xlane.xlu0 %1392
        %1394 = vadd.xlane.f32.xlu0 %v1331
        %v1395 = vpop.xlane.xlu0 %1394
        %1396 = vadd.xlane.f32.xlu0 %v1333
        %v1397 = vpop.xlane.xlu0 %1396
        %1398 = vadd.xlane.f32.xlu0 %v1335
        %v1399 = vpop.xlane.xlu0 %1398
        %v1400 = vadd.f32 %v1048, %v1337
        %v1401 = vadd.f32 %v1049, %v1339
        %v1402 = vadd.f32 %v1050, %v1341
        %v1403 = vadd.f32 %v1051, %v1343
        %v1404 = vadd.f32 %v1052, %v1345
        %v1405 = vadd.f32 %v1053, %v1347
        %v1406 = vadd.f32 %v1054, %v1349
        %v1407 = vadd.f32 %v1055, %v1351
        %v1408 = vadd.f32 %v1056, %v1353
        %v1409 = vadd.f32 %v1057, %v1355
        %v1410 = vadd.f32 %v1058, %v1357
        %v1411 = vadd.f32 %v1059, %v1359
        %v1412 = vadd.f32 %v1060, %v1361
        %v1413 = vadd.f32 %v1061, %v1363
        %v1414 = vadd.f32 %v1062, %v1365
        %v1415 = vadd.f32 %v1063, %v1367
        %v1416 = vadd.f32 %v1064, %v1369
        %v1417 = vadd.f32 %v1065, %v1371
        %v1418 = vadd.f32 %v1066, %v1373
        %v1419 = vadd.f32 %v1067, %v1375
        %v1420 = vadd.f32 %v1068, %v1377
        %v1421 = vadd.f32 %v1069, %v1379
        %v1422 = vadd.f32 %v1070, %v1381
        %v1423 = vadd.f32 %v1071, %v1383
        %v1424 = vadd.f32 %v1072, %v1385
        %v1425 = vadd.f32 %v1073, %v1387
        %v1426 = vadd.f32 %v1074, %v1389
        %v1427 = vadd.f32 %v1075, %v1391
        %v1428 = vadd.f32 %v1076, %v1393
        %v1429 = vadd.f32 %v1077, %v1395
        %v1430 = vadd.f32 %v1078, %v1397
        %v1431 = vadd.f32 %v1079, %v1399
        %vm1432 = vcmask 7168
        %1433 = vst.msk [vmem:[#allocation3] sm:$0xff] %vm1432, %v1400
        %1434 = vst.msk [vmem:[#allocation3 + $0x8] sm:$0xff] %vm1432, %v1401
        %1435 = vst.msk [vmem:[#allocation3 + $0x10] sm:$0xff] %vm1432, %v1402
        %1436 = vst.msk [vmem:[#allocation3 + $0x18] sm:$0xff] %vm1432, %v1403
        %1437 = vst.msk [vmem:[#allocation3 + $0x20] sm:$0xff] %vm1432, %v1404
        %1438 = vst.msk [vmem:[#allocation3 + $0x28] sm:$0xff] %vm1432, %v1405
        %1439 = vst.msk [vmem:[#allocation3 + $0x30] sm:$0xff] %vm1432, %v1406
        %1440 = vst.msk [vmem:[#allocation3 + $0x38] sm:$0xff] %vm1432, %v1407
        %1441 = vst.msk [vmem:[#allocation3 + $0x40] sm:$0xff] %vm1432, %v1408
        %1442 = vst.msk [vmem:[#allocation3 + $0x48] sm:$0xff] %vm1432, %v1409
        %1443 = vst.msk [vmem:[#allocation3 + $0x50] sm:$0xff] %vm1432, %v1410
        %1444 = vst.msk [vmem:[#allocation3 + $0x58] sm:$0xff] %vm1432, %v1411
        %1445 = vst.msk [vmem:[#allocation3 + $0x60] sm:$0xff] %vm1432, %v1412
        %1446 = vst.msk [vmem:[#allocation3 + $0x68] sm:$0xff] %vm1432, %v1413
        %1447 = vst.msk [vmem:[#allocation3 + $0x70] sm:$0xff] %vm1432, %v1414
        %1448 = vst.msk [vmem:[#allocation3 + $0x78] sm:$0xff] %vm1432, %v1415
        %1449 = vst.msk [vmem:[#allocation3 + $0x80] sm:$0xff] %vm1432, %v1416
        %1450 = vst.msk [vmem:[#allocation3 + $0x88] sm:$0xff] %vm1432, %v1417
        %1451 = vst.msk [vmem:[#allocation3 + $0x90] sm:$0xff] %vm1432, %v1418
        %1452 = vst.msk [vmem:[#allocation3 + $0x98] sm:$0xff] %vm1432, %v1419
        %1453 = vst.msk [vmem:[#allocation3 + $0xa0] sm:$0xff] %vm1432, %v1420
        %1454 = vst.msk [vmem:[#allocation3 + $0xa8] sm:$0xff] %vm1432, %v1421
        %1455 = vst.msk [vmem:[#allocation3 + $0xb0] sm:$0xff] %vm1432, %v1422
        %1456 = vst.msk [vmem:[#allocation3 + $0xb8] sm:$0xff] %vm1432, %v1423
        %1457 = vst.msk [vmem:[#allocation3 + $0xc0] sm:$0xff] %vm1432, %v1424
        %1458 = vst.msk [vmem:[#allocation3 + $0xc8] sm:$0xff] %vm1432, %v1425
        %1459 = vst.msk [vmem:[#allocation3 + $0xd0] sm:$0xff] %vm1432, %v1426
        %1460 = vst.msk [vmem:[#allocation3 + $0xd8] sm:$0xff] %vm1432, %v1427
        %1461 = vst.msk [vmem:[#allocation3 + $0xe0] sm:$0xff] %vm1432, %v1428
        %1462 = vst.msk [vmem:[#allocation3 + $0xe8] sm:$0xff] %vm1432, %v1429
        %1463 = vst.msk [vmem:[#allocation3 + $0xf0] sm:$0xff] %vm1432, %v1430
        %1464 = vst.msk [vmem:[#allocation3 + $0xf8] sm:$0xff] %vm1432, %v1431
        %1465 = vst.msk [vmem:[#allocation2] sm:$0xff] %vm1432, %v888
        %1466 = vst.msk [vmem:[#allocation2 + $0x8] sm:$0xff] %vm1432, %v889
        %1467 = vst.msk [vmem:[#allocation2 + $0x10] sm:$0xff] %vm1432, %v890
        %1468 = vst.msk [vmem:[#allocation2 + $0x18] sm:$0xff] %vm1432, %v891
        %1469 = vst.msk [vmem:[#allocation2 + $0x20] sm:$0xff] %vm1432, %v892
        %1470 = vst.msk [vmem:[#allocation2 + $0x28] sm:$0xff] %vm1432, %v893
        %1471 = vst.msk [vmem:[#allocation2 + $0x30] sm:$0xff] %vm1432, %v894
        %1472 = vst.msk [vmem:[#allocation2 + $0x38] sm:$0xff] %vm1432, %v895
        %1473 = vst.msk [vmem:[#allocation2 + $0x40] sm:$0xff] %vm1432, %v896
        %1474 = vst.msk [vmem:[#allocation2 + $0x48] sm:$0xff] %vm1432, %v897
        %1475 = vst.msk [vmem:[#allocation2 + $0x50] sm:$0xff] %vm1432, %v898
        %1476 = vst.msk [vmem:[#allocation2 + $0x58] sm:$0xff] %vm1432, %v899
        %1477 = vst.msk [vmem:[#allocation2 + $0x60] sm:$0xff] %vm1432, %v900
        %1478 = vst.msk [vmem:[#allocation2 + $0x68] sm:$0xff] %vm1432, %v901
        %1479 = vst.msk [vmem:[#allocation2 + $0x70] sm:$0xff] %vm1432, %v902
        %1480 = vst.msk [vmem:[#allocation2 + $0x78] sm:$0xff] %vm1432, %v903
        %1481 = vst.msk [vmem:[#allocation2 + $0x80] sm:$0xff] %vm1432, %v904
        %1482 = vst.msk [vmem:[#allocation2 + $0x88] sm:$0xff] %vm1432, %v905
        %1483 = vst.msk [vmem:[#allocation2 + $0x90] sm:$0xff] %vm1432, %v906
        %1484 = vst.msk [vmem:[#allocation2 + $0x98] sm:$0xff] %vm1432, %v907
        %1485 = vst.msk [vmem:[#allocation2 + $0xa0] sm:$0xff] %vm1432, %v908
        %1486 = vst.msk [vmem:[#allocation2 + $0xa8] sm:$0xff] %vm1432, %v909
        %1487 = vst.msk [vmem:[#allocation2 + $0xb0] sm:$0xff] %vm1432, %v910
        %1488 = vst.msk [vmem:[#allocation2 + $0xb8] sm:$0xff] %vm1432, %v911
        %1489 = vst.msk [vmem:[#allocation2 + $0xc0] sm:$0xff] %vm1432, %v912
        %1490 = vst.msk [vmem:[#allocation2 + $0xc8] sm:$0xff] %vm1432, %v913
        %1491 = vst.msk [vmem:[#allocation2 + $0xd0] sm:$0xff] %vm1432, %v914
        %1492 = vst.msk [vmem:[#allocation2 + $0xd8] sm:$0xff] %vm1432, %v915
        %1493 = vst.msk [vmem:[#allocation2 + $0xe0] sm:$0xff] %vm1432, %v916
        %1494 = vst.msk [vmem:[#allocation2 + $0xe8] sm:$0xff] %vm1432, %v917
        %1495 = vst.msk [vmem:[#allocation2 + $0xf0] sm:$0xff] %vm1432, %v918
        %1496 = vst.msk [vmem:[#allocation2 + $0xf8] sm:$0xff] %vm1432, %v919
        %v1497 = vld [vmem:[#allocation4] sm:$0xff]
        %v1498 = vld [vmem:[#allocation4 + $0x8] sm:$0xff]
        %v1499 = vld [vmem:[#allocation4 + $0x10] sm:$0xff]
        %v1500 = vld [vmem:[#allocation4 + $0x18] sm:$0xff]
        %v1501 = vld [vmem:[#allocation4 + $0x20] sm:$0xff]
        %v1502 = vld [vmem:[#allocation4 + $0x28] sm:$0xff]
        %v1503 = vld [vmem:[#allocation4 + $0x30] sm:$0xff]
        %v1504 = vld [vmem:[#allocation4 + $0x38] sm:$0xff]
        %v1505 = vld [vmem:[#allocation4 + $0x40] sm:$0xff]
        %v1506 = vld [vmem:[#allocation4 + $0x48] sm:$0xff]
        %v1507 = vld [vmem:[#allocation4 + $0x50] sm:$0xff]
        %v1508 = vld [vmem:[#allocation4 + $0x58] sm:$0xff]
        %v1509 = vld [vmem:[#allocation4 + $0x60] sm:$0xff]
        %v1510 = vld [vmem:[#allocation4 + $0x68] sm:$0xff]
        %v1511 = vld [vmem:[#allocation4 + $0x70] sm:$0xff]
        %v1512 = vld [vmem:[#allocation4 + $0x78] sm:$0xff]
        %v1513 = vld [vmem:[#allocation4 + $0x80] sm:$0xff]
        %v1514 = vld [vmem:[#allocation4 + $0x88] sm:$0xff]
        %v1515 = vld [vmem:[#allocation4 + $0x90] sm:$0xff]
        %v1516 = vld [vmem:[#allocation4 + $0x98] sm:$0xff]
        %v1517 = vld [vmem:[#allocation4 + $0xa0] sm:$0xff]
        %v1518 = vld [vmem:[#allocation4 + $0xa8] sm:$0xff]
        %v1519 = vld [vmem:[#allocation4 + $0xb0] sm:$0xff]
        %v1520 = vld [vmem:[#allocation4 + $0xb8] sm:$0xff]
        %v1521 = vld [vmem:[#allocation4 + $0xc0] sm:$0xff]
        %v1522 = vld [vmem:[#allocation4 + $0xc8] sm:$0xff]
        %v1523 = vld [vmem:[#allocation4 + $0xd0] sm:$0xff]
        %v1524 = vld [vmem:[#allocation4 + $0xd8] sm:$0xff]
        %v1525 = vld [vmem:[#allocation4 + $0xe0] sm:$0xff]
        %v1526 = vld [vmem:[#allocation4 + $0xe8] sm:$0xff]
        %v1527 = vld [vmem:[#allocation4 + $0xf0] sm:$0xff]
        %v1528 = vld [vmem:[#allocation4 + $0xf8] sm:$0xff]
        %v1529 = vxor.u32 %v659, 1
        %v1530 = vxor.u32 %v660, 1
        %v1531 = vxor.u32 %v661, 1
        %v1532 = vxor.u32 %v662, 1
        %v1533 = vxor.u32 %v663, 1
        %v1534 = vxor.u32 %v664, 1
        %v1535 = vxor.u32 %v665, 1
        %v1536 = vxor.u32 %v666, 1
        %v1537 = vxor.u32 %v667, 1
        %v1538 = vxor.u32 %v668, 1
        %v1539 = vxor.u32 %v669, 1
        %v1540 = vxor.u32 %v670, 1
        %v1541 = vxor.u32 %v671, 1
        %v1542 = vxor.u32 %v672, 1
        %v1543 = vxor.u32 %v673, 1
        %v1544 = vxor.u32 %v674, 1
        %v1545 = vxor.u32 %v675, 1
        %v1546 = vxor.u32 %v676, 1
        %v1547 = vxor.u32 %v677, 1
        %v1548 = vxor.u32 %v678, 1
        %v1549 = vxor.u32 %v679, 1
        %v1550 = vxor.u32 %v680, 1
        %v1551 = vxor.u32 %v681, 1
        %v1552 = vxor.u32 %v682, 1
        %v1553 = vxor.u32 %v683, 1
        %v1554 = vxor.u32 %v684, 1
        %v1555 = vxor.u32 %v685, 1
        %v1556 = vxor.u32 %v686, 1
        %v1557 = vxor.u32 %v687, 1
        %v1558 = vxor.u32 %v688, 1
        %v1559 = vxor.u32 %v689, 1
        %v1560 = vxor.u32 %v690, 1
        %vm1561 = vcmp.eq.s32.totalorder %v694, %v1529
        %vm1562 = vcmp.eq.s32.totalorder %v694, %v1530
        %vm1563 = vcmp.eq.s32.totalorder %v694, %v1531
        %vm1564 = vcmp.eq.s32.totalorder %v694, %v1532
        %vm1565 = vcmp.eq.s32.totalorder %v694, %v1533
        %vm1566 = vcmp.eq.s32.totalorder %v694, %v1534
        %vm1567 = vcmp.eq.s32.totalorder %v694, %v1535
        %vm1568 = vcmp.eq.s32.totalorder %v694, %v1536
        %vm1569 = vcmp.eq.s32.totalorder %v694, %v1537
        %vm1570 = vcmp.eq.s32.totalorder %v694, %v1538
        %vm1571 = vcmp.eq.s32.totalorder %v694, %v1539
        %vm1572 = vcmp.eq.s32.totalorder %v694, %v1540
        %vm1573 = vcmp.eq.s32.totalorder %v694, %v1541
        %vm1574 = vcmp.eq.s32.totalorder %v694, %v1542
        %vm1575 = vcmp.eq.s32.totalorder %v694, %v1543
        %vm1576 = vcmp.eq.s32.totalorder %v694, %v1544
        %vm1577 = vcmp.eq.s32.totalorder %v694, %v1545
        %vm1578 = vcmp.eq.s32.totalorder %v694, %v1546
        %vm1579 = vcmp.eq.s32.totalorder %v694, %v1547
        %vm1580 = vcmp.eq.s32.totalorder %v694, %v1548
        %vm1581 = vcmp.eq.s32.totalorder %v694, %v1549
        %vm1582 = vcmp.eq.s32.totalorder %v694, %v1550
        %vm1583 = vcmp.eq.s32.totalorder %v694, %v1551
        %vm1584 = vcmp.eq.s32.totalorder %v694, %v1552
        %vm1585 = vcmp.eq.s32.totalorder %v694, %v1553
        %vm1586 = vcmp.eq.s32.totalorder %v694, %v1554
        %vm1587 = vcmp.eq.s32.totalorder %v694, %v1555
        %vm1588 = vcmp.eq.s32.totalorder %v694, %v1556
        %vm1589 = vcmp.eq.s32.totalorder %v694, %v1557
        %vm1590 = vcmp.eq.s32.totalorder %v694, %v1558
        %vm1591 = vcmp.eq.s32.totalorder %v694, %v1559
        %vm1592 = vcmp.eq.s32.totalorder %v694, %v1560
        %v1593 = vsel %vm1561, %v760, 0.0
        %v1594 = vsel %vm1562, %v761, 0.0
        %v1595 = vsel %vm1563, %v762, 0.0
        %v1596 = vsel %vm1564, %v763, 0.0
        %v1597 = vsel %vm1565, %v764, 0.0
        %v1598 = vsel %vm1566, %v765, 0.0
        %v1599 = vsel %vm1567, %v766, 0.0
        %v1600 = vsel %vm1568, %v767, 0.0
        %v1601 = vsel %vm1569, %v768, 0.0
        %v1602 = vsel %vm1570, %v769, 0.0
        %v1603 = vsel %vm1571, %v770, 0.0
        %v1604 = vsel %vm1572, %v771, 0.0
        %v1605 = vsel %vm1573, %v772, 0.0
        %v1606 = vsel %vm1574, %v773, 0.0
        %v1607 = vsel %vm1575, %v774, 0.0
        %v1608 = vsel %vm1576, %v775, 0.0
        %v1609 = vsel %vm1577, %v776, 0.0
        %v1610 = vsel %vm1578, %v777, 0.0
        %v1611 = vsel %vm1579, %v778, 0.0
        %v1612 = vsel %vm1580, %v779, 0.0
        %v1613 = vsel %vm1581, %v780, 0.0
        %v1614 = vsel %vm1582, %v781, 0.0
        %v1615 = vsel %vm1583, %v782, 0.0
        %v1616 = vsel %vm1584, %v783, 0.0
        %v1617 = vsel %vm1585, %v784, 0.0
        %v1618 = vsel %vm1586, %v785, 0.0
        %v1619 = vsel %vm1587, %v786, 0.0
        %v1620 = vsel %vm1588, %v787, 0.0
        %v1621 = vsel %vm1589, %v788, 0.0
        %v1622 = vsel %vm1590, %v789, 0.0
        %v1623 = vsel %vm1591, %v790, 0.0
        %v1624 = vsel %vm1592, %v791, 0.0
        %1625 = vadd.xlane.f32.xlu0 %v1593
        %v1626 = vpop.xlane.xlu0 %1625
        %1627 = vadd.xlane.f32.xlu0 %v1594
        %v1628 = vpop.xlane.xlu0 %1627
        %1629 = vadd.xlane.f32.xlu0 %v1595
        %v1630 = vpop.xlane.xlu0 %1629
        %1631 = vadd.xlane.f32.xlu0 %v1596
        %v1632 = vpop.xlane.xlu0 %1631
        %1633 = vadd.xlane.f32.xlu0 %v1597
        %v1634 = vpop.xlane.xlu0 %1633
        %1635 = vadd.xlane.f32.xlu0 %v1598
        %v1636 = vpop.xlane.xlu0 %1635
        %1637 = vadd.xlane.f32.xlu0 %v1599
        %v1638 = vpop.xlane.xlu0 %1637
        %1639 = vadd.xlane.f32.xlu0 %v1600
        %v1640 = vpop.xlane.xlu0 %1639
        %1641 = vadd.xlane.f32.xlu0 %v1601
        %v1642 = vpop.xlane.xlu0 %1641
        %1643 = vadd.xlane.f32.xlu0 %v1602
        %v1644 = vpop.xlane.xlu0 %1643
        %1645 = vadd.xlane.f32.xlu0 %v1603
        %v1646 = vpop.xlane.xlu0 %1645
        %1647 = vadd.xlane.f32.xlu0 %v1604
        %v1648 = vpop.xlane.xlu0 %1647
        %1649 = vadd.xlane.f32.xlu0 %v1605
        %v1650 = vpop.xlane.xlu0 %1649
        %1651 = vadd.xlane.f32.xlu0 %v1606
        %v1652 = vpop.xlane.xlu0 %1651
        %1653 = vadd.xlane.f32.xlu0 %v1607
        %v1654 = vpop.xlane.xlu0 %1653
        %1655 = vadd.xlane.f32.xlu0 %v1608
        %v1656 = vpop.xlane.xlu0 %1655
        %1657 = vadd.xlane.f32.xlu0 %v1609
        %v1658 = vpop.xlane.xlu0 %1657
        %1659 = vadd.xlane.f32.xlu0 %v1610
        %v1660 = vpop.xlane.xlu0 %1659
        %1661 = vadd.xlane.f32.xlu0 %v1611
        %v1662 = vpop.xlane.xlu0 %1661
        %1663 = vadd.xlane.f32.xlu0 %v1612
        %v1664 = vpop.xlane.xlu0 %1663
        %1665 = vadd.xlane.f32.xlu0 %v1613
        %v1666 = vpop.xlane.xlu0 %1665
        %1667 = vadd.xlane.f32.xlu0 %v1614
        %v1668 = vpop.xlane.xlu0 %1667
        %1669 = vadd.xlane.f32.xlu0 %v1615
        %v1670 = vpop.xlane.xlu0 %1669
        %1671 = vadd.xlane.f32.xlu0 %v1616
        %v1672 = vpop.xlane.xlu0 %1671
        %1673 = vadd.xlane.f32.xlu0 %v1617
        %v1674 = vpop.xlane.xlu0 %1673
        %1675 = vadd.xlane.f32.xlu0 %v1618
        %v1676 = vpop.xlane.xlu0 %1675
        %1677 = vadd.xlane.f32.xlu0 %v1619
        %v1678 = vpop.xlane.xlu0 %1677
        %1679 = vadd.xlane.f32.xlu0 %v1620
        %v1680 = vpop.xlane.xlu0 %1679
        %1681 = vadd.xlane.f32.xlu0 %v1621
        %v1682 = vpop.xlane.xlu0 %1681
        %1683 = vadd.xlane.f32.xlu0 %v1622
        %v1684 = vpop.xlane.xlu0 %1683
        %1685 = vadd.xlane.f32.xlu0 %v1623
        %v1686 = vpop.xlane.xlu0 %1685
        %1687 = vadd.xlane.f32.xlu0 %v1624
        %v1688 = vpop.xlane.xlu0 %1687
        %v1689 = vadd.f32 %v1497, %v1626
        %v1690 = vadd.f32 %v1498, %v1628
        %v1691 = vadd.f32 %v1499, %v1630
        %v1692 = vadd.f32 %v1500, %v1632
        %v1693 = vadd.f32 %v1501, %v1634
        %v1694 = vadd.f32 %v1502, %v1636
        %v1695 = vadd.f32 %v1503, %v1638
        %v1696 = vadd.f32 %v1504, %v1640
        %v1697 = vadd.f32 %v1505, %v1642
        %v1698 = vadd.f32 %v1506, %v1644
        %v1699 = vadd.f32 %v1507, %v1646
        %v1700 = vadd.f32 %v1508, %v1648
        %v1701 = vadd.f32 %v1509, %v1650
        %v1702 = vadd.f32 %v1510, %v1652
        %v1703 = vadd.f32 %v1511, %v1654
        %v1704 = vadd.f32 %v1512, %v1656
        %v1705 = vadd.f32 %v1513, %v1658
        %v1706 = vadd.f32 %v1514, %v1660
        %v1707 = vadd.f32 %v1515, %v1662
        %v1708 = vadd.f32 %v1516, %v1664
        %v1709 = vadd.f32 %v1517, %v1666
        %v1710 = vadd.f32 %v1518, %v1668
        %v1711 = vadd.f32 %v1519, %v1670
        %v1712 = vadd.f32 %v1520, %v1672
        %v1713 = vadd.f32 %v1521, %v1674
        %v1714 = vadd.f32 %v1522, %v1676
        %v1715 = vadd.f32 %v1523, %v1678
        %v1716 = vadd.f32 %v1524, %v1680
        %v1717 = vadd.f32 %v1525, %v1682
        %v1718 = vadd.f32 %v1526, %v1684
        %v1719 = vadd.f32 %v1527, %v1686
        %v1720 = vadd.f32 %v1528, %v1688
        %1721 = vst.msk [vmem:[#allocation4] sm:$0xff] %vm1432, %v1689
        %1722 = vst.msk [vmem:[#allocation4 + $0x8] sm:$0xff] %vm1432, %v1690
        %1723 = vst.msk [vmem:[#allocation4 + $0x10] sm:$0xff] %vm1432, %v1691
        %1724 = vst.msk [vmem:[#allocation4 + $0x18] sm:$0xff] %vm1432, %v1692
        %1725 = vst.msk [vmem:[#allocation4 + $0x20] sm:$0xff] %vm1432, %v1693
        %1726 = vst.msk [vmem:[#allocation4 + $0x28] sm:$0xff] %vm1432, %v1694
        %1727 = vst.msk [vmem:[#allocation4 + $0x30] sm:$0xff] %vm1432, %v1695
        %1728 = vst.msk [vmem:[#allocation4 + $0x38] sm:$0xff] %vm1432, %v1696
        %1729 = vst.msk [vmem:[#allocation4 + $0x40] sm:$0xff] %vm1432, %v1697
        %1730 = vst.msk [vmem:[#allocation4 + $0x48] sm:$0xff] %vm1432, %v1698
        %1731 = vst.msk [vmem:[#allocation4 + $0x50] sm:$0xff] %vm1432, %v1699
        %1732 = vst.msk [vmem:[#allocation4 + $0x58] sm:$0xff] %vm1432, %v1700
        %1733 = vst.msk [vmem:[#allocation4 + $0x60] sm:$0xff] %vm1432, %v1701
        %1734 = vst.msk [vmem:[#allocation4 + $0x68] sm:$0xff] %vm1432, %v1702
        %1735 = vst.msk [vmem:[#allocation4 + $0x70] sm:$0xff] %vm1432, %v1703
        %1736 = vst.msk [vmem:[#allocation4 + $0x78] sm:$0xff] %vm1432, %v1704
        %1737 = vst.msk [vmem:[#allocation4 + $0x80] sm:$0xff] %vm1432, %v1705
        %1738 = vst.msk [vmem:[#allocation4 + $0x88] sm:$0xff] %vm1432, %v1706
        %1739 = vst.msk [vmem:[#allocation4 + $0x90] sm:$0xff] %vm1432, %v1707
        %1740 = vst.msk [vmem:[#allocation4 + $0x98] sm:$0xff] %vm1432, %v1708
        %1741 = vst.msk [vmem:[#allocation4 + $0xa0] sm:$0xff] %vm1432, %v1709
        %1742 = vst.msk [vmem:[#allocation4 + $0xa8] sm:$0xff] %vm1432, %v1710
        %1743 = vst.msk [vmem:[#allocation4 + $0xb0] sm:$0xff] %vm1432, %v1711
        %1744 = vst.msk [vmem:[#allocation4 + $0xb8] sm:$0xff] %vm1432, %v1712
        %1745 = vst.msk [vmem:[#allocation4 + $0xc0] sm:$0xff] %vm1432, %v1713
        %1746 = vst.msk [vmem:[#allocation4 + $0xc8] sm:$0xff] %vm1432, %v1714
        %1747 = vst.msk [vmem:[#allocation4 + $0xd0] sm:$0xff] %vm1432, %v1715
        %1748 = vst.msk [vmem:[#allocation4 + $0xd8] sm:$0xff] %vm1432, %v1716
        %1749 = vst.msk [vmem:[#allocation4 + $0xe0] sm:$0xff] %vm1432, %v1717
        %1750 = vst.msk [vmem:[#allocation4 + $0xe8] sm:$0xff] %vm1432, %v1718
        %1751 = vst.msk [vmem:[#allocation4 + $0xf0] sm:$0xff] %vm1432, %v1719
        %1752 = vst.msk [vmem:[#allocation4 + $0xf8] sm:$0xff] %vm1432, %v1720
      $region36: #{tpu_custom_call.1} parent=27 // pred_fallthru
        _
      %p1753 = pneg %p621
      // Predicated region
      $region37: #{tpu_custom_call.1} parent=27 // pred_check
        _
      $region38: #{tpu_custom_call.1} parent=27 // pred_check_branch
        %1755 = sbr.rel (%p621) target = $region40
      $region39: #{tpu_custom_call.1} parent=27 // pred_region
        %v1756 = vld [vmem:[#allocation2] sm:$0xff]
        %v1757 = vld [vmem:[#allocation2 + $0x8] sm:$0xff]
        %v1758 = vld [vmem:[#allocation2 + $0x10] sm:$0xff]
        %v1759 = vld [vmem:[#allocation2 + $0x18] sm:$0xff]
        %v1760 = vld [vmem:[#allocation2 + $0x20] sm:$0xff]
        %v1761 = vld [vmem:[#allocation2 + $0x28] sm:$0xff]
        %v1762 = vld [vmem:[#allocation2 + $0x30] sm:$0xff]
        %v1763 = vld [vmem:[#allocation2 + $0x38] sm:$0xff]
        %v1764 = vld [vmem:[#allocation2 + $0x40] sm:$0xff]
        %v1765 = vld [vmem:[#allocation2 + $0x48] sm:$0xff]
        %v1766 = vld [vmem:[#allocation2 + $0x50] sm:$0xff]
        %v1767 = vld [vmem:[#allocation2 + $0x58] sm:$0xff]
        %v1768 = vld [vmem:[#allocation2 + $0x60] sm:$0xff]
        %v1769 = vld [vmem:[#allocation2 + $0x68] sm:$0xff]
        %v1770 = vld [vmem:[#allocation2 + $0x70] sm:$0xff]
        %v1771 = vld [vmem:[#allocation2 + $0x78] sm:$0xff]
        %v1772 = vld [vmem:[#allocation2 + $0x80] sm:$0xff]
        %v1773 = vld [vmem:[#allocation2 + $0x88] sm:$0xff]
        %v1774 = vld [vmem:[#allocation2 + $0x90] sm:$0xff]
        %v1775 = vld [vmem:[#allocation2 + $0x98] sm:$0xff]
        %v1776 = vld [vmem:[#allocation2 + $0xa0] sm:$0xff]
        %v1777 = vld [vmem:[#allocation2 + $0xa8] sm:$0xff]
        %v1778 = vld [vmem:[#allocation2 + $0xb0] sm:$0xff]
        %v1779 = vld [vmem:[#allocation2 + $0xb8] sm:$0xff]
        %v1780 = vld [vmem:[#allocation2 + $0xc0] sm:$0xff]
        %v1781 = vld [vmem:[#allocation2 + $0xc8] sm:$0xff]
        %v1782 = vld [vmem:[#allocation2 + $0xd0] sm:$0xff]
        %v1783 = vld [vmem:[#allocation2 + $0xd8] sm:$0xff]
        %v1784 = vld [vmem:[#allocation2 + $0xe0] sm:$0xff]
        %v1785 = vld [vmem:[#allocation2 + $0xe8] sm:$0xff]
        %v1786 = vld [vmem:[#allocation2 + $0xf0] sm:$0xff]
        %v1787 = vld [vmem:[#allocation2 + $0xf8] sm:$0xff]
        %1788 = vmax.xlane.f32.xlu0 %v533
        %v1789 = vpop.xlane.xlu0 %1788
        %1790 = vmax.xlane.f32.xlu0 %v535
        %v1791 = vpop.xlane.xlu0 %1790
        %1792 = vmax.xlane.f32.xlu0 %v538
        %v1793 = vpop.xlane.xlu0 %1792
        %1794 = vmax.xlane.f32.xlu0 %v540
        %v1795 = vpop.xlane.xlu0 %1794
        %1796 = vmax.xlane.f32.xlu0 %v543
        %v1797 = vpop.xlane.xlu0 %1796
        %1798 = vmax.xlane.f32.xlu0 %v545
        %v1799 = vpop.xlane.xlu0 %1798
        %1800 = vmax.xlane.f32.xlu0 %v548
        %v1801 = vpop.xlane.xlu0 %1800
        %1802 = vmax.xlane.f32.xlu0 %v550
        %v1803 = vpop.xlane.xlu0 %1802
        %1804 = vmax.xlane.f32.xlu0 %v553
        %v1805 = vpop.xlane.xlu0 %1804
        %1806 = vmax.xlane.f32.xlu0 %v555
        %v1807 = vpop.xlane.xlu0 %1806
        %1808 = vmax.xlane.f32.xlu0 %v558
        %v1809 = vpop.xlane.xlu0 %1808
        %1810 = vmax.xlane.f32.xlu0 %v560
        %v1811 = vpop.xlane.xlu0 %1810
        %1812 = vmax.xlane.f32.xlu0 %v563
        %v1813 = vpop.xlane.xlu0 %1812
        %1814 = vmax.xlane.f32.xlu0 %v565
        %v1815 = vpop.xlane.xlu0 %1814
        %1816 = vmax.xlane.f32.xlu0 %v568
        %v1817 = vpop.xlane.xlu0 %1816
        %1818 = vmax.xlane.f32.xlu0 %v570
        %v1819 = vpop.xlane.xlu0 %1818
        %1820 = vmax.xlane.f32.xlu0 %v573
        %v1821 = vpop.xlane.xlu0 %1820
        %1822 = vmax.xlane.f32.xlu0 %v575
        %v1823 = vpop.xlane.xlu0 %1822
        %1824 = vmax.xlane.f32.xlu0 %v578
        %v1825 = vpop.xlane.xlu0 %1824
        %1826 = vmax.xlane.f32.xlu0 %v580
        %v1827 = vpop.xlane.xlu0 %1826
        %1828 = vmax.xlane.f32.xlu0 %v583
        %v1829 = vpop.xlane.xlu0 %1828
        %1830 = vmax.xlane.f32.xlu0 %v585
        %v1831 = vpop.xlane.xlu0 %1830
        %1832 = vmax.xlane.f32.xlu0 %v588
        %v1833 = vpop.xlane.xlu0 %1832
        %1834 = vmax.xlane.f32.xlu0 %v590
        %v1835 = vpop.xlane.xlu0 %1834
        %1836 = vmax.xlane.f32.xlu0 %v593
        %v1837 = vpop.xlane.xlu0 %1836
        %1838 = vmax.xlane.f32.xlu0 %v595
        %v1839 = vpop.xlane.xlu0 %1838
        %1840 = vmax.xlane.f32.xlu0 %v598
        %v1841 = vpop.xlane.xlu0 %1840
        %1842 = vmax.xlane.f32.xlu0 %v600
        %v1843 = vpop.xlane.xlu0 %1842
        %1844 = vmax.xlane.f32.xlu0 %v603
        %v1845 = vpop.xlane.xlu0 %1844
        %1846 = vmax.xlane.f32.xlu0 %v605
        %v1847 = vpop.xlane.xlu0 %1846
        %1848 = vmax.xlane.f32.xlu0 %v608
        %v1849 = vpop.xlane.xlu0 %1848
        %1850 = vmax.xlane.f32.xlu0 %v610
        %v1851 = vpop.xlane.xlu0 %1850
        %v1852 = vmax.f32 %v1756, %v1789
        %v1853 = vmax.f32 %v1757, %v1791
        %v1854 = vmax.f32 %v1758, %v1793
        %v1855 = vmax.f32 %v1759, %v1795
        %v1856 = vmax.f32 %v1760, %v1797
        %v1857 = vmax.f32 %v1761, %v1799
        %v1858 = vmax.f32 %v1762, %v1801
        %v1859 = vmax.f32 %v1763, %v1803
        %v1860 = vmax.f32 %v1764, %v1805
        %v1861 = vmax.f32 %v1765, %v1807
        %v1862 = vmax.f32 %v1766, %v1809
        %v1863 = vmax.f32 %v1767, %v1811
        %v1864 = vmax.f32 %v1768, %v1813
        %v1865 = vmax.f32 %v1769, %v1815
        %v1866 = vmax.f32 %v1770, %v1817
        %v1867 = vmax.f32 %v1771, %v1819
        %v1868 = vmax.f32 %v1772, %v1821
        %v1869 = vmax.f32 %v1773, %v1823
        %v1870 = vmax.f32 %v1774, %v1825
        %v1871 = vmax.f32 %v1775, %v1827
        %v1872 = vmax.f32 %v1776, %v1829
        %v1873 = vmax.f32 %v1777, %v1831
        %v1874 = vmax.f32 %v1778, %v1833
        %v1875 = vmax.f32 %v1779, %v1835
        %v1876 = vmax.f32 %v1780, %v1837
        %v1877 = vmax.f32 %v1781, %v1839
        %v1878 = vmax.f32 %v1782, %v1841
        %v1879 = vmax.f32 %v1783, %v1843
        %v1880 = vmax.f32 %v1784, %v1845
        %v1881 = vmax.f32 %v1785, %v1847
        %v1882 = vmax.f32 %v1786, %v1849
        %v1883 = vmax.f32 %v1787, %v1851
        %v1884 = vsub.f32 %v1756, %v1852
        %v1885 = vsub.f32 %v1757, %v1853
        %v1886 = vsub.f32 %v1758, %v1854
        %v1887 = vsub.f32 %v1759, %v1855
        %v1888 = vsub.f32 %v1760, %v1856
        %v1889 = vsub.f32 %v1761, %v1857
        %v1890 = vsub.f32 %v1762, %v1858
        %v1891 = vsub.f32 %v1763, %v1859
        %v1892 = vsub.f32 %v1764, %v1860
        %v1893 = vsub.f32 %v1765, %v1861
        %v1894 = vsub.f32 %v1766, %v1862
        %v1895 = vsub.f32 %v1767, %v1863
        %v1896 = vsub.f32 %v1768, %v1864
        %v1897 = vsub.f32 %v1769, %v1865
        %v1898 = vsub.f32 %v1770, %v1866
        %v1899 = vsub.f32 %v1771, %v1867
        %v1900 = vsub.f32 %v1772, %v1868
        %v1901 = vsub.f32 %v1773, %v1869
        %v1902 = vsub.f32 %v1774, %v1870
        %v1903 = vsub.f32 %v1775, %v1871
        %v1904 = vsub.f32 %v1776, %v1872
        %v1905 = vsub.f32 %v1777, %v1873
        %v1906 = vsub.f32 %v1778, %v1874
        %v1907 = vsub.f32 %v1779, %v1875
        %v1908 = vsub.f32 %v1780, %v1876
        %v1909 = vsub.f32 %v1781, %v1877
        %v1910 = vsub.f32 %v1782, %v1878
        %v1911 = vsub.f32 %v1783, %v1879
        %v1912 = vsub.f32 %v1784, %v1880
        %v1913 = vsub.f32 %v1785, %v1881
        %v1914 = vsub.f32 %v1786, %v1882
        %v1915 = vsub.f32 %v1787, %v1883
        %v1916 = vmul.f32 %v1884, 1.442695
        %v1917 = vpow.pop %v1916
        %v1918 = vmul.f32 %v1885, 1.442695
        %v1919 = vpow.pop %v1918
        %v1920 = vmul.f32 %v1886, 1.442695
        %v1921 = vpow.pop %v1920
        %v1922 = vmul.f32 %v1887, 1.442695
        %v1923 = vpow.pop %v1922
        %v1924 = vmul.f32 %v1888, 1.442695
        %v1925 = vpow.pop %v1924
        %v1926 = vmul.f32 %v1889, 1.442695
        %v1927 = vpow.pop %v1926
        %v1928 = vmul.f32 %v1890, 1.442695
        %v1929 = vpow.pop %v1928
        %v1930 = vmul.f32 %v1891, 1.442695
        %v1931 = vpow.pop %v1930
        %v1932 = vmul.f32 %v1892, 1.442695
        %v1933 = vpow.pop %v1932
        %v1934 = vmul.f32 %v1893, 1.442695
        %v1935 = vpow.pop %v1934
        %v1936 = vmul.f32 %v1894, 1.442695
        %v1937 = vpow.pop %v1936
        %v1938 = vmul.f32 %v1895, 1.442695
        %v1939 = vpow.pop %v1938
        %v1940 = vmul.f32 %v1896, 1.442695
        %v1941 = vpow.pop %v1940
        %v1942 = vmul.f32 %v1897, 1.442695
        %v1943 = vpow.pop %v1942
        %v1944 = vmul.f32 %v1898, 1.442695
        %v1945 = vpow.pop %v1944
        %v1946 = vmul.f32 %v1899, 1.442695
        %v1947 = vpow.pop %v1946
        %v1948 = vmul.f32 %v1900, 1.442695
        %v1949 = vpow.pop %v1948
        %v1950 = vmul.f32 %v1901, 1.442695
        %v1951 = vpow.pop %v1950
        %v1952 = vmul.f32 %v1902, 1.442695
        %v1953 = vpow.pop %v1952
        %v1954 = vmul.f32 %v1903, 1.442695
        %v1955 = vpow.pop %v1954
        %v1956 = vmul.f32 %v1904, 1.442695
        %v1957 = vpow.pop %v1956
        %v1958 = vmul.f32 %v1905, 1.442695
        %v1959 = vpow.pop %v1958
        %v1960 = vmul.f32 %v1906, 1.442695
        %v1961 = vpow.pop %v1960
        %v1962 = vmul.f32 %v1907, 1.442695
        %v1963 = vpow.pop %v1962
        %v1964 = vmul.f32 %v1908, 1.442695
        %v1965 = vpow.pop %v1964
        %v1966 = vmul.f32 %v1909, 1.442695
        %v1967 = vpow.pop %v1966
        %v1968 = vmul.f32 %v1910, 1.442695
        %v1969 = vpow.pop %v1968
        %v1970 = vmul.f32 %v1911, 1.442695
        %v1971 = vpow.pop %v1970
        %v1972 = vmul.f32 %v1912, 1.442695
        %v1973 = vpow.pop %v1972
        %v1974 = vmul.f32 %v1913, 1.442695
        %v1975 = vpow.pop %v1974
        %v1976 = vmul.f32 %v1914, 1.442695
        %v1977 = vpow.pop %v1976
        %v1978 = vmul.f32 %v1915, 1.442695
        %v1979 = vpow.pop %v1978
        %v1980 = vld [vmem:[#allocation3] sm:$0xff]
        %v1981 = vld [vmem:[#allocation3 + $0x8] sm:$0xff]
        %v1982 = vld [vmem:[#allocation3 + $0x10] sm:$0xff]
        %v1983 = vld [vmem:[#allocation3 + $0x18] sm:$0xff]
        %v1984 = vld [vmem:[#allocation3 + $0x20] sm:$0xff]
        %v1985 = vld [vmem:[#allocation3 + $0x28] sm:$0xff]
        %v1986 = vld [vmem:[#allocation3 + $0x30] sm:$0xff]
        %v1987 = vld [vmem:[#allocation3 + $0x38] sm:$0xff]
        %v1988 = vld [vmem:[#allocation3 + $0x40] sm:$0xff]
        %v1989 = vld [vmem:[#allocation3 + $0x48] sm:$0xff]
        %v1990 = vld [vmem:[#allocation3 + $0x50] sm:$0xff]
        %v1991 = vld [vmem:[#allocation3 + $0x58] sm:$0xff]
        %v1992 = vld [vmem:[#allocation3 + $0x60] sm:$0xff]
        %v1993 = vld [vmem:[#allocation3 + $0x68] sm:$0xff]
        %v1994 = vld [vmem:[#allocation3 + $0x70] sm:$0xff]
        %v1995 = vld [vmem:[#allocation3 + $0x78] sm:$0xff]
        %v1996 = vld [vmem:[#allocation3 + $0x80] sm:$0xff]
        %v1997 = vld [vmem:[#allocation3 + $0x88] sm:$0xff]
        %v1998 = vld [vmem:[#allocation3 + $0x90] sm:$0xff]
        %v1999 = vld [vmem:[#allocation3 + $0x98] sm:$0xff]
        %v2000 = vld [vmem:[#allocation3 + $0xa0] sm:$0xff]
        %v2001 = vld [vmem:[#allocation3 + $0xa8] sm:$0xff]
        %v2002 = vld [vmem:[#allocation3 + $0xb0] sm:$0xff]
        %v2003 = vld [vmem:[#allocation3 + $0xb8] sm:$0xff]
        %v2004 = vld [vmem:[#allocation3 + $0xc0] sm:$0xff]
        %v2005 = vld [vmem:[#allocation3 + $0xc8] sm:$0xff]
        %v2006 = vld [vmem:[#allocation3 + $0xd0] sm:$0xff]
        %v2007 = vld [vmem:[#allocation3 + $0xd8] sm:$0xff]
        %v2008 = vld [vmem:[#allocation3 + $0xe0] sm:$0xff]
        %v2009 = vld [vmem:[#allocation3 + $0xe8] sm:$0xff]
        %v2010 = vld [vmem:[#allocation3 + $0xf0] sm:$0xff]
        %v2011 = vld [vmem:[#allocation3 + $0xf8] sm:$0xff]
        %v2012 = vmul.f32 %v1917, %v1980
        %v2013 = vmul.f32 %v1919, %v1981
        %v2014 = vmul.f32 %v1921, %v1982
        %v2015 = vmul.f32 %v1923, %v1983
        %v2016 = vmul.f32 %v1925, %v1984
        %v2017 = vmul.f32 %v1927, %v1985
        %v2018 = vmul.f32 %v1929, %v1986
        %v2019 = vmul.f32 %v1931, %v1987
        %v2020 = vmul.f32 %v1933, %v1988
        %v2021 = vmul.f32 %v1935, %v1989
        %v2022 = vmul.f32 %v1937, %v1990
        %v2023 = vmul.f32 %v1939, %v1991
        %v2024 = vmul.f32 %v1941, %v1992
        %v2025 = vmul.f32 %v1943, %v1993
        %v2026 = vmul.f32 %v1945, %v1994
        %v2027 = vmul.f32 %v1947, %v1995
        %v2028 = vmul.f32 %v1949, %v1996
        %v2029 = vmul.f32 %v1951, %v1997
        %v2030 = vmul.f32 %v1953, %v1998
        %v2031 = vmul.f32 %v1955, %v1999
        %v2032 = vmul.f32 %v1957, %v2000
        %v2033 = vmul.f32 %v1959, %v2001
        %v2034 = vmul.f32 %v1961, %v2002
        %v2035 = vmul.f32 %v1963, %v2003
        %v2036 = vmul.f32 %v1965, %v2004
        %v2037 = vmul.f32 %v1967, %v2005
        %v2038 = vmul.f32 %v1969, %v2006
        %v2039 = vmul.f32 %v1971, %v2007
        %v2040 = vmul.f32 %v1973, %v2008
        %v2041 = vmul.f32 %v1975, %v2009
        %v2042 = vmul.f32 %v1977, %v2010
        %v2043 = vmul.f32 %v1979, %v2011
        %2045 = vset.pattern.permute.xlu0 0
        %2046 = vperm.xlu0 %2045, %v1852
        %v2047 = vpop.permute.xlu0 %2046
        %2050 = vset.pattern.permute.xlu0 0
        %2051 = vperm.xlu0 %2050, %v1853
        %v2052 = vpop.permute.xlu0 %2051
        %2055 = vset.pattern.permute.xlu0 0
        %2056 = vperm.xlu0 %2055, %v1854
        %v2057 = vpop.permute.xlu0 %2056
        %2060 = vset.pattern.permute.xlu0 0
        %2061 = vperm.xlu0 %2060, %v1855
        %v2062 = vpop.permute.xlu0 %2061
        %2065 = vset.pattern.permute.xlu0 0
        %2066 = vperm.xlu0 %2065, %v1856
        %v2067 = vpop.permute.xlu0 %2066
        %2070 = vset.pattern.permute.xlu0 0
        %2071 = vperm.xlu0 %2070, %v1857
        %v2072 = vpop.permute.xlu0 %2071
        %2075 = vset.pattern.permute.xlu0 0
        %2076 = vperm.xlu0 %2075, %v1858
        %v2077 = vpop.permute.xlu0 %2076
        %2080 = vset.pattern.permute.xlu0 0
        %2081 = vperm.xlu0 %2080, %v1859
        %v2082 = vpop.permute.xlu0 %2081
        %2085 = vset.pattern.permute.xlu0 0
        %2086 = vperm.xlu0 %2085, %v1860
        %v2087 = vpop.permute.xlu0 %2086
        %2090 = vset.pattern.permute.xlu0 0
        %2091 = vperm.xlu0 %2090, %v1861
        %v2092 = vpop.permute.xlu0 %2091
        %2095 = vset.pattern.permute.xlu0 0
        %2096 = vperm.xlu0 %2095, %v1862
        %v2097 = vpop.permute.xlu0 %2096
        %2100 = vset.pattern.permute.xlu0 0
        %2101 = vperm.xlu0 %2100, %v1863
        %v2102 = vpop.permute.xlu0 %2101
        %2105 = vset.pattern.permute.xlu0 0
        %2106 = vperm.xlu0 %2105, %v1864
        %v2107 = vpop.permute.xlu0 %2106
        %2110 = vset.pattern.permute.xlu0 0
        %2111 = vperm.xlu0 %2110, %v1865
        %v2112 = vpop.permute.xlu0 %2111
        %2115 = vset.pattern.permute.xlu0 0
        %2116 = vperm.xlu0 %2115, %v1866
        %v2117 = vpop.permute.xlu0 %2116
        %2120 = vset.pattern.permute.xlu0 0
        %2121 = vperm.xlu0 %2120, %v1867
        %v2122 = vpop.permute.xlu0 %2121
        %2125 = vset.pattern.permute.xlu0 0
        %2126 = vperm.xlu0 %2125, %v1868
        %v2127 = vpop.permute.xlu0 %2126
        %2130 = vset.pattern.permute.xlu0 0
        %2131 = vperm.xlu0 %2130, %v1869
        %v2132 = vpop.permute.xlu0 %2131
        %2135 = vset.pattern.permute.xlu0 0
        %2136 = vperm.xlu0 %2135, %v1870
        %v2137 = vpop.permute.xlu0 %2136
        %2140 = vset.pattern.permute.xlu0 0
        %2141 = vperm.xlu0 %2140, %v1871
        %v2142 = vpop.permute.xlu0 %2141
        %2145 = vset.pattern.permute.xlu0 0
        %2146 = vperm.xlu0 %2145, %v1872
        %v2147 = vpop.permute.xlu0 %2146
        %2150 = vset.pattern.permute.xlu0 0
        %2151 = vperm.xlu0 %2150, %v1873
        %v2152 = vpop.permute.xlu0 %2151
        %2155 = vset.pattern.permute.xlu0 0
        %2156 = vperm.xlu0 %2155, %v1874
        %v2157 = vpop.permute.xlu0 %2156
        %2160 = vset.pattern.permute.xlu0 0
        %2161 = vperm.xlu0 %2160, %v1875
        %v2162 = vpop.permute.xlu0 %2161
        %2165 = vset.pattern.permute.xlu0 0
        %2166 = vperm.xlu0 %2165, %v1876
        %v2167 = vpop.permute.xlu0 %2166
        %2170 = vset.pattern.permute.xlu0 0
        %2171 = vperm.xlu0 %2170, %v1877
        %v2172 = vpop.permute.xlu0 %2171
        %2175 = vset.pattern.permute.xlu0 0
        %2176 = vperm.xlu0 %2175, %v1878
        %v2177 = vpop.permute.xlu0 %2176
        %2180 = vset.pattern.permute.xlu0 0
        %2181 = vperm.xlu0 %2180, %v1879
        %v2182 = vpop.permute.xlu0 %2181
        %2185 = vset.pattern.permute.xlu0 0
        %2186 = vperm.xlu0 %2185, %v1880
        %v2187 = vpop.permute.xlu0 %2186
        %2190 = vset.pattern.permute.xlu0 0
        %2191 = vperm.xlu0 %2190, %v1881
        %v2192 = vpop.permute.xlu0 %2191
        %2195 = vset.pattern.permute.xlu0 0
        %2196 = vperm.xlu0 %2195, %v1882
        %v2197 = vpop.permute.xlu0 %2196
        %2200 = vset.pattern.permute.xlu0 0
        %2201 = vperm.xlu0 %2200, %v1883
        %v2202 = vpop.permute.xlu0 %2201
        %v2204 = vsub.f32 %v533, %v2047
        %v2205 = vsub.f32 %v535, %v2052
        %v2206 = vsub.f32 %v538, %v2057
        %v2207 = vsub.f32 %v540, %v2062
        %v2208 = vsub.f32 %v543, %v2067
        %v2209 = vsub.f32 %v545, %v2072
        %v2210 = vsub.f32 %v548, %v2077
        %v2211 = vsub.f32 %v550, %v2082
        %v2212 = vsub.f32 %v553, %v2087
        %v2213 = vsub.f32 %v555, %v2092
        %v2214 = vsub.f32 %v558, %v2097
        %v2215 = vsub.f32 %v560, %v2102
        %v2216 = vsub.f32 %v563, %v2107
        %v2217 = vsub.f32 %v565, %v2112
        %v2218 = vsub.f32 %v568, %v2117
        %v2219 = vsub.f32 %v570, %v2122
        %v2220 = vsub.f32 %v573, %v2127
        %v2221 = vsub.f32 %v575, %v2132
        %v2222 = vsub.f32 %v578, %v2137
        %v2223 = vsub.f32 %v580, %v2142
        %v2224 = vsub.f32 %v583, %v2147
        %v2225 = vsub.f32 %v585, %v2152
        %v2226 = vsub.f32 %v588, %v2157
        %v2227 = vsub.f32 %v590, %v2162
        %v2228 = vsub.f32 %v593, %v2167
        %v2229 = vsub.f32 %v595, %v2172
        %v2230 = vsub.f32 %v598, %v2177
        %v2231 = vsub.f32 %v600, %v2182
        %v2232 = vsub.f32 %v603, %v2187
        %v2233 = vsub.f32 %v605, %v2192
        %v2234 = vsub.f32 %v608, %v2197
        %v2235 = vsub.f32 %v610, %v2202
        %v2236 = vmul.f32 %v2204, 1.442695
        %v2237 = vpow.pop %v2236
        %v2238 = vmul.f32 %v2205, 1.442695
        %v2239 = vpow.pop %v2238
        %v2240 = vmul.f32 %v2206, 1.442695
        %v2241 = vpow.pop %v2240
        %v2242 = vmul.f32 %v2207, 1.442695
        %v2243 = vpow.pop %v2242
        %v2244 = vmul.f32 %v2208, 1.442695
        %v2245 = vpow.pop %v2244
        %v2246 = vmul.f32 %v2209, 1.442695
        %v2247 = vpow.pop %v2246
        %v2248 = vmul.f32 %v2210, 1.442695
        %v2249 = vpow.pop %v2248
        %v2250 = vmul.f32 %v2211, 1.442695
        %v2251 = vpow.pop %v2250
        %v2252 = vmul.f32 %v2212, 1.442695
        %v2253 = vpow.pop %v2252
        %v2254 = vmul.f32 %v2213, 1.442695
        %v2255 = vpow.pop %v2254
        %v2256 = vmul.f32 %v2214, 1.442695
        %v2257 = vpow.pop %v2256
        %v2258 = vmul.f32 %v2215, 1.442695
        %v2259 = vpow.pop %v2258
        %v2260 = vmul.f32 %v2216, 1.442695
        %v2261 = vpow.pop %v2260
        %v2262 = vmul.f32 %v2217, 1.442695
        %v2263 = vpow.pop %v2262
        %v2264 = vmul.f32 %v2218, 1.442695
        %v2265 = vpow.pop %v2264
        %v2266 = vmul.f32 %v2219, 1.442695
        %v2267 = vpow.pop %v2266
        %v2268 = vmul.f32 %v2220, 1.442695
        %v2269 = vpow.pop %v2268
        %v2270 = vmul.f32 %v2221, 1.442695
        %v2271 = vpow.pop %v2270
        %v2272 = vmul.f32 %v2222, 1.442695
        %v2273 = vpow.pop %v2272
        %v2274 = vmul.f32 %v2223, 1.442695
        %v2275 = vpow.pop %v2274
        %v2276 = vmul.f32 %v2224, 1.442695
        %v2277 = vpow.pop %v2276
        %v2278 = vmul.f32 %v2225, 1.442695
        %v2279 = vpow.pop %v2278
        %v2280 = vmul.f32 %v2226, 1.442695
        %v2281 = vpow.pop %v2280
        %v2282 = vmul.f32 %v2227, 1.442695
        %v2283 = vpow.pop %v2282
        %v2284 = vmul.f32 %v2228, 1.442695
        %v2285 = vpow.pop %v2284
        %v2286 = vmul.f32 %v2229, 1.442695
        %v2287 = vpow.pop %v2286
        %v2288 = vmul.f32 %v2230, 1.442695
        %v2289 = vpow.pop %v2288
        %v2290 = vmul.f32 %v2231, 1.442695
        %v2291 = vpow.pop %v2290
        %v2292 = vmul.f32 %v2232, 1.442695
        %v2293 = vpow.pop %v2292
        %v2294 = vmul.f32 %v2233, 1.442695
        %v2295 = vpow.pop %v2294
        %v2296 = vmul.f32 %v2234, 1.442695
        %v2297 = vpow.pop %v2296
        %v2298 = vmul.f32 %v2235, 1.442695
        %v2299 = vpow.pop %v2298
        %2300 = vadd.xlane.f32.xlu0 %v2237
        %v2301 = vpop.xlane.xlu0 %2300
        %2302 = vadd.xlane.f32.xlu0 %v2239
        %v2303 = vpop.xlane.xlu0 %2302
        %2304 = vadd.xlane.f32.xlu0 %v2241
        %v2305 = vpop.xlane.xlu0 %2304
        %2306 = vadd.xlane.f32.xlu0 %v2243
        %v2307 = vpop.xlane.xlu0 %2306
        %2308 = vadd.xlane.f32.xlu0 %v2245
        %v2309 = vpop.xlane.xlu0 %2308
        %2310 = vadd.xlane.f32.xlu0 %v2247
        %v2311 = vpop.xlane.xlu0 %2310
        %2312 = vadd.xlane.f32.xlu0 %v2249
        %v2313 = vpop.xlane.xlu0 %2312
        %2314 = vadd.xlane.f32.xlu0 %v2251
        %v2315 = vpop.xlane.xlu0 %2314
        %2316 = vadd.xlane.f32.xlu0 %v2253
        %v2317 = vpop.xlane.xlu0 %2316
        %2318 = vadd.xlane.f32.xlu0 %v2255
        %v2319 = vpop.xlane.xlu0 %2318
        %2320 = vadd.xlane.f32.xlu0 %v2257
        %v2321 = vpop.xlane.xlu0 %2320
        %2322 = vadd.xlane.f32.xlu0 %v2259
        %v2323 = vpop.xlane.xlu0 %2322
        %2324 = vadd.xlane.f32.xlu0 %v2261
        %v2325 = vpop.xlane.xlu0 %2324
        %2326 = vadd.xlane.f32.xlu0 %v2263
        %v2327 = vpop.xlane.xlu0 %2326
        %2328 = vadd.xlane.f32.xlu0 %v2265
        %v2329 = vpop.xlane.xlu0 %2328
        %2330 = vadd.xlane.f32.xlu0 %v2267
        %v2331 = vpop.xlane.xlu0 %2330
        %2332 = vadd.xlane.f32.xlu0 %v2269
        %v2333 = vpop.xlane.xlu0 %2332
        %2334 = vadd.xlane.f32.xlu0 %v2271
        %v2335 = vpop.xlane.xlu0 %2334
        %2336 = vadd.xlane.f32.xlu0 %v2273
        %v2337 = vpop.xlane.xlu0 %2336
        %2338 = vadd.xlane.f32.xlu0 %v2275
        %v2339 = vpop.xlane.xlu0 %2338
        %2340 = vadd.xlane.f32.xlu0 %v2277
        %v2341 = vpop.xlane.xlu0 %2340
        %2342 = vadd.xlane.f32.xlu0 %v2279
        %v2343 = vpop.xlane.xlu0 %2342
        %2344 = vadd.xlane.f32.xlu0 %v2281
        %v2345 = vpop.xlane.xlu0 %2344
        %2346 = vadd.xlane.f32.xlu0 %v2283
        %v2347 = vpop.xlane.xlu0 %2346
        %2348 = vadd.xlane.f32.xlu0 %v2285
        %v2349 = vpop.xlane.xlu0 %2348
        %2350 = vadd.xlane.f32.xlu0 %v2287
        %v2351 = vpop.xlane.xlu0 %2350
        %2352 = vadd.xlane.f32.xlu0 %v2289
        %v2353 = vpop.xlane.xlu0 %2352
        %2354 = vadd.xlane.f32.xlu0 %v2291
        %v2355 = vpop.xlane.xlu0 %2354
        %2356 = vadd.xlane.f32.xlu0 %v2293
        %v2357 = vpop.xlane.xlu0 %2356
        %2358 = vadd.xlane.f32.xlu0 %v2295
        %v2359 = vpop.xlane.xlu0 %2358
        %2360 = vadd.xlane.f32.xlu0 %v2297
        %v2361 = vpop.xlane.xlu0 %2360
        %2362 = vadd.xlane.f32.xlu0 %v2299
        %v2363 = vpop.xlane.xlu0 %2362
        %v2364 = vadd.f32 %v2012, %v2301
        %v2365 = vadd.f32 %v2013, %v2303
        %v2366 = vadd.f32 %v2014, %v2305
        %v2367 = vadd.f32 %v2015, %v2307
        %v2368 = vadd.f32 %v2016, %v2309
        %v2369 = vadd.f32 %v2017, %v2311
        %v2370 = vadd.f32 %v2018, %v2313
        %v2371 = vadd.f32 %v2019, %v2315
        %v2372 = vadd.f32 %v2020, %v2317
        %v2373 = vadd.f32 %v2021, %v2319
        %v2374 = vadd.f32 %v2022, %v2321
        %v2375 = vadd.f32 %v2023, %v2323
        %v2376 = vadd.f32 %v2024, %v2325
        %v2377 = vadd.f32 %v2025, %v2327
        %v2378 = vadd.f32 %v2026, %v2329
        %v2379 = vadd.f32 %v2027, %v2331
        %v2380 = vadd.f32 %v2028, %v2333
        %v2381 = vadd.f32 %v2029, %v2335
        %v2382 = vadd.f32 %v2030, %v2337
        %v2383 = vadd.f32 %v2031, %v2339
        %v2384 = vadd.f32 %v2032, %v2341
        %v2385 = vadd.f32 %v2033, %v2343
        %v2386 = vadd.f32 %v2034, %v2345
        %v2387 = vadd.f32 %v2035, %v2347
        %v2388 = vadd.f32 %v2036, %v2349
        %v2389 = vadd.f32 %v2037, %v2351
        %v2390 = vadd.f32 %v2038, %v2353
        %v2391 = vadd.f32 %v2039, %v2355
        %v2392 = vadd.f32 %v2040, %v2357
        %v2393 = vadd.f32 %v2041, %v2359
        %v2394 = vadd.f32 %v2042, %v2361
        %v2395 = vadd.f32 %v2043, %v2363
        %vm2396 = vcmask 7168
        %2397 = vst.msk [vmem:[#allocation3] sm:$0xff] %vm2396, %v2364
        %2398 = vst.msk [vmem:[#allocation3 + $0x8] sm:$0xff] %vm2396, %v2365
        %2399 = vst.msk [vmem:[#allocation3 + $0x10] sm:$0xff] %vm2396, %v2366
        %2400 = vst.msk [vmem:[#allocation3 + $0x18] sm:$0xff] %vm2396, %v2367
        %2401 = vst.msk [vmem:[#allocation3 + $0x20] sm:$0xff] %vm2396, %v2368
        %2402 = vst.msk [vmem:[#allocation3 + $0x28] sm:$0xff] %vm2396, %v2369
        %2403 = vst.msk [vmem:[#allocation3 + $0x30] sm:$0xff] %vm2396, %v2370
        %2404 = vst.msk [vmem:[#allocation3 + $0x38] sm:$0xff] %vm2396, %v2371
        %2405 = vst.msk [vmem:[#allocation3 + $0x40] sm:$0xff] %vm2396, %v2372
        %2406 = vst.msk [vmem:[#allocation3 + $0x48] sm:$0xff] %vm2396, %v2373
        %2407 = vst.msk [vmem:[#allocation3 + $0x50] sm:$0xff] %vm2396, %v2374
        %2408 = vst.msk [vmem:[#allocation3 + $0x58] sm:$0xff] %vm2396, %v2375
        %2409 = vst.msk [vmem:[#allocation3 + $0x60] sm:$0xff] %vm2396, %v2376
        %2410 = vst.msk [vmem:[#allocation3 + $0x68] sm:$0xff] %vm2396, %v2377
        %2411 = vst.msk [vmem:[#allocation3 + $0x70] sm:$0xff] %vm2396, %v2378
        %2412 = vst.msk [vmem:[#allocation3 + $0x78] sm:$0xff] %vm2396, %v2379
        %2413 = vst.msk [vmem:[#allocation3 + $0x80] sm:$0xff] %vm2396, %v2380
        %2414 = vst.msk [vmem:[#allocation3 + $0x88] sm:$0xff] %vm2396, %v2381
        %2415 = vst.msk [vmem:[#allocation3 + $0x90] sm:$0xff] %vm2396, %v2382
        %2416 = vst.msk [vmem:[#allocation3 + $0x98] sm:$0xff] %vm2396, %v2383
        %2417 = vst.msk [vmem:[#allocation3 + $0xa0] sm:$0xff] %vm2396, %v2384
        %2418 = vst.msk [vmem:[#allocation3 + $0xa8] sm:$0xff] %vm2396, %v2385
        %2419 = vst.msk [vmem:[#allocation3 + $0xb0] sm:$0xff] %vm2396, %v2386
        %2420 = vst.msk [vmem:[#allocation3 + $0xb8] sm:$0xff] %vm2396, %v2387
        %2421 = vst.msk [vmem:[#allocation3 + $0xc0] sm:$0xff] %vm2396, %v2388
        %2422 = vst.msk [vmem:[#allocation3 + $0xc8] sm:$0xff] %vm2396, %v2389
        %2423 = vst.msk [vmem:[#allocation3 + $0xd0] sm:$0xff] %vm2396, %v2390
        %2424 = vst.msk [vmem:[#allocation3 + $0xd8] sm:$0xff] %vm2396, %v2391
        %2425 = vst.msk [vmem:[#allocation3 + $0xe0] sm:$0xff] %vm2396, %v2392
        %2426 = vst.msk [vmem:[#allocation3 + $0xe8] sm:$0xff] %vm2396, %v2393
        %2427 = vst.msk [vmem:[#allocation3 + $0xf0] sm:$0xff] %vm2396, %v2394
        %2428 = vst.msk [vmem:[#allocation3 + $0xf8] sm:$0xff] %vm2396, %v2395
        %2429 = vst.msk [vmem:[#allocation2] sm:$0xff] %vm2396, %v1852
        %2430 = vst.msk [vmem:[#allocation2 + $0x8] sm:$0xff] %vm2396, %v1853
        %2431 = vst.msk [vmem:[#allocation2 + $0x10] sm:$0xff] %vm2396, %v1854
        %2432 = vst.msk [vmem:[#allocation2 + $0x18] sm:$0xff] %vm2396, %v1855
        %2433 = vst.msk [vmem:[#allocation2 + $0x20] sm:$0xff] %vm2396, %v1856
        %2434 = vst.msk [vmem:[#allocation2 + $0x28] sm:$0xff] %vm2396, %v1857
        %2435 = vst.msk [vmem:[#allocation2 + $0x30] sm:$0xff] %vm2396, %v1858
        %2436 = vst.msk [vmem:[#allocation2 + $0x38] sm:$0xff] %vm2396, %v1859
        %2437 = vst.msk [vmem:[#allocation2 + $0x40] sm:$0xff] %vm2396, %v1860
        %2438 = vst.msk [vmem:[#allocation2 + $0x48] sm:$0xff] %vm2396, %v1861
        %2439 = vst.msk [vmem:[#allocation2 + $0x50] sm:$0xff] %vm2396, %v1862
        %2440 = vst.msk [vmem:[#allocation2 + $0x58] sm:$0xff] %vm2396, %v1863
        %2441 = vst.msk [vmem:[#allocation2 + $0x60] sm:$0xff] %vm2396, %v1864
        %2442 = vst.msk [vmem:[#allocation2 + $0x68] sm:$0xff] %vm2396, %v1865
        %2443 = vst.msk [vmem:[#allocation2 + $0x70] sm:$0xff] %vm2396, %v1866
        %2444 = vst.msk [vmem:[#allocation2 + $0x78] sm:$0xff] %vm2396, %v1867
        %2445 = vst.msk [vmem:[#allocation2 + $0x80] sm:$0xff] %vm2396, %v1868
        %2446 = vst.msk [vmem:[#allocation2 + $0x88] sm:$0xff] %vm2396, %v1869
        %2447 = vst.msk [vmem:[#allocation2 + $0x90] sm:$0xff] %vm2396, %v1870
        %2448 = vst.msk [vmem:[#allocation2 + $0x98] sm:$0xff] %vm2396, %v1871
        %2449 = vst.msk [vmem:[#allocation2 + $0xa0] sm:$0xff] %vm2396, %v1872
        %2450 = vst.msk [vmem:[#allocation2 + $0xa8] sm:$0xff] %vm2396, %v1873
        %2451 = vst.msk [vmem:[#allocation2 + $0xb0] sm:$0xff] %vm2396, %v1874
        %2452 = vst.msk [vmem:[#allocation2 + $0xb8] sm:$0xff] %vm2396, %v1875
        %2453 = vst.msk [vmem:[#allocation2 + $0xc0] sm:$0xff] %vm2396, %v1876
        %2454 = vst.msk [vmem:[#allocation2 + $0xc8] sm:$0xff] %vm2396, %v1877
        %2455 = vst.msk [vmem:[#allocation2 + $0xd0] sm:$0xff] %vm2396, %v1878
        %2456 = vst.msk [vmem:[#allocation2 + $0xd8] sm:$0xff] %vm2396, %v1879
        %2457 = vst.msk [vmem:[#allocation2 + $0xe0] sm:$0xff] %vm2396, %v1880
        %2458 = vst.msk [vmem:[#allocation2 + $0xe8] sm:$0xff] %vm2396, %v1881
        %2459 = vst.msk [vmem:[#allocation2 + $0xf0] sm:$0xff] %vm2396, %v1882
        %2460 = vst.msk [vmem:[#allocation2 + $0xf8] sm:$0xff] %vm2396, %v1883
      $region40: #{tpu_custom_call.1} parent=27 // pred_fallthru
        _
      %p2461 = scmp.eq.s32.totalorder %s18, 1
      // Predicated region
      $region41: #{tpu_custom_call.1} parent=27 // pred_check
        %p2462 = pneg %p2461
      $region42: #{tpu_custom_call.1} parent=27 // pred_check_branch
        %2464 = sbr.rel (%p2462) target = $region44
      $region43: #{tpu_custom_call.1} parent=27 // pred_region
        %v2465 = vlaneseq
        %v2466 = vshrl.u32 %v2465, 7
        %v2467 = vadd.s32 %v2466, 8
        %v2468 = vadd.s32 %v2466, 16
        %v2469 = vadd.s32 %v2466, 24
        %v2470 = vadd.s32 %v2466, 32
        %v2471 = vadd.s32 %v2466, 40
        %v2472 = vadd.s32 %v2466, 48
        %v2473 = vadd.s32 %v2466, 56
        %v2474 = vadd.s32 %v2466, 64
        %v2475 = vadd.s32 %v2466, 72
        %v2476 = vadd.s32 %v2466, 80
        %v2477 = vadd.s32 %v2466, 88
        %v2478 = vadd.s32 %v2466, 96
        %v2479 = vadd.s32 %v2466, 104
        %v2480 = vadd.s32 %v2466, 112
        %v2481 = vadd.s32 %v2466, 120
        %v2482 = vadd.s32 %v2466, 128
        %v2483 = vadd.s32 %v2466, 136
        %v2484 = vadd.s32 %v2466, 144
        %v2485 = vadd.s32 %v2466, 152
        %v2486 = vadd.s32 %v2466, 160
        %v2487 = vadd.s32 %v2466, 168
        %v2488 = vadd.s32 %v2466, 176
        %v2489 = vadd.s32 %v2466, 184
        %v2490 = vadd.s32 %v2466, 192
        %v2491 = vadd.s32 %v2466, 200
        %v2492 = vadd.s32 %v2466, 208
        %v2493 = vadd.s32 %v2466, 216
        %v2494 = vadd.s32 %v2466, 224
        %v2495 = vadd.s32 %v2466, 232
        %v2496 = vadd.s32 %v2466, 240
        %v2497 = vadd.s32 %v2466, 248
        %v2498 = vstv %s612
        %v2499 = vadd.s32 %v2498, %v2466
        %v2500 = vadd.s32 %v2498, %v2467
        %v2501 = vadd.s32 %v2498, %v2468
        %v2502 = vadd.s32 %v2498, %v2469
        %v2503 = vadd.s32 %v2498, %v2470
        %v2504 = vadd.s32 %v2498, %v2471
        %v2505 = vadd.s32 %v2498, %v2472
        %v2506 = vadd.s32 %v2498, %v2473
        %v2507 = vadd.s32 %v2498, %v2474
        %v2508 = vadd.s32 %v2498, %v2475
        %v2509 = vadd.s32 %v2498, %v2476
        %v2510 = vadd.s32 %v2498, %v2477
        %v2511 = vadd.s32 %v2498, %v2478
        %v2512 = vadd.s32 %v2498, %v2479
        %v2513 = vadd.s32 %v2498, %v2480
        %v2514 = vadd.s32 %v2498, %v2481
        %v2515 = vadd.s32 %v2498, %v2482
        %v2516 = vadd.s32 %v2498, %v2483
        %v2517 = vadd.s32 %v2498, %v2484
        %v2518 = vadd.s32 %v2498, %v2485
        %v2519 = vadd.s32 %v2498, %v2486
        %v2520 = vadd.s32 %v2498, %v2487
        %v2521 = vadd.s32 %v2498, %v2488
        %v2522 = vadd.s32 %v2498, %v2489
        %v2523 = vadd.s32 %v2498, %v2490
        %v2524 = vadd.s32 %v2498, %v2491
        %v2525 = vadd.s32 %v2498, %v2492
        %v2526 = vadd.s32 %v2498, %v2493
        %v2527 = vadd.s32 %v2498, %v2494
        %v2528 = vadd.s32 %v2498, %v2495
        %v2529 = vadd.s32 %v2498, %v2496
        %v2530 = vadd.s32 %v2498, %v2497
        %v2531 = vxor.u32 %v2499, 1
        %v2532 = vxor.u32 %v2500, 1
        %v2533 = vxor.u32 %v2501, 1
        %v2534 = vxor.u32 %v2502, 1
        %v2535 = vxor.u32 %v2503, 1
        %v2536 = vxor.u32 %v2504, 1
        %v2537 = vxor.u32 %v2505, 1
        %v2538 = vxor.u32 %v2506, 1
        %v2539 = vxor.u32 %v2507, 1
        %v2540 = vxor.u32 %v2508, 1
        %v2541 = vxor.u32 %v2509, 1
        %v2542 = vxor.u32 %v2510, 1
        %v2543 = vxor.u32 %v2511, 1
        %v2544 = vxor.u32 %v2512, 1
        %v2545 = vxor.u32 %v2513, 1
        %v2546 = vxor.u32 %v2514, 1
        %v2547 = vxor.u32 %v2515, 1
        %v2548 = vxor.u32 %v2516, 1
        %v2549 = vxor.u32 %v2517, 1
        %v2550 = vxor.u32 %v2518, 1
        %v2551 = vxor.u32 %v2519, 1
        %v2552 = vxor.u32 %v2520, 1
        %v2553 = vxor.u32 %v2521, 1
        %v2554 = vxor.u32 %v2522, 1
        %v2555 = vxor.u32 %v2523, 1
        %v2556 = vxor.u32 %v2524, 1
        %v2557 = vxor.u32 %v2525, 1
        %v2558 = vxor.u32 %v2526, 1
        %v2559 = vxor.u32 %v2527, 1
        %v2560 = vxor.u32 %v2528, 1
        %v2561 = vxor.u32 %v2529, 1
        %v2562 = vxor.u32 %v2530, 1
        %v2563 = vld [vmem:[#allocation2] sm:$0xff]
        %v2564 = vld [vmem:[#allocation2 + $0x8] sm:$0xff]
        %v2565 = vld [vmem:[#allocation2 + $0x10] sm:$0xff]
        %v2566 = vld [vmem:[#allocation2 + $0x18] sm:$0xff]
        %v2567 = vld [vmem:[#allocation2 + $0x20] sm:$0xff]
        %v2568 = vld [vmem:[#allocation2 + $0x28] sm:$0xff]
        %v2569 = vld [vmem:[#allocation2 + $0x30] sm:$0xff]
        %v2570 = vld [vmem:[#allocation2 + $0x38] sm:$0xff]
        %v2571 = vld [vmem:[#allocation2 + $0x40] sm:$0xff]
        %v2572 = vld [vmem:[#allocation2 + $0x48] sm:$0xff]
        %v2573 = vld [vmem:[#allocation2 + $0x50] sm:$0xff]
        %v2574 = vld [vmem:[#allocation2 + $0x58] sm:$0xff]
        %v2575 = vld [vmem:[#allocation2 + $0x60] sm:$0xff]
        %v2576 = vld [vmem:[#allocation2 + $0x68] sm:$0xff]
        %v2577 = vld [vmem:[#allocation2 + $0x70] sm:$0xff]
        %v2578 = vld [vmem:[#allocation2 + $0x78] sm:$0xff]
        %v2579 = vld [vmem:[#allocation2 + $0x80] sm:$0xff]
        %v2580 = vld [vmem:[#allocation2 + $0x88] sm:$0xff]
        %v2581 = vld [vmem:[#allocation2 + $0x90] sm:$0xff]
        %v2582 = vld [vmem:[#allocation2 + $0x98] sm:$0xff]
        %v2583 = vld [vmem:[#allocation2 + $0xa0] sm:$0xff]
        %v2584 = vld [vmem:[#allocation2 + $0xa8] sm:$0xff]
        %v2585 = vld [vmem:[#allocation2 + $0xb0] sm:$0xff]
        %v2586 = vld [vmem:[#allocation2 + $0xb8] sm:$0xff]
        %v2587 = vld [vmem:[#allocation2 + $0xc0] sm:$0xff]
        %v2588 = vld [vmem:[#allocation2 + $0xc8] sm:$0xff]
        %v2589 = vld [vmem:[#allocation2 + $0xd0] sm:$0xff]
        %v2590 = vld [vmem:[#allocation2 + $0xd8] sm:$0xff]
        %v2591 = vld [vmem:[#allocation2 + $0xe0] sm:$0xff]
        %v2592 = vld [vmem:[#allocation2 + $0xe8] sm:$0xff]
        %v2593 = vld [vmem:[#allocation2 + $0xf0] sm:$0xff]
        %v2594 = vld [vmem:[#allocation2 + $0xf8] sm:$0xff]
        %v2595 = vld [vmem:[#allocation3] sm:$0xff]
        %v2596 = vld [vmem:[#allocation3 + $0x8] sm:$0xff]
        %v2597 = vld [vmem:[#allocation3 + $0x10] sm:$0xff]
        %v2598 = vld [vmem:[#allocation3 + $0x18] sm:$0xff]
        %v2599 = vld [vmem:[#allocation3 + $0x20] sm:$0xff]
        %v2600 = vld [vmem:[#allocation3 + $0x28] sm:$0xff]
        %v2601 = vld [vmem:[#allocation3 + $0x30] sm:$0xff]
        %v2602 = vld [vmem:[#allocation3 + $0x38] sm:$0xff]
        %v2603 = vld [vmem:[#allocation3 + $0x40] sm:$0xff]
        %v2604 = vld [vmem:[#allocation3 + $0x48] sm:$0xff]
        %v2605 = vld [vmem:[#allocation3 + $0x50] sm:$0xff]
        %v2606 = vld [vmem:[#allocation3 + $0x58] sm:$0xff]
        %v2607 = vld [vmem:[#allocation3 + $0x60] sm:$0xff]
        %v2608 = vld [vmem:[#allocation3 + $0x68] sm:$0xff]
        %v2609 = vld [vmem:[#allocation3 + $0x70] sm:$0xff]
        %v2610 = vld [vmem:[#allocation3 + $0x78] sm:$0xff]
        %v2611 = vld [vmem:[#allocation3 + $0x80] sm:$0xff]
        %v2612 = vld [vmem:[#allocation3 + $0x88] sm:$0xff]
        %v2613 = vld [vmem:[#allocation3 + $0x90] sm:$0xff]
        %v2614 = vld [vmem:[#allocation3 + $0x98] sm:$0xff]
        %v2615 = vld [vmem:[#allocation3 + $0xa0] sm:$0xff]
        %v2616 = vld [vmem:[#allocation3 + $0xa8] sm:$0xff]
        %v2617 = vld [vmem:[#allocation3 + $0xb0] sm:$0xff]
        %v2618 = vld [vmem:[#allocation3 + $0xb8] sm:$0xff]
        %v2619 = vld [vmem:[#allocation3 + $0xc0] sm:$0xff]
        %v2620 = vld [vmem:[#allocation3 + $0xc8] sm:$0xff]
        %v2621 = vld [vmem:[#allocation3 + $0xd0] sm:$0xff]
        %v2622 = vld [vmem:[#allocation3 + $0xd8] sm:$0xff]
        %v2623 = vld [vmem:[#allocation3 + $0xe0] sm:$0xff]
        %v2624 = vld [vmem:[#allocation3 + $0xe8] sm:$0xff]
        %v2625 = vld [vmem:[#allocation3 + $0xf0] sm:$0xff]
        %v2626 = vld [vmem:[#allocation3 + $0xf8] sm:$0xff]
        %v2627 = vlog2.pop %v2595
        %v2628 = vmul.f32 %v2627, 0.6931472
        %v2629 = vlog2.pop %v2596
        %v2630 = vmul.f32 %v2629, 0.6931472
        %v2631 = vlog2.pop %v2597
        %v2632 = vmul.f32 %v2631, 0.6931472
        %v2633 = vlog2.pop %v2598
        %v2634 = vmul.f32 %v2633, 0.6931472
        %v2635 = vlog2.pop %v2599
        %v2636 = vmul.f32 %v2635, 0.6931472
        %v2637 = vlog2.pop %v2600
        %v2638 = vmul.f32 %v2637, 0.6931472
        %v2639 = vlog2.pop %v2601
        %v2640 = vmul.f32 %v2639, 0.6931472
        %v2641 = vlog2.pop %v2602
        %v2642 = vmul.f32 %v2641, 0.6931472
        %v2643 = vlog2.pop %v2603
        %v2644 = vmul.f32 %v2643, 0.6931472
        %v2645 = vlog2.pop %v2604
        %v2646 = vmul.f32 %v2645, 0.6931472
        %v2647 = vlog2.pop %v2605
        %v2648 = vmul.f32 %v2647, 0.6931472
        %v2649 = vlog2.pop %v2606
        %v2650 = vmul.f32 %v2649, 0.6931472
        %v2651 = vlog2.pop %v2607
        %v2652 = vmul.f32 %v2651, 0.6931472
        %v2653 = vlog2.pop %v2608
        %v2654 = vmul.f32 %v2653, 0.6931472
        %v2655 = vlog2.pop %v2609
        %v2656 = vmul.f32 %v2655, 0.6931472
        %v2657 = vlog2.pop %v2610
        %v2658 = vmul.f32 %v2657, 0.6931472
        %v2659 = vlog2.pop %v2611
        %v2660 = vmul.f32 %v2659, 0.6931472
        %v2661 = vlog2.pop %v2612
        %v2662 = vmul.f32 %v2661, 0.6931472
        %v2663 = vlog2.pop %v2613
        %v2664 = vmul.f32 %v2663, 0.6931472
        %v2665 = vlog2.pop %v2614
        %v2666 = vmul.f32 %v2665, 0.6931472
        %v2667 = vlog2.pop %v2615
        %v2668 = vmul.f32 %v2667, 0.6931472
        %v2669 = vlog2.pop %v2616
        %v2670 = vmul.f32 %v2669, 0.6931472
        %v2671 = vlog2.pop %v2617
        %v2672 = vmul.f32 %v2671, 0.6931472
        %v2673 = vlog2.pop %v2618
        %v2674 = vmul.f32 %v2673, 0.6931472
        %v2675 = vlog2.pop %v2619
        %v2676 = vmul.f32 %v2675, 0.6931472
        %v2677 = vlog2.pop %v2620
        %v2678 = vmul.f32 %v2677, 0.6931472
        %v2679 = vlog2.pop %v2621
        %v2680 = vmul.f32 %v2679, 0.6931472
        %v2681 = vlog2.pop %v2622
        %v2682 = vmul.f32 %v2681, 0.6931472
        %v2683 = vlog2.pop %v2623
        %v2684 = vmul.f32 %v2683, 0.6931472
        %v2685 = vlog2.pop %v2624
        %v2686 = vmul.f32 %v2685, 0.6931472
        %v2687 = vlog2.pop %v2625
        %v2688 = vmul.f32 %v2687, 0.6931472
        %v2689 = vlog2.pop %v2626
        %v2690 = vmul.f32 %v2689, 0.6931472
        %v2691 = vadd.f32 %v2563, %v2628
        %v2692 = vadd.f32 %v2564, %v2630
        %v2693 = vadd.f32 %v2565, %v2632
        %v2694 = vadd.f32 %v2566, %v2634
        %v2695 = vadd.f32 %v2567, %v2636
        %v2696 = vadd.f32 %v2568, %v2638
        %v2697 = vadd.f32 %v2569, %v2640
        %v2698 = vadd.f32 %v2570, %v2642
        %v2699 = vadd.f32 %v2571, %v2644
        %v2700 = vadd.f32 %v2572, %v2646
        %v2701 = vadd.f32 %v2573, %v2648
        %v2702 = vadd.f32 %v2574, %v2650
        %v2703 = vadd.f32 %v2575, %v2652
        %v2704 = vadd.f32 %v2576, %v2654
        %v2705 = vadd.f32 %v2577, %v2656
        %v2706 = vadd.f32 %v2578, %v2658
        %v2707 = vadd.f32 %v2579, %v2660
        %v2708 = vadd.f32 %v2580, %v2662
        %v2709 = vadd.f32 %v2581, %v2664
        %v2710 = vadd.f32 %v2582, %v2666
        %v2711 = vadd.f32 %v2583, %v2668
        %v2712 = vadd.f32 %v2584, %v2670
        %v2713 = vadd.f32 %v2585, %v2672
        %v2714 = vadd.f32 %v2586, %v2674
        %v2715 = vadd.f32 %v2587, %v2676
        %v2716 = vadd.f32 %v2588, %v2678
        %v2717 = vadd.f32 %v2589, %v2680
        %v2718 = vadd.f32 %v2590, %v2682
        %v2719 = vadd.f32 %v2591, %v2684
        %v2720 = vadd.f32 %v2592, %v2686
        %v2721 = vadd.f32 %v2593, %v2688
        %v2722 = vadd.f32 %v2594, %v2690
        %v2723 = vld [vmem:[#allocation4] sm:$0xff]
        %v2724 = vld [vmem:[#allocation4 + $0x8] sm:$0xff]
        %v2725 = vld [vmem:[#allocation4 + $0x10] sm:$0xff]
        %v2726 = vld [vmem:[#allocation4 + $0x18] sm:$0xff]
        %v2727 = vld [vmem:[#allocation4 + $0x20] sm:$0xff]
        %v2728 = vld [vmem:[#allocation4 + $0x28] sm:$0xff]
        %v2729 = vld [vmem:[#allocation4 + $0x30] sm:$0xff]
        %v2730 = vld [vmem:[#allocation4 + $0x38] sm:$0xff]
        %v2731 = vld [vmem:[#allocation4 + $0x40] sm:$0xff]
        %v2732 = vld [vmem:[#allocation4 + $0x48] sm:$0xff]
        %v2733 = vld [vmem:[#allocation4 + $0x50] sm:$0xff]
        %v2734 = vld [vmem:[#allocation4 + $0x58] sm:$0xff]
        %v2735 = vld [vmem:[#allocation4 + $0x60] sm:$0xff]
        %v2736 = vld [vmem:[#allocation4 + $0x68] sm:$0xff]
        %v2737 = vld [vmem:[#allocation4 + $0x70] sm:$0xff]
        %v2738 = vld [vmem:[#allocation4 + $0x78] sm:$0xff]
        %v2739 = vld [vmem:[#allocation4 + $0x80] sm:$0xff]
        %v2740 = vld [vmem:[#allocation4 + $0x88] sm:$0xff]
        %v2741 = vld [vmem:[#allocation4 + $0x90] sm:$0xff]
        %v2742 = vld [vmem:[#allocation4 + $0x98] sm:$0xff]
        %v2743 = vld [vmem:[#allocation4 + $0xa0] sm:$0xff]
        %v2744 = vld [vmem:[#allocation4 + $0xa8] sm:$0xff]
        %v2745 = vld [vmem:[#allocation4 + $0xb0] sm:$0xff]
        %v2746 = vld [vmem:[#allocation4 + $0xb8] sm:$0xff]
        %v2747 = vld [vmem:[#allocation4 + $0xc0] sm:$0xff]
        %v2748 = vld [vmem:[#allocation4 + $0xc8] sm:$0xff]
        %v2749 = vld [vmem:[#allocation4 + $0xd0] sm:$0xff]
        %v2750 = vld [vmem:[#allocation4 + $0xd8] sm:$0xff]
        %v2751 = vld [vmem:[#allocation4 + $0xe0] sm:$0xff]
        %v2752 = vld [vmem:[#allocation4 + $0xe8] sm:$0xff]
        %v2753 = vld [vmem:[#allocation4 + $0xf0] sm:$0xff]
        %v2754 = vld [vmem:[#allocation4 + $0xf8] sm:$0xff]
        %v2755 = vsub.f32 %v2691, %v2723
        %v2756 = vsub.f32 %v2692, %v2724
        %v2757 = vsub.f32 %v2693, %v2725
        %v2758 = vsub.f32 %v2694, %v2726
        %v2759 = vsub.f32 %v2695, %v2727
        %v2760 = vsub.f32 %v2696, %v2728
        %v2761 = vsub.f32 %v2697, %v2729
        %v2762 = vsub.f32 %v2698, %v2730
        %v2763 = vsub.f32 %v2699, %v2731
        %v2764 = vsub.f32 %v2700, %v2732
        %v2765 = vsub.f32 %v2701, %v2733
        %v2766 = vsub.f32 %v2702, %v2734
        %v2767 = vsub.f32 %v2703, %v2735
        %v2768 = vsub.f32 %v2704, %v2736
        %v2769 = vsub.f32 %v2705, %v2737
        %v2770 = vsub.f32 %v2706, %v2738
        %v2771 = vsub.f32 %v2707, %v2739
        %v2772 = vsub.f32 %v2708, %v2740
        %v2773 = vsub.f32 %v2709, %v2741
        %v2774 = vsub.f32 %v2710, %v2742
        %v2775 = vsub.f32 %v2711, %v2743
        %v2776 = vsub.f32 %v2712, %v2744
        %v2777 = vsub.f32 %v2713, %v2745
        %v2778 = vsub.f32 %v2714, %v2746
        %v2779 = vsub.f32 %v2715, %v2747
        %v2780 = vsub.f32 %v2716, %v2748
        %v2781 = vsub.f32 %v2717, %v2749
        %v2782 = vsub.f32 %v2718, %v2750
        %v2783 = vsub.f32 %v2719, %v2751
        %v2784 = vsub.f32 %v2720, %v2752
        %v2785 = vsub.f32 %v2721, %v2753
        %v2786 = vsub.f32 %v2722, %v2754
        %vm2787 = vcmp.lt.s32.totalorder %v2499, 8
        %vm2788 = vcmp.lt.s32.totalorder %v2500, 8
        %vm2789 = vcmp.lt.s32.totalorder %v2501, 8
        %vm2790 = vcmp.lt.s32.totalorder %v2502, 8
        %vm2791 = vcmp.lt.s32.totalorder %v2503, 8
        %vm2792 = vcmp.lt.s32.totalorder %v2504, 8
        %vm2793 = vcmp.lt.s32.totalorder %v2505, 8
        %vm2794 = vcmp.lt.s32.totalorder %v2506, 8
        %vm2795 = vcmp.lt.s32.totalorder %v2507, 8
        %vm2796 = vcmp.lt.s32.totalorder %v2508, 8
        %vm2797 = vcmp.lt.s32.totalorder %v2509, 8
        %vm2798 = vcmp.lt.s32.totalorder %v2510, 8
        %vm2799 = vcmp.lt.s32.totalorder %v2511, 8
        %vm2800 = vcmp.lt.s32.totalorder %v2512, 8
        %vm2801 = vcmp.lt.s32.totalorder %v2513, 8
        %vm2802 = vcmp.lt.s32.totalorder %v2514, 8
        %vm2803 = vcmp.lt.s32.totalorder %v2515, 8
        %vm2804 = vcmp.lt.s32.totalorder %v2516, 8
        %vm2805 = vcmp.lt.s32.totalorder %v2517, 8
        %vm2806 = vcmp.lt.s32.totalorder %v2518, 8
        %vm2807 = vcmp.lt.s32.totalorder %v2519, 8
        %vm2808 = vcmp.lt.s32.totalorder %v2520, 8
        %vm2809 = vcmp.lt.s32.totalorder %v2521, 8
        %vm2810 = vcmp.lt.s32.totalorder %v2522, 8
        %vm2811 = vcmp.lt.s32.totalorder %v2523, 8
        %vm2812 = vcmp.lt.s32.totalorder %v2524, 8
        %vm2813 = vcmp.lt.s32.totalorder %v2525, 8
        %vm2814 = vcmp.lt.s32.totalorder %v2526, 8
        %vm2815 = vcmp.lt.s32.totalorder %v2527, 8
        %vm2816 = vcmp.lt.s32.totalorder %v2528, 8
        %vm2817 = vcmp.lt.s32.totalorder %v2529, 8
        %vm2818 = vcmp.lt.s32.totalorder %v2530, 8
        %vm2819 = vcmp.lt.s32.totalorder %v2531, 8
        %vm2820 = vcmp.lt.s32.totalorder %v2532, 8
        %vm2821 = vcmp.lt.s32.totalorder %v2533, 8
        %vm2822 = vcmp.lt.s32.totalorder %v2534, 8
        %vm2823 = vcmp.lt.s32.totalorder %v2535, 8
        %vm2824 = vcmp.lt.s32.totalorder %v2536, 8
        %vm2825 = vcmp.lt.s32.totalorder %v2537, 8
        %vm2826 = vcmp.lt.s32.totalorder %v2538, 8
        %vm2827 = vcmp.lt.s32.totalorder %v2539, 8
        %vm2828 = vcmp.lt.s32.totalorder %v2540, 8
        %vm2829 = vcmp.lt.s32.totalorder %v2541, 8
        %vm2830 = vcmp.lt.s32.totalorder %v2542, 8
        %vm2831 = vcmp.lt.s32.totalorder %v2543, 8
        %vm2832 = vcmp.lt.s32.totalorder %v2544, 8
        %vm2833 = vcmp.lt.s32.totalorder %v2545, 8
        %vm2834 = vcmp.lt.s32.totalorder %v2546, 8
        %vm2835 = vcmp.lt.s32.totalorder %v2547, 8
        %vm2836 = vcmp.lt.s32.totalorder %v2548, 8
        %vm2837 = vcmp.lt.s32.totalorder %v2549, 8
        %vm2838 = vcmp.lt.s32.totalorder %v2550, 8
        %vm2839 = vcmp.lt.s32.totalorder %v2551, 8
        %vm2840 = vcmp.lt.s32.totalorder %v2552, 8
        %vm2841 = vcmp.lt.s32.totalorder %v2553, 8
        %vm2842 = vcmp.lt.s32.totalorder %v2554, 8
        %vm2843 = vcmp.lt.s32.totalorder %v2555, 8
        %vm2844 = vcmp.lt.s32.totalorder %v2556, 8
        %vm2845 = vcmp.lt.s32.totalorder %v2557, 8
        %vm2846 = vcmp.lt.s32.totalorder %v2558, 8
        %vm2847 = vcmp.lt.s32.totalorder %v2559, 8
        %vm2848 = vcmp.lt.s32.totalorder %v2560, 8
        %vm2849 = vcmp.lt.s32.totalorder %v2561, 8
        %vm2850 = vcmp.lt.s32.totalorder %v2562, 8
        %vm2851 = vmand %vm2787, %vm2819
        %vm2852 = vmand %vm2788, %vm2820
        %vm2853 = vmand %vm2789, %vm2821
        %vm2854 = vmand %vm2790, %vm2822
        %vm2855 = vmand %vm2791, %vm2823
        %vm2856 = vmand %vm2792, %vm2824
        %vm2857 = vmand %vm2793, %vm2825
        %vm2858 = vmand %vm2794, %vm2826
        %vm2859 = vmand %vm2795, %vm2827
        %vm2860 = vmand %vm2796, %vm2828
        %vm2861 = vmand %vm2797, %vm2829
        %vm2862 = vmand %vm2798, %vm2830
        %vm2863 = vmand %vm2799, %vm2831
        %vm2864 = vmand %vm2800, %vm2832
        %vm2865 = vmand %vm2801, %vm2833
        %vm2866 = vmand %vm2802, %vm2834
        %vm2867 = vmand %vm2803, %vm2835
        %vm2868 = vmand %vm2804, %vm2836
        %vm2869 = vmand %vm2805, %vm2837
        %vm2870 = vmand %vm2806, %vm2838
        %vm2871 = vmand %vm2807, %vm2839
        %vm2872 = vmand %vm2808, %vm2840
        %vm2873 = vmand %vm2809, %vm2841
        %vm2874 = vmand %vm2810, %vm2842
        %vm2875 = vmand %vm2811, %vm2843
        %vm2876 = vmand %vm2812, %vm2844
        %vm2877 = vmand %vm2813, %vm2845
        %vm2878 = vmand %vm2814, %vm2846
        %vm2879 = vmand %vm2815, %vm2847
        %vm2880 = vmand %vm2816, %vm2848
        %vm2881 = vmand %vm2817, %vm2849
        %vm2882 = vmand %vm2818, %vm2850
        %v2883 = vsel %vm2851, %v2755, 0.0
        %v2884 = vsel %vm2852, %v2756, 0.0
        %v2885 = vsel %vm2853, %v2757, 0.0
        %v2886 = vsel %vm2854, %v2758, 0.0
        %v2887 = vsel %vm2855, %v2759, 0.0
        %v2888 = vsel %vm2856, %v2760, 0.0
        %v2889 = vsel %vm2857, %v2761, 0.0
        %v2890 = vsel %vm2858, %v2762, 0.0
        %v2891 = vsel %vm2859, %v2763, 0.0
        %v2892 = vsel %vm2860, %v2764, 0.0
        %v2893 = vsel %vm2861, %v2765, 0.0
        %v2894 = vsel %vm2862, %v2766, 0.0
        %v2895 = vsel %vm2863, %v2767, 0.0
        %v2896 = vsel %vm2864, %v2768, 0.0
        %v2897 = vsel %vm2865, %v2769, 0.0
        %v2898 = vsel %vm2866, %v2770, 0.0
        %v2899 = vsel %vm2867, %v2771, 0.0
        %v2900 = vsel %vm2868, %v2772, 0.0
        %v2901 = vsel %vm2869, %v2773, 0.0
        %v2902 = vsel %vm2870, %v2774, 0.0
        %v2903 = vsel %vm2871, %v2775, 0.0
        %v2904 = vsel %vm2872, %v2776, 0.0
        %v2905 = vsel %vm2873, %v2777, 0.0
        %v2906 = vsel %vm2874, %v2778, 0.0
        %v2907 = vsel %vm2875, %v2779, 0.0
        %v2908 = vsel %vm2876, %v2780, 0.0
        %v2909 = vsel %vm2877, %v2781, 0.0
        %v2910 = vsel %vm2878, %v2782, 0.0
        %v2911 = vsel %vm2879, %v2783, 0.0
        %v2912 = vsel %vm2880, %v2784, 0.0
        %v2913 = vsel %vm2881, %v2785, 0.0
        %v2914 = vsel %vm2882, %v2786, 0.0
        %vm2915 = vcmask 7168
        %2916 = vst.msk [vmem:[%s179] sm:$0xff] %vm2915, %v2883
        %2917 = vst.msk [vmem:[%s179 + $0x8] sm:$0xff] %vm2915, %v2884
        %2918 = vst.msk [vmem:[%s179 + $0x10] sm:$0xff] %vm2915, %v2885
        %2919 = vst.msk [vmem:[%s179 + $0x18] sm:$0xff] %vm2915, %v2886
        %2920 = vst.msk [vmem:[%s179 + $0x20] sm:$0xff] %vm2915, %v2887
        %2921 = vst.msk [vmem:[%s179 + $0x28] sm:$0xff] %vm2915, %v2888
        %2922 = vst.msk [vmem:[%s179 + $0x30] sm:$0xff] %vm2915, %v2889
        %2923 = vst.msk [vmem:[%s179 + $0x38] sm:$0xff] %vm2915, %v2890
        %2924 = vst.msk [vmem:[%s179 + $0x40] sm:$0xff] %vm2915, %v2891
        %2925 = vst.msk [vmem:[%s179 + $0x48] sm:$0xff] %vm2915, %v2892
        %2926 = vst.msk [vmem:[%s179 + $0x50] sm:$0xff] %vm2915, %v2893
        %2927 = vst.msk [vmem:[%s179 + $0x58] sm:$0xff] %vm2915, %v2894
        %2928 = vst.msk [vmem:[%s179 + $0x60] sm:$0xff] %vm2915, %v2895
        %2929 = vst.msk [vmem:[%s179 + $0x68] sm:$0xff] %vm2915, %v2896
        %2930 = vst.msk [vmem:[%s179 + $0x70] sm:$0xff] %vm2915, %v2897
        %2931 = vst.msk [vmem:[%s179 + $0x78] sm:$0xff] %vm2915, %v2898
        %2932 = vst.msk [vmem:[%s179 + $0x80] sm:$0xff] %vm2915, %v2899
        %2933 = vst.msk [vmem:[%s179 + $0x88] sm:$0xff] %vm2915, %v2900
        %2934 = vst.msk [vmem:[%s179 + $0x90] sm:$0xff] %vm2915, %v2901
        %2935 = vst.msk [vmem:[%s179 + $0x98] sm:$0xff] %vm2915, %v2902
        %2936 = vst.msk [vmem:[%s179 + $0xa0] sm:$0xff] %vm2915, %v2903
        %2937 = vst.msk [vmem:[%s179 + $0xa8] sm:$0xff] %vm2915, %v2904
        %2938 = vst.msk [vmem:[%s179 + $0xb0] sm:$0xff] %vm2915, %v2905
        %2939 = vst.msk [vmem:[%s179 + $0xb8] sm:$0xff] %vm2915, %v2906
        %2940 = vst.msk [vmem:[%s179 + $0xc0] sm:$0xff] %vm2915, %v2907
        %2941 = vst.msk [vmem:[%s179 + $0xc8] sm:$0xff] %vm2915, %v2908
        %2942 = vst.msk [vmem:[%s179 + $0xd0] sm:$0xff] %vm2915, %v2909
        %2943 = vst.msk [vmem:[%s179 + $0xd8] sm:$0xff] %vm2915, %v2910
        %2944 = vst.msk [vmem:[%s179 + $0xe0] sm:$0xff] %vm2915, %v2911
        %2945 = vst.msk [vmem:[%s179 + $0xe8] sm:$0xff] %vm2915, %v2912
        %2946 = vst.msk [vmem:[%s179 + $0xf0] sm:$0xff] %vm2915, %v2913
        %2947 = vst.msk [vmem:[%s179 + $0xf8] sm:$0xff] %vm2915, %v2914
      $region44: #{tpu_custom_call.1} parent=27 // pred_fallthru
        _
      %s2948 = smul.u32 32, %s17
      %p2949 = scmp.lt.s32.totalorder %s2948, 31
      %s2950 = scalar_select %p2949, %s2948, 31
      %s2951 = smul.addr %s2950, 8
      %s2952 = scalar_lea.vmem %s2, %s2951
      // Predicated region
      $region45: #{tpu_custom_call.1} parent=27 // pred_check
        %p2953 = pneg %p95
      $region46: #{tpu_custom_call.1} parent=27 // pred_check_branch
        %2955 = sbr.rel (%p2953) target = $region48
      $region47: #{tpu_custom_call.1} parent=27 // pred_region
        %s2956 = smul.u32 32, %s17
      $region48: #{tpu_custom_call.1} parent=27 // pred_fallthru
        _
      // Predicated region
      $region49: #{tpu_custom_call.1} parent=27 // pred_check
        %p2957 = pneg %p95
      $region50: #{tpu_custom_call.1} parent=27 // pred_check_branch
        %2959 = sbr.rel (%p2957) target = $region52
      $region51: #{tpu_custom_call.1} parent=27 // pred_region
        %s2960 = smul.u32 32, %s17
        %p2961 = scmp.lt.s32.totalorder %s2960, 31
        %s2962 = scalar_select %p2961, %s2960, 31
        %s2963 = smul.addr %s2962, 8
        %s2964 = scalar_lea.vmem %s2, %s2963
      $region52: #{tpu_custom_call.1} parent=27 // pred_fallthru
        _
    $region28: #{tpu_custom_call.1} parent=5 // pred_fallthru
      _
    %p2965 = scmp.le.s32.totalorder 2, %s8
    // Predicated region
    $region53: #{tpu_custom_call.1} parent=5 // pred_check
      %p2966 = pneg %p2965
    $region54: #{tpu_custom_call.1} parent=5 // pred_check_branch
      %2968 = sbr.rel (%p2966) target = $region56
    $region55: #{tpu_custom_call.1} parent=5 // pred_region
      %s2969 = ssub.s32 %s8, 2
    $region56: #{tpu_custom_call.1} parent=5 // pred_fallthru
      _
  $region6: #{tpu_custom_call.1} parent=0 // loop_footer
    %s12 = sadd.s32 1, %s8
  $region7: #{tpu_custom_call.1} parent=0 // loop_footer_branch
    %7 = sbr.rel target = $region3
  $region8: #{tpu_custom_call.1} parent=0 // loop_exit
    _

</llo_original>
